<compile_context>
chip_gen: v5e
topology: v5e:2x2
jax: 0.10.0
libtpu: 0.0.40
codegen_flags: <defaults>
</compile_context>

<pallas_src>
import functools

import jax
import jax.numpy as jnp
from jax import lax
from jax.experimental import pallas as pl
from jax.experimental.pallas import tpu as pltpu

LANE = 128        # channels padded to a multiple of the TPU lane width
HALO_ROWS = 8     # row-block size of the halo input spec (>=4, multiple of 8)


def _round_up(x, m):
    return (x + m - 1) // m * m


def _vmem_estimate(th, W, ci_p, cm_p, co_p, itemsize=4):
    """Rough per-grid-step VMEM working set (bytes)."""
    x_main = th * (W + 4) * ci_p * itemsize * 2            # double buffered
    x_halo = HALO_ROWS * (W + 4) * ci_p * itemsize * 2
    out = th * W * co_p * itemsize * 2
    wts = (3 * (3 * ci_p) * cm_p + 3 * (3 * cm_p) * co_p) * itemsize * 2
    z = (th + 2) * (W + 2) * cm_p * itemsize
    cc = ((th + 4) * (W + 2) * 3 * ci_p + (th + 2) * W * 3 * cm_p) * itemsize
    return x_main + x_halo + out + wts + z + cc


def _pick_row_tile(H, W, ci_p, cm_p, co_p, budget_bytes=24 * 2**20):
    """Largest row tile TH (multiple of 8, dividing H) that fits the budget."""
    cands = [th for th in range(8, H + 1, 8) if H % th == 0]
    best = cands[0]
    for th in cands:
        if _vmem_estimate(th, W, ci_p, cm_p, co_p) <= budget_bytes:
            best = th
    return best


def _double_conv_kernel(x_main_ref, x_halo_ref, w1_ref, s1_ref, b1_ref,
                        w2_ref, s2_ref, b2_ref, o_ref, z_ref, *, compute_dtype):
    """One (batch, row-tile) step of the fused DoubleConv.

    x_main_ref: (1, TH, W+4, Cip)   rows [t*TH, t*TH+TH) of the pad-2 input
    x_halo_ref: (1, 8,  W+4, Cip)   rows [(t+1)*TH, (t+1)*TH+8) (first 4 used)
    w1_ref:     (3, 3*Cip, Cmp)     layer-1 weights, dx folded into contraction
    s1/b1_ref:  (1, Cmp)            folded BN scale / bias (conv bias included)
    w2_ref:     (3, 3*Cmp, Cop)
    s2/b2_ref:  (1, Cop)
    o_ref:      (1, TH, W, Cop)
    z_ref:      (TH+2, W+2, Cmp)    VMEM scratch: layer-1 tile (+1 halo ring)
    """
    t = pl.program_id(1)
    n_t = pl.num_programs(1)
    TH = o_ref.shape[1]
    W = o_ref.shape[2]
    H = TH * n_t
    cm_p = z_ref.shape[-1]
    co_p = o_ref.shape[-1]

    # ---- assemble the (TH+4, W+4, Cip) padded-input tile --------------------
    x = jnp.concatenate([x_main_ref[0], x_halo_ref[0, 0:4]], axis=0)

    # ---- layer 1: conv3x3 (dx folded into K) + BN + ReLU --------------------
    # cc1[r, c, dx*Cip + ci] = x[r, c + dx, ci]
    cc1 = jnp.concatenate(
        [x[:, 0:W + 2, :], x[:, 1:W + 3, :], x[:, 2:W + 4, :]], axis=-1)
    cc1 = cc1.astype(compute_dtype)
    acc1 = jnp.zeros((TH + 2, W + 2, cm_p), jnp.float32)
    for dy in range(3):  # 3 MXU matmuls, K = 3*Cip
        acc1 = acc1 + lax.dot_general(
            cc1[dy:dy + TH + 2], w1_ref[dy].astype(compute_dtype),
            dimension_numbers=(((2,), (0,)), ((), ())),
            preferred_element_type=jnp.float32)
    z = jnp.maximum(acc1 * s1_ref[...] + b1_ref[...], 0.0)

    # Zero the ring of positions that are outside the real layer-1 output:
    # layer-2's padding=1 must see exact zeros there, not relu(bias).
    row = lax.broadcasted_iota(jnp.int32, (TH + 2, W + 2, cm_p), 0)
    col = lax.broadcasted_iota(jnp.int32, (TH + 2, W + 2, cm_p), 1)
    grow = t * TH + row - 1                       # global layer-1 output row
    valid = (grow >= 0) & (grow < H) & (col >= 1) & (col <= W)
    z_ref[...] = jnp.where(valid, z, 0.0)

    # ---- layer 2: conv3x3 + BN + ReLU ---------------------------------------
    cc2 = jnp.concatenate(
        [z_ref[:, 0:W, :], z_ref[:, 1:W + 1, :], z_ref[:, 2:W + 2, :]], axis=-1)
    cc2 = cc2.astype(compute_dtype)
    acc2 = jnp.zeros((TH, W, co_p), jnp.float32)
    for dy in range(3):
        acc2 = acc2 + lax.dot_general(
            cc2[dy:dy + TH], w2_ref[dy].astype(compute_dtype),
            dimension_numbers=(((2,), (0,)), ((), ())),
            preferred_element_type=jnp.float32)
    y = jnp.maximum(acc2 * s2_ref[...] + b2_ref[...], 0.0)
    o_ref[0] = y.astype(o_ref.dtype)


def _fused_double_conv_nhwc(x_nhwc, w1, s1, t1, w2, s2, t2, row_tile,
                            compute_dtype):
    """x_nhwc: (N, H, W, Cin) f32 -> (N, H, W, Cout) f32, both convs fused."""
    N, H, W, Cin = x_nhwc.shape
    Cmid = w1.shape[-1]
    Cout = w2.shape[-1]
    assert w1.shape == (3, 3, Cin, Cmid) and w2.shape == (3, 3, Cmid, Cout)
    assert H % 8 == 0, "row-tiled path requires H % 8 == 0"  # TODO(synk): pad H

    ci_p = _round_up(Cin, LANE)
    cm_p = _round_up(Cmid, LANE)
    co_p = _round_up(Cout, LANE)

    TH = row_tile if row_tile is not None else _pick_row_tile(
        H, W, ci_p, cm_p, co_p)
    assert H % TH == 0 and TH % HALO_ROWS == 0
    n_t = H // TH

    # Single pad op: +2 spatial halo (bottom padded to +6 so the 8-row halo
    # blocks stay in-bounds) and lane padding of the channels.
    xp = jnp.pad(x_nhwc.astype(jnp.float32),
                 ((0, 0), (2, 6), (2, 2), (0, ci_p - Cin)))

    # Weights: pad channels to lane width, fold dx into the contraction dim.
    w1p = jnp.pad(w1.astype(jnp.float32),
                  ((0, 0), (0, 0), (0, ci_p - Cin), (0, cm_p - Cmid)))
    w1f = w1p.reshape(3, 3 * ci_p, cm_p)
    w2p = jnp.pad(w2.astype(jnp.float32),
                  ((0, 0), (0, 0), (0, cm_p - Cmid), (0, co_p - Cout)))
    w2f = w2p.reshape(3, 3 * cm_p, co_p)

    s1p = jnp.pad(s1.astype(jnp.float32), (0, cm_p - Cmid)).reshape(1, cm_p)
    t1p = jnp.pad(t1.astype(jnp.float32), (0, cm_p - Cmid)).reshape(1, cm_p)
    s2p = jnp.pad(s2.astype(jnp.float32), (0, co_p - Cout)).reshape(1, co_p)
    t2p = jnp.pad(t2.astype(jnp.float32), (0, co_p - Cout)).reshape(1, co_p)

    flops = 2 * N * H * W * 9 * (ci_p * cm_p + cm_p * co_p)
    bytes_accessed = 4 * (xp.size + N * H * W * co_p + w1f.size + w2f.size
                          + s1p.size + t1p.size + s2p.size + t2p.size)
    vmem_limit = int(min(48 * 2**20,
                         max(16 * 2**20,
                             3 * _vmem_estimate(TH, W, ci_p, cm_p, co_p))))

    kernel = functools.partial(_double_conv_kernel, compute_dtype=compute_dtype)

    out = pl.pallas_call(
        kernel,
        out_shape=jax.ShapeDtypeStruct((N, H, W, co_p), jnp.float32),
        grid=(N, n_t),
        in_specs=[
            # main row tile of the padded input
            pl.BlockSpec((1, TH, W + 4, ci_p), lambda n, t: (n, t, 0, 0)),
            # 8-row halo block starting right below the main tile
            pl.BlockSpec((1, HALO_ROWS, W + 4, ci_p),
                         lambda n, t: (n, (t + 1) * (TH // HALO_ROWS), 0, 0)),
            pl.BlockSpec((3, 3 * ci_p, cm_p), lambda n, t: (0, 0, 0)),
            pl.BlockSpec((1, cm_p), lambda n, t: (0, 0)),
            pl.BlockSpec((1, cm_p), lambda n, t: (0, 0)),
            pl.BlockSpec((3, 3 * cm_p, co_p), lambda n, t: (0, 0, 0)),
            pl.BlockSpec((1, co_p), lambda n, t: (0, 0)),
            pl.BlockSpec((1, co_p), lambda n, t: (0, 0)),
        ],
        out_specs=pl.BlockSpec((1, TH, W, co_p), lambda n, t: (n, t, 0, 0)),
        scratch_shapes=[pltpu.VMEM((TH + 2, W + 2, cm_p), jnp.float32)],
        compiler_params=pltpu.CompilerParams(
            dimension_semantics=("parallel", "parallel"),
            vmem_limit_bytes=vmem_limit),
        cost_estimate=pl.CostEstimate(
            flops=flops, transcendentals=0, bytes_accessed=int(bytes_accessed)),
    )(xp, xp, w1f, s1p, t1p, w2f, s2p, t2p)

    return out[..., :Cout]


@functools.partial(jax.jit, static_argnames=("row_tile", "compute_dtype"))
def double_conv(x_nchw, w1, s1, t1, w2, s2, t2, row_tile=None,
                compute_dtype=jnp.float32):
    # NOTE: on v6e/v7x with real channel counts (>=64), pass
    # compute_dtype=jnp.bfloat16 for ~2x MXU throughput (f32 accumulation and
    # f32 BN/ReLU epilogue are kept either way).
    x = jnp.transpose(x_nchw, (0, 2, 3, 1)).astype(jnp.float32)
    y = _fused_double_conv_nhwc(x, w1, s1, t1, w2, s2, t2, row_tile,
                                compute_dtype)
    return jnp.transpose(y, (0, 3, 1, 2))


def make_double_conv_params(key, in_ch, out_ch, eps=1e-5):
    ks = jax.random.split(key, 8)
    return {
        "w1": jax.random.normal(ks[0], (3, 3, in_ch, out_ch), jnp.float32) * 0.1,
        "b1": jax.random.normal(ks[1], (out_ch,), jnp.float32) * 0.1,
        "gamma1": 1.0 + 0.1 * jax.random.normal(ks[2], (out_ch,), jnp.float32),
        "beta1": 0.1 * jax.random.normal(ks[3], (out_ch,), jnp.float32),
        "w2": jax.random.normal(ks[4], (3, 3, out_ch, out_ch), jnp.float32) * 0.1,
        "b2": jax.random.normal(ks[5], (out_ch,), jnp.float32) * 0.1,
        "gamma2": 1.0 + 0.1 * jax.random.normal(ks[6], (out_ch,), jnp.float32),
        "beta2": 0.1 * jax.random.normal(ks[7], (out_ch,), jnp.float32),
        "running_mean": jnp.zeros((out_ch,), jnp.float32),
        "running_var": jnp.ones((out_ch,), jnp.float32),
        "eps": eps,
    }


def fold_bn(gamma, beta, running_mean, running_var, conv_bias, eps):
    # BN(conv + b) = s * (conv + b - mean) + beta, with s = gamma/sqrt(var+eps)
    s = gamma / jnp.sqrt(running_var + eps)
    shift = s * (conv_bias - running_mean) + beta
    return s, shift


def reference_double_conv(x_nchw, w1, s1, t1, w2, s2, t2):
    """Plain-JAX reference (lax.conv) for correctness checking."""
    def layer(x, w, s, t):
        y = lax.conv_general_dilated(
            x, w, window_strides=(1, 1), padding="SAME",
            dimension_numbers=("NHWC", "HWIO", "NHWC"))
        y = y * s.reshape(1, 1, 1, -1) + t.reshape(1, 1, 1, -1)
        return jnp.maximum(y, 0.0)

    x = jnp.transpose(x_nchw, (0, 2, 3, 1)).astype(jnp.float32)
    y = layer(x, w1, s1, t1)
    y = layer(y, w2, s2, t2)
    return jnp.transpose(y, (0, 3, 1, 2))


if __name__ == "__main__":
    N, in_ch, out_ch, H, W = 2, 4, 8, 16, 16

    key = jax.random.PRNGKey(0)
    kx, kp = jax.random.split(key)
    x = jax.random.normal(kx, (N, in_ch, H, W), jnp.float32)

    p = make_double_conv_params(kp, in_ch, out_ch)
    s1, t1 = fold_bn(p["gamma1"], p["beta1"], p["running_mean"],
                     p["running_var"], p["b1"], p["eps"])
    s2, t2 = fold_bn(p["gamma2"], p["beta2"], p["running_mean"],
                     p["running_var"], p["b2"], p["eps"])

    # row_tile=8 -> grid=(2, 2): exercises the halo + edge-masking path.
    out = double_conv(x, p["w1"], s1, t1, p["w2"], s2, t2, row_tile=8)
    out = jax.block_until_ready(out)

    ref = reference_double_conv(x, p["w1"], s1, t1, p["w2"], s2, t2)
    ref = jax.block_until_ready(ref)

    assert out.shape == (N, out_ch, H, W), out.shape
    assert jnp.allclose(out, ref, atol=1e-4, rtol=1e-4), "mismatch vs reference"

    print("KERNEL_OK")
</pallas_src>

<mosaic_0001>
module attributes {stable_mosaic.version = 11 : i64} {
  func.func @_double_conv_kernel(%arg0: i32, %arg1: i32, %arg2: memref<1x8x20x128xf32, #tpu.memory_space<vmem>>, %arg3: memref<1x8x20x128xf32, #tpu.memory_space<vmem>>, %arg4: memref<3x384x128xf32, #tpu.memory_space<vmem>>, %arg5: memref<1x128xf32, #tpu.memory_space<vmem>>, %arg6: memref<1x128xf32, #tpu.memory_space<vmem>>, %arg7: memref<3x384x128xf32, #tpu.memory_space<vmem>>, %arg8: memref<1x128xf32, #tpu.memory_space<vmem>>, %arg9: memref<1x128xf32, #tpu.memory_space<vmem>>, %arg10: memref<1x8x16x128xf32, #tpu.memory_space<vmem>>, %arg11: memref<10x18x128xf32, #tpu.memory_space<vmem>>) attributes {dimension_semantics = [#tpu.dimension_semantics<parallel>, #tpu.dimension_semantics<parallel>], iteration_bounds = array<i64: 2, 2>, scalar_prefetch = 0 : i64, scratch_operands = 1 : i64, tpu.core_type = #tpu.core_type<tc>, window_params = [{transform_indices = @transform_0, window_bounds = array<i64: 1, 8, 20, 128>}, {transform_indices = @transform_1, window_bounds = array<i64: 1, 8, 20, 128>}, {pipeline_mode = #tpu.pipeline_mode<synchronous>, transform_indices = @transform_2, window_bounds = array<i64: 3, 384, 128>}, {pipeline_mode = #tpu.pipeline_mode<synchronous>, transform_indices = @transform_3, window_bounds = array<i64: 1, 128>}, {pipeline_mode = #tpu.pipeline_mode<synchronous>, transform_indices = @transform_4, window_bounds = array<i64: 1, 128>}, {pipeline_mode = #tpu.pipeline_mode<synchronous>, transform_indices = @transform_5, window_bounds = array<i64: 3, 384, 128>}, {pipeline_mode = #tpu.pipeline_mode<synchronous>, transform_indices = @transform_6, window_bounds = array<i64: 1, 128>}, {pipeline_mode = #tpu.pipeline_mode<synchronous>, transform_indices = @transform_7, window_bounds = array<i64: 1, 128>}, {transform_indices = @transform_8, window_bounds = array<i64: 1, 8, 16, 128>}]} {
    %c0 = arith.constant 0 : index
    %c0_0 = arith.constant 0 : index
    %c0_1 = arith.constant 0 : index
    %c0_2 = arith.constant 0 : index
    %0 = vector.load %arg2[%c0, %c0_0, %c0_1, %c0_2] : memref<1x8x20x128xf32, #tpu.memory_space<vmem>>, vector<1x8x20x128xf32>
    %1 = vector.shape_cast %0 : vector<1x8x20x128xf32> to vector<8x20x128xf32>
    %c0_3 = arith.constant 0 : index
    %c0_4 = arith.constant 0 : index
    %c0_5 = arith.constant 0 : index
    %c0_6 = arith.constant 0 : index
    %2 = vector.load %arg3[%c0_3, %c0_4, %c0_5, %c0_6] : memref<1x8x20x128xf32, #tpu.memory_space<vmem>>, vector<1x4x20x128xf32>
    %3 = vector.shape_cast %2 : vector<1x4x20x128xf32> to vector<4x20x128xf32>
    %4 = tpu.concatenate %1, %3 in 0 : vector<8x20x128xf32>, vector<4x20x128xf32> -> vector<12x20x128xf32>
    %5 = vector.extract_strided_slice %4 {offsets = [0, 0, 0], sizes = [12, 18, 128], strides = [1, 1, 1]} : vector<12x20x128xf32> to vector<12x18x128xf32>
    %6 = vector.extract_strided_slice %4 {offsets = [0, 1, 0], sizes = [12, 18, 128], strides = [1, 1, 1]} : vector<12x20x128xf32> to vector<12x18x128xf32>
    %7 = vector.extract_strided_slice %4 {offsets = [0, 2, 0], sizes = [12, 18, 128], strides = [1, 1, 1]} : vector<12x20x128xf32> to vector<12x18x128xf32>
    %8 = tpu.concatenate %5, %6, %7 in 2 : vector<12x18x128xf32>, vector<12x18x128xf32>, vector<12x18x128xf32> -> vector<12x18x384xf32>
    %cst = arith.constant 0.000000e+00 : f32
    %9 = vector.broadcast %cst : f32 to vector<10x18x128xf32>
    %10 = vector.extract_strided_slice %8 {offsets = [0, 0, 0], sizes = [10, 18, 384], strides = [1, 1, 1]} : vector<12x18x384xf32> to vector<10x18x384xf32>
    %c0_7 = arith.constant 0 : index
    %c0_8 = arith.constant 0 : index
    %c0_9 = arith.constant 0 : index
    %11 = vector.load %arg4[%c0_7, %c0_8, %c0_9] : memref<3x384x128xf32, #tpu.memory_space<vmem>>, vector<1x384x128xf32>
    %12 = vector.shape_cast %11 : vector<1x384x128xf32> to vector<384x128xf32>
    %cst_10 = arith.constant dense<0.000000e+00> : vector<10x18x128xf32>
    %13 = tpu.matmul %10, %12, %cst_10 {dimension_numbers = #tpu.dot_dimension_numbers<[2], [0], [0, 1], [1], [0, 0, 0, 1, 1, 1], [], []>} : vector<10x18x384xf32>, vector<384x128xf32>, vector<10x18x128xf32> -> vector<10x18x128xf32>
    %14 = arith.addf %9, %13 : vector<10x18x128xf32>
    %15 = vector.extract_strided_slice %8 {offsets = [1, 0, 0], sizes = [10, 18, 384], strides = [1, 1, 1]} : vector<12x18x384xf32> to vector<10x18x384xf32>
    %c1 = arith.constant 1 : index
    %c0_11 = arith.constant 0 : index
    %c0_12 = arith.constant 0 : index
    %16 = vector.load %arg4[%c1, %c0_11, %c0_12] : memref<3x384x128xf32, #tpu.memory_space<vmem>>, vector<1x384x128xf32>
    %17 = vector.shape_cast %16 : vector<1x384x128xf32> to vector<384x128xf32>
    %cst_13 = arith.constant dense<0.000000e+00> : vector<10x18x128xf32>
    %18 = tpu.matmul %15, %17, %cst_13 {dimension_numbers = #tpu.dot_dimension_numbers<[2], [0], [0, 1], [1], [0, 0, 0, 1, 1, 1], [], []>} : vector<10x18x384xf32>, vector<384x128xf32>, vector<10x18x128xf32> -> vector<10x18x128xf32>
    %19 = arith.addf %14, %18 : vector<10x18x128xf32>
    %20 = vector.extract_strided_slice %8 {offsets = [2, 0, 0], sizes = [10, 18, 384], strides = [1, 1, 1]} : vector<12x18x384xf32> to vector<10x18x384xf32>
    %c2 = arith.constant 2 : index
    %c0_14 = arith.constant 0 : index
    %c0_15 = arith.constant 0 : index
    %21 = vector.load %arg4[%c2, %c0_14, %c0_15] : memref<3x384x128xf32, #tpu.memory_space<vmem>>, vector<1x384x128xf32>
    %22 = vector.shape_cast %21 : vector<1x384x128xf32> to vector<384x128xf32>
    %cst_16 = arith.constant dense<0.000000e+00> : vector<10x18x128xf32>
    %23 = tpu.matmul %20, %22, %cst_16 {dimension_numbers = #tpu.dot_dimension_numbers<[2], [0], [0, 1], [1], [0, 0, 0, 1, 1, 1], [], []>} : vector<10x18x384xf32>, vector<384x128xf32>, vector<10x18x128xf32> -> vector<10x18x128xf32>
    %24 = arith.addf %19, %23 : vector<10x18x128xf32>
    %c0_17 = arith.constant 0 : index
    %c0_18 = arith.constant 0 : index
    %25 = vector.load %arg5[%c0_17, %c0_18] : memref<1x128xf32, #tpu.memory_space<vmem>>, vector<1x128xf32>
    %26 = vector.shape_cast %25 : vector<1x128xf32> to vector<1x1x128xf32>
    %27 = vector.broadcast %26 : vector<1x1x128xf32> to vector<10x18x128xf32>
    %28 = arith.mulf %24, %27 : vector<10x18x128xf32>
    %c0_19 = arith.constant 0 : index
    %c0_20 = arith.constant 0 : index
    %29 = vector.load %arg6[%c0_19, %c0_20] : memref<1x128xf32, #tpu.memory_space<vmem>>, vector<1x128xf32>
    %30 = vector.shape_cast %29 : vector<1x128xf32> to vector<1x1x128xf32>
    %31 = vector.broadcast %30 : vector<1x1x128xf32> to vector<10x18x128xf32>
    %32 = arith.addf %28, %31 : vector<10x18x128xf32>
    %cst_21 = arith.constant 0.000000e+00 : f32
    %33 = vector.broadcast %cst_21 : f32 to vector<10x18x128xf32>
    %34 = arith.maximumf %32, %33 : vector<10x18x128xf32>
    %35 = tpu.iota {dimensions = array<i32: 0>} : vector<10x18x128xi32>
    %36 = tpu.iota {dimensions = array<i32: 1>} : vector<10x18x128xi32>
    %c8_i32 = arith.constant 8 : i32
    %37 = arith.muli %arg1, %c8_i32 : i32
    %38 = vector.broadcast %37 : i32 to vector<10x18x128xi32>
    %39 = arith.addi %38, %35 : vector<10x18x128xi32>
    %c1_i32 = arith.constant 1 : i32
    %40 = vector.broadcast %c1_i32 : i32 to vector<10x18x128xi32>
    %41 = arith.subi %39, %40 : vector<10x18x128xi32>
    %c0_i32 = arith.constant 0 : i32
    %42 = vector.broadcast %c0_i32 : i32 to vector<10x18x128xi32>
    %43 = arith.cmpi sge, %41, %42 : vector<10x18x128xi32>
    %c16_i32 = arith.constant 16 : i32
    %44 = vector.broadcast %c16_i32 : i32 to vector<10x18x128xi32>
    %45 = arith.cmpi slt, %41, %44 : vector<10x18x128xi32>
    %46 = arith.andi %43, %45 : vector<10x18x128xi1>
    %c1_i32_22 = arith.constant 1 : i32
    %47 = vector.broadcast %c1_i32_22 : i32 to vector<10x18x128xi32>
    %48 = arith.cmpi sge, %36, %47 : vector<10x18x128xi32>
    %49 = arith.andi %46, %48 : vector<10x18x128xi1>
    %c16_i32_23 = arith.constant 16 : i32
    %50 = vector.broadcast %c16_i32_23 : i32 to vector<10x18x128xi32>
    %51 = arith.cmpi sle, %36, %50 : vector<10x18x128xi32>
    %52 = arith.andi %49, %51 : vector<10x18x128xi1>
    %cst_24 = arith.constant 0.000000e+00 : f32
    %53 = vector.broadcast %cst_24 : f32 to vector<10x18x128xf32>
    %54 = arith.select %52, %34, %53 : vector<10x18x128xi1>, vector<10x18x128xf32>
    %c0_25 = arith.constant 0 : index
    %c0_26 = arith.constant 0 : index
    %c0_27 = arith.constant 0 : index
    %55 = vector.load %arg11[%c0_25, %c0_26, %c0_27] : memref<10x18x128xf32, #tpu.memory_space<vmem>>, vector<10x18x128xf32>
    tpu.vector_store %arg11[%c0_25, %c0_26, %c0_27], %54 {strides = array<i32>} : memref<10x18x128xf32, #tpu.memory_space<vmem>>, vector<10x18x128xf32>,
    %c0_28 = arith.constant 0 : index
    %c0_29 = arith.constant 0 : index
    %c0_30 = arith.constant 0 : index
    %56 = vector.load %arg11[%c0_28, %c0_29, %c0_30] : memref<10x18x128xf32, #tpu.memory_space<vmem>>, vector<10x16x128xf32>
    %c0_31 = arith.constant 0 : index
    %c1_32 = arith.constant 1 : index
    %c0_33 = arith.constant 0 : index
    %57 = vector.load %arg11[%c0_31, %c1_32, %c0_33] : memref<10x18x128xf32, #tpu.memory_space<vmem>>, vector<10x16x128xf32>
    %c0_34 = arith.constant 0 : index
    %c2_35 = arith.constant 2 : index
    %c0_36 = arith.constant 0 : index
    %58 = vector.load %arg11[%c0_34, %c2_35, %c0_36] : memref<10x18x128xf32, #tpu.memory_space<vmem>>, vector<10x16x128xf32>
    %59 = tpu.concatenate %56, %57, %58 in 2 : vector<10x16x128xf32>, vector<10x16x128xf32>, vector<10x16x128xf32> -> vector<10x16x384xf32>
    %cst_37 = arith.constant 0.000000e+00 : f32
    %60 = vector.broadcast %cst_37 : f32 to vector<8x16x128xf32>
    %61 = vector.extract_strided_slice %59 {offsets = [0, 0, 0], sizes = [8, 16, 384], strides = [1, 1, 1]} : vector<10x16x384xf32> to vector<8x16x384xf32>
    %c0_38 = arith.constant 0 : index
    %c0_39 = arith.constant 0 : index
    %c0_40 = arith.constant 0 : index
    %62 = vector.load %arg7[%c0_38, %c0_39, %c0_40] : memref<3x384x128xf32, #tpu.memory_space<vmem>>, vector<1x384x128xf32>
    %63 = vector.shape_cast %62 : vector<1x384x128xf32> to vector<384x128xf32>
    %cst_41 = arith.constant dense<0.000000e+00> : vector<8x16x128xf32>
    %64 = tpu.matmul %61, %63, %cst_41 {dimension_numbers = #tpu.dot_dimension_numbers<[2], [0], [0, 1], [1], [0, 0, 0, 1, 1, 1], [], []>} : vector<8x16x384xf32>, vector<384x128xf32>, vector<8x16x128xf32> -> vector<8x16x128xf32>
    %65 = arith.addf %60, %64 : vector<8x16x128xf32>
    %66 = vector.extract_strided_slice %59 {offsets = [1, 0, 0], sizes = [8, 16, 384], strides = [1, 1, 1]} : vector<10x16x384xf32> to vector<8x16x384xf32>
    %c1_42 = arith.constant 1 : index
    %c0_43 = arith.constant 0 : index
    %c0_44 = arith.constant 0 : index
    %67 = vector.load %arg7[%c1_42, %c0_43, %c0_44] : memref<3x384x128xf32, #tpu.memory_space<vmem>>, vector<1x384x128xf32>
    %68 = vector.shape_cast %67 : vector<1x384x128xf32> to vector<384x128xf32>
    %cst_45 = arith.constant dense<0.000000e+00> : vector<8x16x128xf32>
    %69 = tpu.matmul %66, %68, %cst_45 {dimension_numbers = #tpu.dot_dimension_numbers<[2], [0], [0, 1], [1], [0, 0, 0, 1, 1, 1], [], []>} : vector<8x16x384xf32>, vector<384x128xf32>, vector<8x16x128xf32> -> vector<8x16x128xf32>
    %70 = arith.addf %65, %69 : vector<8x16x128xf32>
    %71 = vector.extract_strided_slice %59 {offsets = [2, 0, 0], sizes = [8, 16, 384], strides = [1, 1, 1]} : vector<10x16x384xf32> to vector<8x16x384xf32>
    %c2_46 = arith.constant 2 : index
    %c0_47 = arith.constant 0 : index
    %c0_48 = arith.constant 0 : index
    %72 = vector.load %arg7[%c2_46, %c0_47, %c0_48] : memref<3x384x128xf32, #tpu.memory_space<vmem>>, vector<1x384x128xf32>
    %73 = vector.shape_cast %72 : vector<1x384x128xf32> to vector<384x128xf32>
    %cst_49 = arith.constant dense<0.000000e+00> : vector<8x16x128xf32>
    %74 = tpu.matmul %71, %73, %cst_49 {dimension_numbers = #tpu.dot_dimension_numbers<[2], [0], [0, 1], [1], [0, 0, 0, 1, 1, 1], [], []>} : vector<8x16x384xf32>, vector<384x128xf32>, vector<8x16x128xf32> -> vector<8x16x128xf32>
    %75 = arith.addf %70, %74 : vector<8x16x128xf32>
    %c0_50 = arith.constant 0 : index
    %c0_51 = arith.constant 0 : index
    %76 = vector.load %arg8[%c0_50, %c0_51] : memref<1x128xf32, #tpu.memory_space<vmem>>, vector<1x128xf32>
    %77 = vector.shape_cast %76 : vector<1x128xf32> to vector<1x1x128xf32>
    %78 = vector.broadcast %77 : vector<1x1x128xf32> to vector<8x16x128xf32>
    %79 = arith.mulf %75, %78 : vector<8x16x128xf32>
    %c0_52 = arith.constant 0 : index
    %c0_53 = arith.constant 0 : index
    %80 = vector.load %arg9[%c0_52, %c0_53] : memref<1x128xf32, #tpu.memory_space<vmem>>, vector<1x128xf32>
    %81 = vector.shape_cast %80 : vector<1x128xf32> to vector<1x1x128xf32>
    %82 = vector.broadcast %81 : vector<1x1x128xf32> to vector<8x16x128xf32>
    %83 = arith.addf %79, %82 : vector<8x16x128xf32>
    %cst_54 = arith.constant 0.000000e+00 : f32
    %84 = vector.broadcast %cst_54 : f32 to vector<8x16x128xf32>
    %85 = arith.maximumf %83, %84 : vector<8x16x128xf32>
    %c0_55 = arith.constant 0 : index
    %c0_56 = arith.constant 0 : index
    %c0_57 = arith.constant 0 : index
    %c0_58 = arith.constant 0 : index
    %86 = vector.load %arg10[%c0_55, %c0_56, %c0_57, %c0_58] : memref<1x8x16x128xf32, #tpu.memory_space<vmem>>, vector<1x8x16x128xf32>
    %87 = vector.shape_cast %86 : vector<1x8x16x128xf32> to vector<8x16x128xf32>
    %88 = vector.shape_cast %85 : vector<8x16x128xf32> to vector<1x8x16x128xf32>
    tpu.vector_store %arg10[%c0_55, %c0_56, %c0_57, %c0_58], %88 {strides = array<i32>} : memref<1x8x16x128xf32, #tpu.memory_space<vmem>>, vector<1x8x16x128xf32>,
    return
  }
  func.func @transform_0(%arg0: i32, %arg1: i32) -> (i32, i32, i32, i32) {
    %c0_i32 = arith.constant 0 : i32
    %c0_i32_0 = arith.constant 0 : i32
    %c0_i32_1 = arith.constant 0 : i32
    return %arg0, %arg1, %c0_i32, %c0_i32_0 : i32, i32, i32, i32
  }
  func.func @transform_1(%arg0: i32, %arg1: i32) -> (i32, i32, i32, i32) {
    %c1_i32 = arith.constant 1 : i32
    %0 = arith.addi %arg1, %c1_i32 : i32
    %c1_i32_0 = arith.constant 1 : i32
    %1 = arith.muli %0, %c1_i32_0 : i32
    %c0_i32 = arith.constant 0 : i32
    %c0_i32_1 = arith.constant 0 : i32
    %c0_i32_2 = arith.constant 0 : i32
    return %arg0, %1, %c0_i32, %c0_i32_1 : i32, i32, i32, i32
  }
  func.func @transform_2(%arg0: i32, %arg1: i32) -> (i32, i32, i32) {
    %c0_i32 = arith.constant 0 : i32
    %c0_i32_0 = arith.constant 0 : i32
    %c0_i32_1 = arith.constant 0 : i32
    %c0_i32_2 = arith.constant 0 : i32
    return %c0_i32, %c0_i32_0, %c0_i32_1 : i32, i32, i32
  }
  func.func @transform_3(%arg0: i32, %arg1: i32) -> (i32, i32) {
    %c0_i32 = arith.constant 0 : i32
    %c0_i32_0 = arith.constant 0 : i32
    %c0_i32_1 = arith.constant 0 : i32
    return %c0_i32, %c0_i32_0 : i32, i32
  }
  func.func @transform_4(%arg0: i32, %arg1: i32) -> (i32, i32) {
    %c0_i32 = arith.constant 0 : i32
    %c0_i32_0 = arith.constant 0 : i32
    %c0_i32_1 = arith.constant 0 : i32
    return %c0_i32, %c0_i32_0 : i32, i32
  }
  func.func @transform_5(%arg0: i32, %arg1: i32) -> (i32, i32, i32) {
    %c0_i32 = arith.constant 0 : i32
    %c0_i32_0 = arith.constant 0 : i32
    %c0_i32_1 = arith.constant 0 : i32
    %c0_i32_2 = arith.constant 0 : i32
    return %c0_i32, %c0_i32_0, %c0_i32_1 : i32, i32, i32
  }
  func.func @transform_6(%arg0: i32, %arg1: i32) -> (i32, i32) {
    %c0_i32 = arith.constant 0 : i32
    %c0_i32_0 = arith.constant 0 : i32
    %c0_i32_1 = arith.constant 0 : i32
    return %c0_i32, %c0_i32_0 : i32, i32
  }
  func.func @transform_7(%arg0: i32, %arg1: i32) -> (i32, i32) {
    %c0_i32 = arith.constant 0 : i32
    %c0_i32_0 = arith.constant 0 : i32
    %c0_i32_1 = arith.constant 0 : i32
    return %c0_i32, %c0_i32_0 : i32, i32
  }
  func.func @transform_8(%arg0: i32, %arg1: i32) -> (i32, i32, i32, i32) {
    %c0_i32 = arith.constant 0 : i32
    %c0_i32_0 = arith.constant 0 : i32
    %c0_i32_1 = arith.constant 0 : i32
    return %arg0, %arg1, %c0_i32, %c0_i32_0 : i32, i32, i32, i32
  }
}

</mosaic_0001>

<llo_original>
// kernel: double_conv.1
$region0: #{double_conv.1}
  #allocation0 [shape = 'u32[]', space=smem, size = 0x4, offset = 0x4, fixed_abs, tag = 'smem constant byte address 0x4 - core index']
  #allocation1 [shape = 'u32[72,128]{1,0:T(1,128)}', space=vmem, size = 0x9000, scoped, tag = 'internal scratch']
  #allocation2 [shape = 'f32[10,18,128]{2,1,0:T(8,128)}', space=vmem, size = 0x1e000, scoped, tag = 'scratch operand']
  %s0 = inlined_call_operand.vmem [shape: f32[2,24,20,128], index: 0, kind: input, shape index: {}, may-alias: {0,1}]
  %s1 = inlined_call_operand.vmem [shape: f32[2,24,20,128], index: 1, kind: input, shape index: {}, may-alias: {0,1}]
  %s2 = inlined_call_operand.vmem [shape: f32[3,384,128], index: 2, kind: input, shape index: {}]
  %s3 = inlined_call_operand.vmem [shape: f32[1,128], index: 3, kind: input, shape index: {}]
  %s4 = inlined_call_operand.vmem [shape: f32[1,128], index: 4, kind: input, shape index: {}]
  %s5 = inlined_call_operand.vmem [shape: f32[3,384,128], index: 5, kind: input, shape index: {}]
  %s6 = inlined_call_operand.vmem [shape: f32[1,128], index: 6, kind: input, shape index: {}]
  %s7 = inlined_call_operand.vmem [shape: f32[1,128], index: 7, kind: input, shape index: {}]
  %s8 = inlined_call_operand.vmem [shape: f32[2,16,16,128], index: 8, kind: output, shape index: {}]
  %s9 = sld [smem:[#allocation0]]
  $region65: #{double_conv.1} parent=0
    _
  %s11 = ssub.s32 1, %s9
  %s12 = scalar_select 0, %s11, %s9
  loop: start=0, step=1, limit=6
  $region2: #{double_conv.1} parent=0 // loop_pre_header
    _
  $region3: #{double_conv.1} parent=0 // loop_header
    %s14 = sphi 0, %s18
    %p15 = scmp.ge.s32.totalorder %s14, 6
    %s21 = sphi 0, %s33
    %s22 = sphi 0, %s29
    %s23 = sphi 0, %s21
    %s24 = sphi 0, %s22
    %s25 = sphi 0, %s23
    %s26 = sphi 0, %s24
    %s38 = sphi 0, %s40
    %s41 = sphi 0, %s38
    %s42 = sphi 0, %s41
    %s58 = sphi 0, %s42
    %s68 = sphi 0, %s70
    %s71 = sphi 0, %s68
    %s72 = sphi 0, %s71
    %s88 = sphi 0, %s72
    %s92 = sphi 0, %s92
    %s94 = sphi 0, %s92
    %s95 = sphi 0, %s94
    %s109 = sphi 0, %s95
    %s113 = sphi 0, %s113
    %s115 = sphi 0, %s113
    %s116 = sphi 0, %s115
    %s130 = sphi 0, %s116
    %s134 = sphi 0, %s134
    %s136 = sphi 0, %s134
    %s137 = sphi 0, %s136
    %s151 = sphi 0, %s137
    %s155 = sphi 0, %s155
    %s157 = sphi 0, %s155
    %s158 = sphi 0, %s157
    %s172 = sphi 0, %s158
    %s176 = sphi 0, %s176
    %s178 = sphi 0, %s176
    %s179 = sphi 0, %s178
    %s193 = sphi 0, %s179
    %s197 = sphi 0, %s197
    %s199 = sphi 0, %s197
    %s200 = sphi 0, %s199
    %s214 = sphi 0, %s200
    %s222 = sphi 0, %s224
    %s225 = sphi 0, %s222
    %s226 = sphi 0, %s225
    %s242 = sphi 0, %s226
  $region4: #{double_conv.1} parent=0 // loop_header_branch
    %17 = sbr.rel (%p15) target = $region8
  $region5: #{double_conv.1} parent=0 // loop_body
    %s19 = ssub.s32 %s14, 1
    %s20 = ssub.s32 %s14, 2
    %s27 = sadd.s32 1, %s22
    %p28 = scmp.ge.s32.totalorder %s27, 2
    %s29 = scalar_select %p28, 0, %s27
    %s30 = sadd.s32 1, %s21
    %s31 = scalar_select %p28, %s30, %s21
    %p32 = scmp.ge.s32.totalorder %s31, 2
    %s33 = scalar_select %p32, 0, %s31
    %s34 = ssub.s32 %s21, %s33
    %s35 = ssub.s32 %s22, %s29
    %s36 = sor.u32 %s34, %s35
    %p37 = scmp.eq.s32.totalorder %s36, 0
    %s39 = sadd.s32 %s38, 1
    %s40 = scalar_select %p37, %s38, %s39
    %p43 = pneg %p37
    %p44 = scmp.eq.s32.totalorder %s14, 3
    %p45 = por %p43, %p44
    %p46 = scmp.ne.s32.totalorder %s38, %s41
    %p47 = scmp.eq.s32.totalorder %s14, 0
    %p48 = por %p46, %p47
    %p49 = scmp.ne.s32.totalorder %s38, %s41
    %p50 = scmp.eq.s32.totalorder %s19, 3
    %p51 = por %p49, %p50
    %p52 = scmp.ne.s32.totalorder %s41, %s42
    %p53 = scmp.eq.s32.totalorder %s19, 0
    %p54 = por %p52, %p53
    %p55 = scmp.ne.s32.totalorder %s41, %s42
    %p56 = scmp.eq.s32.totalorder %s20, 3
    %p57 = por %p55, %p56
    %p59 = scmp.ne.s32.totalorder %s42, %s58
    %p60 = scmp.eq.s32.totalorder %s20, 0
    %p61 = por %p59, %p60
    %s62 = sadd.s32 %s22, 1
    %s63 = sadd.s32 %s29, 1
    %s64 = ssub.s32 %s21, %s33
    %s65 = ssub.s32 %s62, %s63
    %s66 = sor.u32 %s64, %s65
    %p67 = scmp.eq.s32.totalorder %s66, 0
    %s69 = sadd.s32 %s68, 1
    %s70 = scalar_select %p67, %s68, %s69
    %p73 = pneg %p67
    %p74 = scmp.eq.s32.totalorder %s14, 3
    %p75 = por %p73, %p74
    %p76 = scmp.ne.s32.totalorder %s68, %s71
    %p77 = scmp.eq.s32.totalorder %s14, 0
    %p78 = por %p76, %p77
    %p79 = scmp.ne.s32.totalorder %s68, %s71
    %p80 = scmp.eq.s32.totalorder %s19, 3
    %p81 = por %p79, %p80
    %p82 = scmp.ne.s32.totalorder %s71, %s72
    %p83 = scmp.eq.s32.totalorder %s19, 0
    %p84 = por %p82, %p83
    %p85 = scmp.ne.s32.totalorder %s71, %s72
    %p86 = scmp.eq.s32.totalorder %s20, 3
    %p87 = por %p85, %p86
    %p89 = scmp.ne.s32.totalorder %s72, %s88
    %p90 = scmp.eq.s32.totalorder %s20, 0
    %p91 = por %p89, %p90
    %s93 = sadd.s32 %s92, 1
    %p96 = scmp.eq.s32.totalorder %s14, 3
    %p97 = scmp.ne.s32.totalorder %s92, %s94
    %p98 = scmp.eq.s32.totalorder %s14, 0
    %p99 = por %p97, %p98
    %p100 = scmp.ne.s32.totalorder %s92, %s94
    %p101 = scmp.eq.s32.totalorder %s19, 3
    %p102 = por %p100, %p101
    %p103 = scmp.ne.s32.totalorder %s94, %s95
    %p104 = scmp.eq.s32.totalorder %s19, 0
    %p105 = por %p103, %p104
    %p106 = scmp.ne.s32.totalorder %s94, %s95
    %p107 = scmp.eq.s32.totalorder %s20, 3
    %p108 = por %p106, %p107
    %p110 = scmp.ne.s32.totalorder %s95, %s109
    %p111 = scmp.eq.s32.totalorder %s20, 0
    %p112 = por %p110, %p111
    %s114 = sadd.s32 %s113, 1
    %p117 = scmp.eq.s32.totalorder %s14, 3
    %p118 = scmp.ne.s32.totalorder %s113, %s115
    %p119 = scmp.eq.s32.totalorder %s14, 0
    %p120 = por %p118, %p119
    %p121 = scmp.ne.s32.totalorder %s113, %s115
    %p122 = scmp.eq.s32.totalorder %s19, 3
    %p123 = por %p121, %p122
    %p124 = scmp.ne.s32.totalorder %s115, %s116
    %p125 = scmp.eq.s32.totalorder %s19, 0
    %p126 = por %p124, %p125
    %p127 = scmp.ne.s32.totalorder %s115, %s116
    %p128 = scmp.eq.s32.totalorder %s20, 3
    %p129 = por %p127, %p128
    %p131 = scmp.ne.s32.totalorder %s116, %s130
    %p132 = scmp.eq.s32.totalorder %s20, 0
    %p133 = por %p131, %p132
    %s135 = sadd.s32 %s134, 1
    %p138 = scmp.eq.s32.totalorder %s14, 3
    %p139 = scmp.ne.s32.totalorder %s134, %s136
    %p140 = scmp.eq.s32.totalorder %s14, 0
    %p141 = por %p139, %p140
    %p142 = scmp.ne.s32.totalorder %s134, %s136
    %p143 = scmp.eq.s32.totalorder %s19, 3
    %p144 = por %p142, %p143
    %p145 = scmp.ne.s32.totalorder %s136, %s137
    %p146 = scmp.eq.s32.totalorder %s19, 0
    %p147 = por %p145, %p146
    %p148 = scmp.ne.s32.totalorder %s136, %s137
    %p149 = scmp.eq.s32.totalorder %s20, 3
    %p150 = por %p148, %p149
    %p152 = scmp.ne.s32.totalorder %s137, %s151
    %p153 = scmp.eq.s32.totalorder %s20, 0
    %p154 = por %p152, %p153
    %s156 = sadd.s32 %s155, 1
    %p159 = scmp.eq.s32.totalorder %s14, 3
    %p160 = scmp.ne.s32.totalorder %s155, %s157
    %p161 = scmp.eq.s32.totalorder %s14, 0
    %p162 = por %p160, %p161
    %p163 = scmp.ne.s32.totalorder %s155, %s157
    %p164 = scmp.eq.s32.totalorder %s19, 3
    %p165 = por %p163, %p164
    %p166 = scmp.ne.s32.totalorder %s157, %s158
    %p167 = scmp.eq.s32.totalorder %s19, 0
    %p168 = por %p166, %p167
    %p169 = scmp.ne.s32.totalorder %s157, %s158
    %p170 = scmp.eq.s32.totalorder %s20, 3
    %p171 = por %p169, %p170
    %p173 = scmp.ne.s32.totalorder %s158, %s172
    %p174 = scmp.eq.s32.totalorder %s20, 0
    %p175 = por %p173, %p174
    %s177 = sadd.s32 %s176, 1
    %p180 = scmp.eq.s32.totalorder %s14, 3
    %p181 = scmp.ne.s32.totalorder %s176, %s178
    %p182 = scmp.eq.s32.totalorder %s14, 0
    %p183 = por %p181, %p182
    %p184 = scmp.ne.s32.totalorder %s176, %s178
    %p185 = scmp.eq.s32.totalorder %s19, 3
    %p186 = por %p184, %p185
    %p187 = scmp.ne.s32.totalorder %s178, %s179
    %p188 = scmp.eq.s32.totalorder %s19, 0
    %p189 = por %p187, %p188
    %p190 = scmp.ne.s32.totalorder %s178, %s179
    %p191 = scmp.eq.s32.totalorder %s20, 3
    %p192 = por %p190, %p191
    %p194 = scmp.ne.s32.totalorder %s179, %s193
    %p195 = scmp.eq.s32.totalorder %s20, 0
    %p196 = por %p194, %p195
    %s198 = sadd.s32 %s197, 1
    %p201 = scmp.eq.s32.totalorder %s14, 3
    %p202 = scmp.ne.s32.totalorder %s197, %s199
    %p203 = scmp.eq.s32.totalorder %s14, 0
    %p204 = por %p202, %p203
    %p205 = scmp.ne.s32.totalorder %s197, %s199
    %p206 = scmp.eq.s32.totalorder %s19, 3
    %p207 = por %p205, %p206
    %p208 = scmp.ne.s32.totalorder %s199, %s200
    %p209 = scmp.eq.s32.totalorder %s19, 0
    %p210 = por %p208, %p209
    %p211 = scmp.ne.s32.totalorder %s199, %s200
    %p212 = scmp.eq.s32.totalorder %s20, 3
    %p213 = por %p211, %p212
    %p215 = scmp.ne.s32.totalorder %s200, %s214
    %p216 = scmp.eq.s32.totalorder %s20, 0
    %p217 = por %p215, %p216
    %s218 = ssub.s32 %s21, %s33
    %s219 = ssub.s32 %s22, %s29
    %s220 = sor.u32 %s218, %s219
    %p221 = scmp.eq.s32.totalorder %s220, 0
    %s223 = sadd.s32 %s222, 1
    %s224 = scalar_select %p221, %s222, %s223
    %p227 = pneg %p221
    %p228 = scmp.eq.s32.totalorder %s14, 3
    %p229 = por %p227, %p228
    %p230 = scmp.ne.s32.totalorder %s222, %s225
    %p231 = scmp.eq.s32.totalorder %s14, 0
    %p232 = por %p230, %p231
    %p233 = scmp.ne.s32.totalorder %s222, %s225
    %p234 = scmp.eq.s32.totalorder %s19, 3
    %p235 = por %p233, %p234
    %p236 = scmp.ne.s32.totalorder %s225, %s226
    %p237 = scmp.eq.s32.totalorder %s19, 0
    %p238 = por %p236, %p237
    %p239 = scmp.ne.s32.totalorder %s225, %s226
    %p240 = scmp.eq.s32.totalorder %s20, 3
    %p241 = por %p239, %p240
    %p243 = scmp.ne.s32.totalorder %s226, %s242
    %p244 = scmp.eq.s32.totalorder %s20, 0
    %p245 = por %p243, %p244
    %p246 = scmp.le.s32.totalorder 1, %s14
    %p247 = scmp.lt.s32.totalorder %s14, 5
    %p248 = pnand %p246, %p247
    %p249 = pneg %p248
    // Predicated region
    $region9: #{double_conv.1} parent=5 // pred_check
      _
    $region10: #{double_conv.1} parent=5 // pred_check_branch
      %251 = sbr.rel (%p248) target = $region12
    $region11: #{double_conv.1} parent=5 // pred_region
      %s252 = ssub.s32 %s14, 1
      // Predicated region
      $region13: #{double_conv.1} parent=11 // pred_check
        %p253 = pneg %p105
      $region14: #{double_conv.1} parent=11 // pred_check_branch
        %255 = sbr.rel (%p253) target = $region16
      $region15: #{double_conv.1} parent=11 // pred_region
        _
      $region16: #{double_conv.1} parent=11 // pred_fallthru
        _
      // Predicated region
      $region17: #{double_conv.1} parent=11 // pred_check
        %p256 = pneg %p126
      $region18: #{double_conv.1} parent=11 // pred_check_branch
        %258 = sbr.rel (%p256) target = $region20
      $region19: #{double_conv.1} parent=11 // pred_region
        _
      $region20: #{double_conv.1} parent=11 // pred_fallthru
        _
      // Predicated region
      $region21: #{double_conv.1} parent=11 // pred_check
        %p259 = pneg %p147
      $region22: #{double_conv.1} parent=11 // pred_check_branch
        %261 = sbr.rel (%p259) target = $region24
      $region23: #{double_conv.1} parent=11 // pred_region
        _
      $region24: #{double_conv.1} parent=11 // pred_fallthru
        _
      // Predicated region
      $region25: #{double_conv.1} parent=11 // pred_check
        %p262 = pneg %p168
      $region26: #{double_conv.1} parent=11 // pred_check_branch
        %264 = sbr.rel (%p262) target = $region28
      $region27: #{double_conv.1} parent=11 // pred_region
        _
      $region28: #{double_conv.1} parent=11 // pred_fallthru
        _
      // Predicated region
      $region29: #{double_conv.1} parent=11 // pred_check
        %p265 = pneg %p189
      $region30: #{double_conv.1} parent=11 // pred_check_branch
        %267 = sbr.rel (%p265) target = $region32
      $region31: #{double_conv.1} parent=11 // pred_region
        _
      $region32: #{double_conv.1} parent=11 // pred_fallthru
        _
      // Predicated region
      $region33: #{double_conv.1} parent=11 // pred_check
        %p268 = pneg %p210
      $region34: #{double_conv.1} parent=11 // pred_check_branch
        %270 = sbr.rel (%p268) target = $region36
      $region35: #{double_conv.1} parent=11 // pred_region
        _
      $region36: #{double_conv.1} parent=11 // pred_fallthru
        _
    $region12: #{double_conv.1} parent=5 // pred_fallthru
      _
    %p271 = scmp.lt.s32.totalorder %s14, 4
    // Predicated region
    $region37: #{double_conv.1} parent=5 // pred_check
      %p272 = pneg %p271
    $region38: #{double_conv.1} parent=5 // pred_check_branch
      %274 = sbr.rel (%p272) target = $region40
    $region39: #{double_conv.1} parent=5 // pred_region
      // Predicated region
      $region41: #{double_conv.1} parent=39 // pred_check
        %p275 = pneg %p48
      $region42: #{double_conv.1} parent=39 // pred_check_branch
        %277 = sbr.rel (%p275) target = $region44
      $region43: #{double_conv.1} parent=39 // pred_region
        %s278 = smul.u32 8, %s22
        %p279 = scmp.lt.s32.totalorder %s21, 1
        %s280 = scalar_select %p279, %s21, 1
        %p281 = scmp.lt.s32.totalorder %s278, 23
        %s282 = scalar_select %p281, %s278, 23
        %s283 = smul.addr %s282, 3
        %s284 = smul.addr %s280, 72
        %s285 = sadd.s32 %s283, %s284
        %s286 = smul.addr %s285, 8
        %s287 = scalar_lea.vmem %s0, %s286
        %s288 = smul.u32 8, %s22
      $region44: #{double_conv.1} parent=39 // pred_fallthru
        _
      // Predicated region
      $region45: #{double_conv.1} parent=39 // pred_check
        %p289 = pneg %p78
      $region46: #{double_conv.1} parent=39 // pred_check_branch
        %291 = sbr.rel (%p289) target = $region48
      $region47: #{double_conv.1} parent=39 // pred_region
        %s292 = sadd.s32 %s22, 1
        %s293 = smul.u32 8, %s292
        %p294 = scmp.lt.s32.totalorder %s21, 1
        %s295 = scalar_select %p294, %s21, 1
        %p296 = scmp.lt.s32.totalorder %s293, 23
        %s297 = scalar_select %p296, %s293, 23
        %s298 = smul.addr %s297, 3
        %s299 = smul.addr %s295, 72
        %s300 = sadd.s32 %s298, %s299
        %s301 = smul.addr %s300, 8
        %s302 = scalar_lea.vmem %s1, %s301
        %s303 = sadd.s32 %s22, 1
        %s304 = smul.u32 8, %s303
      $region48: #{double_conv.1} parent=39 // pred_fallthru
        _
    $region40: #{double_conv.1} parent=5 // pred_fallthru
      _
    %p305 = scmp.le.s32.totalorder 1, %s14
    %p306 = scmp.lt.s32.totalorder %s14, 5
    %p307 = pnand %p305, %p306
    %p308 = pneg %p307
    // Predicated region
    $region49: #{double_conv.1} parent=5 // pred_check
      _
    $region50: #{double_conv.1} parent=5 // pred_check_branch
      %310 = sbr.rel (%p307) target = $region52
    $region51: #{double_conv.1} parent=5 // pred_region
      %s311 = ssub.s32 %s14, 1
      %s312 = smul.u32 8, %s24
      %p313 = scmp.lt.s32.totalorder %s23, 1
      %s314 = scalar_select %p313, %s23, 1
      %p315 = scmp.lt.s32.totalorder %s312, 23
      %s316 = scalar_select %p315, %s312, 23
      %s317 = smul.addr %s316, 3
      %s318 = smul.addr %s314, 72
      %s319 = sadd.s32 %s317, %s318
      %s320 = smul.addr %s319, 8
      %s321 = scalar_lea.vmem %s0, %s320
      %p322 = pneg %p54
      %p323 = pneg %p51
      %s324 = sadd.s32 %s24, 1
      %s325 = smul.u32 8, %s324
      %p326 = scmp.lt.s32.totalorder %s23, 1
      %s327 = scalar_select %p326, %s23, 1
      %p328 = scmp.lt.s32.totalorder %s325, 23
      %s329 = scalar_select %p328, %s325, 23
      %s330 = smul.addr %s329, 3
      %s331 = smul.addr %s327, 72
      %s332 = sadd.s32 %s330, %s331
      %s333 = smul.addr %s332, 8
      %s334 = scalar_lea.vmem %s1, %s333
      %p335 = pneg %p84
      %p336 = pneg %p81
      %p337 = pneg %p105
      %p338 = pneg %p102
      %p339 = pneg %p126
      %p340 = pneg %p123
      %p341 = pneg %p147
      %p342 = pneg %p144
      %p343 = pneg %p168
      %p344 = pneg %p165
      %p345 = pneg %p189
      %p346 = pneg %p186
      %p347 = pneg %p210
      %p348 = pneg %p207
      %p349 = pneg %p238
      %p350 = pneg %p235
      %s351 = smul.u32 8, %s24
      %p352 = scmp.lt.s32.totalorder %s23, 1
      %s353 = scalar_select %p352, %s23, 1
      %p354 = scmp.lt.s32.totalorder %s351, 15
      %s355 = scalar_select %p354, %s351, 15
      %s356 = smul.addr %s355, 2
      %s357 = smul.addr %s353, 32
      %s358 = sadd.s32 %s356, %s357
      %s359 = smul.addr %s358, 8
      %s360 = scalar_lea.vmem %s8, %s359
      %s361 = smul.u32 8, %s24
      %p362 = scmp.lt.s32.totalorder %s23, 1
      %s363 = scalar_select %p362, %s23, 1
      %p364 = scmp.lt.s32.totalorder %s361, 23
      %s365 = scalar_select %p364, %s361, 23
      %s366 = smul.addr %s365, 3
      %s367 = smul.addr %s363, 72
      %s368 = sadd.s32 %s366, %s367
      %s369 = smul.addr %s368, 8
      %s370 = scalar_lea.vmem %s0, %s369
      %s371 = smul.u32 8, %s24
      %s372 = sadd.s32 %s24, 1
      %s373 = smul.u32 8, %s372
      %p374 = scmp.lt.s32.totalorder %s23, 1
      %s375 = scalar_select %p374, %s23, 1
      %p376 = scmp.lt.s32.totalorder %s373, 23
      %s377 = scalar_select %p376, %s373, 23
      %s378 = smul.addr %s377, 3
      %s379 = smul.addr %s375, 72
      %s380 = sadd.s32 %s378, %s379
      %s381 = smul.addr %s380, 8
      %s382 = scalar_lea.vmem %s1, %s381
      %s383 = sadd.s32 %s24, 1
      %s384 = smul.u32 8, %s383
      %s385 = smul.u32 8, %s24
      %p386 = scmp.lt.s32.totalorder %s23, 1
      %s387 = scalar_select %p386, %s23, 1
      %p388 = scmp.lt.s32.totalorder %s385, 15
      %s389 = scalar_select %p388, %s385, 15
      %s390 = smul.addr %s389, 2
      %s391 = smul.addr %s387, 32
      %s392 = sadd.s32 %s390, %s391
      %s393 = smul.addr %s392, 8
      %s394 = scalar_lea.vmem %s8, %s393
      %s395 = smul.u32 8, %s24
      %v396 = vld [vmem:[%s370] sm:$0xff]
      %v397 = vld [vmem:[%s370 + $0x8] sm:$0xff]
      %v398 = vld [vmem:[%s370 + $0x10] sm:$0xf]
      %v399 = vld [vmem:[%s370 + $0x18] sm:$0xff]
      %v400 = vld [vmem:[%s370 + $0x20] sm:$0xff]
      %v401 = vld [vmem:[%s370 + $0x28] sm:$0xf]
      %v402 = vld [vmem:[%s370 + $0x30] sm:$0xff]
      %v403 = vld [vmem:[%s370 + $0x38] sm:$0xff]
      %v404 = vld [vmem:[%s370 + $0x40] sm:$0xf]
      %v405 = vld [vmem:[%s370 + $0x48] sm:$0xff]
      %v406 = vld [vmem:[%s370 + $0x50] sm:$0xff]
      %v407 = vld [vmem:[%s370 + $0x58] sm:$0xf]
      %v408 = vld [vmem:[%s370 + $0x60] sm:$0xff]
      %v409 = vld [vmem:[%s370 + $0x68] sm:$0xff]
      %v410 = vld [vmem:[%s370 + $0x70] sm:$0xf]
      %v411 = vld [vmem:[%s370 + $0x78] sm:$0xff]
      %v412 = vld [vmem:[%s370 + $0x80] sm:$0xff]
      %v413 = vld [vmem:[%s370 + $0x88] sm:$0xf]
      %v414 = vld [vmem:[%s370 + $0x90] sm:$0xff]
      %v415 = vld [vmem:[%s370 + $0x98] sm:$0xff]
      %v416 = vld [vmem:[%s370 + $0xa0] sm:$0xf]
      %v417 = vld [vmem:[%s370 + $0xa8] sm:$0xff]
      %v418 = vld [vmem:[%s370 + $0xb0] sm:$0xff]
      %v419 = vld [vmem:[%s370 + $0xb8] sm:$0xf]
      %v420 = vld [vmem:[%s382] sm:$0xff]
      %v421 = vld [vmem:[%s382 + $0x8] sm:$0xff]
      %v422 = vld [vmem:[%s382 + $0x10] sm:$0xf]
      %v423 = vld [vmem:[%s382 + $0x18] sm:$0xff]
      %v424 = vld [vmem:[%s382 + $0x20] sm:$0xff]
      %v425 = vld [vmem:[%s382 + $0x28] sm:$0xf]
      %v426 = vld [vmem:[%s382 + $0x30] sm:$0xff]
      %v427 = vld [vmem:[%s382 + $0x38] sm:$0xff]
      %v428 = vld [vmem:[%s382 + $0x40] sm:$0xf]
      %v429 = vld [vmem:[%s382 + $0x48] sm:$0xff]
      %v430 = vld [vmem:[%s382 + $0x50] sm:$0xff]
      %v431 = vld [vmem:[%s382 + $0x58] sm:$0xf]
      %vm468 = vcmask 1046528
      %v469 = vrot.slane %v396, 1
      %v470 = vrot.slane %v397, 1
      %v471 = vsel %vm468, %v469, %v470
      %v472 = vrot.slane %v398, 1
      %v473 = vsel %vm468, %v470, %v472
      %v474 = vrot.slane %v399, 1
      %v475 = vrot.slane %v400, 1
      %v476 = vsel %vm468, %v474, %v475
      %v477 = vrot.slane %v401, 1
      %v478 = vsel %vm468, %v475, %v477
      %v479 = vrot.slane %v402, 1
      %v480 = vrot.slane %v403, 1
      %v481 = vsel %vm468, %v479, %v480
      %v482 = vrot.slane %v404, 1
      %v483 = vsel %vm468, %v480, %v482
      %v484 = vrot.slane %v405, 1
      %v485 = vrot.slane %v406, 1
      %v486 = vsel %vm468, %v484, %v485
      %v487 = vrot.slane %v407, 1
      %v488 = vsel %vm468, %v485, %v487
      %v489 = vrot.slane %v408, 1
      %v490 = vrot.slane %v409, 1
      %v491 = vsel %vm468, %v489, %v490
      %v492 = vrot.slane %v410, 1
      %v493 = vsel %vm468, %v490, %v492
      %v494 = vrot.slane %v411, 1
      %v495 = vrot.slane %v412, 1
      %v496 = vsel %vm468, %v494, %v495
      %v497 = vrot.slane %v413, 1
      %v498 = vsel %vm468, %v495, %v497
      %v499 = vrot.slane %v414, 1
      %v500 = vrot.slane %v415, 1
      %v501 = vsel %vm468, %v499, %v500
      %v502 = vrot.slane %v416, 1
      %v503 = vsel %vm468, %v500, %v502
      %v504 = vrot.slane %v417, 1
      %v505 = vrot.slane %v418, 1
      %v506 = vsel %vm468, %v504, %v505
      %v507 = vrot.slane %v419, 1
      %v508 = vsel %vm468, %v505, %v507
      %v509 = vrot.slane %v420, 1
      %v510 = vrot.slane %v421, 1
      %v511 = vsel %vm468, %v509, %v510
      %v512 = vrot.slane %v422, 1
      %v513 = vsel %vm468, %v510, %v512
      %v514 = vrot.slane %v423, 1
      %v515 = vrot.slane %v424, 1
      %v516 = vsel %vm468, %v514, %v515
      %v517 = vrot.slane %v425, 1
      %v518 = vsel %vm468, %v515, %v517
      %v519 = vrot.slane %v426, 1
      %v520 = vrot.slane %v427, 1
      %v521 = vsel %vm468, %v519, %v520
      %v522 = vrot.slane %v428, 1
      %v523 = vsel %vm468, %v520, %v522
      %v524 = vrot.slane %v429, 1
      %v525 = vrot.slane %v430, 1
      %v526 = vsel %vm468, %v524, %v525
      %v527 = vrot.slane %v431, 1
      %v528 = vsel %vm468, %v525, %v527
      %vm529 = vcmask 1045504
      %v530 = vrot.slane %v396, 2
      %v531 = vrot.slane %v397, 2
      %v532 = vsel %vm529, %v530, %v531
      %v533 = vrot.slane %v398, 2
      %v534 = vsel %vm529, %v531, %v533
      %v535 = vrot.slane %v399, 2
      %v536 = vrot.slane %v400, 2
      %v537 = vsel %vm529, %v535, %v536
      %v538 = vrot.slane %v401, 2
      %v539 = vsel %vm529, %v536, %v538
      %v540 = vrot.slane %v402, 2
      %v541 = vrot.slane %v403, 2
      %v542 = vsel %vm529, %v540, %v541
      %v543 = vrot.slane %v404, 2
      %v544 = vsel %vm529, %v541, %v543
      %v545 = vrot.slane %v405, 2
      %v546 = vrot.slane %v406, 2
      %v547 = vsel %vm529, %v545, %v546
      %v548 = vrot.slane %v407, 2
      %v549 = vsel %vm529, %v546, %v548
      %v550 = vrot.slane %v408, 2
      %v551 = vrot.slane %v409, 2
      %v552 = vsel %vm529, %v550, %v551
      %v553 = vrot.slane %v410, 2
      %v554 = vsel %vm529, %v551, %v553
      %v555 = vrot.slane %v411, 2
      %v556 = vrot.slane %v412, 2
      %v557 = vsel %vm529, %v555, %v556
      %v558 = vrot.slane %v413, 2
      %v559 = vsel %vm529, %v556, %v558
      %v560 = vrot.slane %v414, 2
      %v561 = vrot.slane %v415, 2
      %v562 = vsel %vm529, %v560, %v561
      %v563 = vrot.slane %v416, 2
      %v564 = vsel %vm529, %v561, %v563
      %v565 = vrot.slane %v417, 2
      %v566 = vrot.slane %v418, 2
      %v567 = vsel %vm529, %v565, %v566
      %v568 = vrot.slane %v419, 2
      %v569 = vsel %vm529, %v566, %v568
      %v570 = vrot.slane %v420, 2
      %v571 = vrot.slane %v421, 2
      %v572 = vsel %vm529, %v570, %v571
      %v573 = vrot.slane %v422, 2
      %v574 = vsel %vm529, %v571, %v573
      %v575 = vrot.slane %v423, 2
      %v576 = vrot.slane %v424, 2
      %v577 = vsel %vm529, %v575, %v576
      %v578 = vrot.slane %v425, 2
      %v579 = vsel %vm529, %v576, %v578
      %v580 = vrot.slane %v426, 2
      %v581 = vrot.slane %v427, 2
      %v582 = vsel %vm529, %v580, %v581
      %v583 = vrot.slane %v428, 2
      %v584 = vsel %vm529, %v581, %v583
      %v585 = vrot.slane %v429, 2
      %v586 = vrot.slane %v430, 2
      %v587 = vsel %vm529, %v585, %v586
      %v588 = vrot.slane %v431, 2
      %v589 = vsel %vm529, %v586, %v588
      %v590 = vld [vmem:[%s2] sm:$0xff]
      %v591 = vld [vmem:[%s2 + $0x8] sm:$0xff]
      %v592 = vld [vmem:[%s2 + $0x10] sm:$0xff]
      %v593 = vld [vmem:[%s2 + $0x18] sm:$0xff]
      %v594 = vld [vmem:[%s2 + $0x20] sm:$0xff]
      %v595 = vld [vmem:[%s2 + $0x28] sm:$0xff]
      %v596 = vld [vmem:[%s2 + $0x30] sm:$0xff]
      %v597 = vld [vmem:[%s2 + $0x38] sm:$0xff]
      %v598 = vld [vmem:[%s2 + $0x40] sm:$0xff]
      %v599 = vld [vmem:[%s2 + $0x48] sm:$0xff]
      %v600 = vld [vmem:[%s2 + $0x50] sm:$0xff]
      %v601 = vld [vmem:[%s2 + $0x58] sm:$0xff]
      %v602 = vld [vmem:[%s2 + $0x60] sm:$0xff]
      %v603 = vld [vmem:[%s2 + $0x68] sm:$0xff]
      %v604 = vld [vmem:[%s2 + $0x70] sm:$0xff]
      %v605 = vld [vmem:[%s2 + $0x78] sm:$0xff]
      %v606 = vld [vmem:[%s2 + $0x80] sm:$0xff]
      %v607 = vld [vmem:[%s2 + $0x88] sm:$0xff]
      %v608 = vld [vmem:[%s2 + $0x90] sm:$0xff]
      %v609 = vld [vmem:[%s2 + $0x98] sm:$0xff]
      %v610 = vld [vmem:[%s2 + $0xa0] sm:$0xff]
      %v611 = vld [vmem:[%s2 + $0xa8] sm:$0xff]
      %v612 = vld [vmem:[%s2 + $0xb0] sm:$0xff]
      %v613 = vld [vmem:[%s2 + $0xb8] sm:$0xff]
      %v614 = vld [vmem:[%s2 + $0xc0] sm:$0xff]
      %v615 = vld [vmem:[%s2 + $0xc8] sm:$0xff]
      %v616 = vld [vmem:[%s2 + $0xd0] sm:$0xff]
      %v617 = vld [vmem:[%s2 + $0xd8] sm:$0xff]
      %v618 = vld [vmem:[%s2 + $0xe0] sm:$0xff]
      %v619 = vld [vmem:[%s2 + $0xe8] sm:$0xff]
      %v620 = vld [vmem:[%s2 + $0xf0] sm:$0xff]
      %v621 = vld [vmem:[%s2 + $0xf8] sm:$0xff]
      %v622 = vld [vmem:[%s2 + $0x100] sm:$0xff]
      %v623 = vld [vmem:[%s2 + $0x108] sm:$0xff]
      %v624 = vld [vmem:[%s2 + $0x110] sm:$0xff]
      %v625 = vld [vmem:[%s2 + $0x118] sm:$0xff]
      %v626 = vld [vmem:[%s2 + $0x120] sm:$0xff]
      %v627 = vld [vmem:[%s2 + $0x128] sm:$0xff]
      %v628 = vld [vmem:[%s2 + $0x130] sm:$0xff]
      %v629 = vld [vmem:[%s2 + $0x138] sm:$0xff]
      %v630 = vld [vmem:[%s2 + $0x140] sm:$0xff]
      %v631 = vld [vmem:[%s2 + $0x148] sm:$0xff]
      %v632 = vld [vmem:[%s2 + $0x150] sm:$0xff]
      %v633 = vld [vmem:[%s2 + $0x158] sm:$0xff]
      %v634 = vld [vmem:[%s2 + $0x160] sm:$0xff]
      %v635 = vld [vmem:[%s2 + $0x168] sm:$0xff]
      %v636 = vld [vmem:[%s2 + $0x170] sm:$0xff]
      %v637 = vld [vmem:[%s2 + $0x178] sm:$0xff]
      %s638 = scalar_lea.vmem %s2, 384
      %v639 = vld [vmem:[%s638] sm:$0xff]
      %v640 = vld [vmem:[%s638 + $0x8] sm:$0xff]
      %v641 = vld [vmem:[%s638 + $0x10] sm:$0xff]
      %v642 = vld [vmem:[%s638 + $0x18] sm:$0xff]
      %v643 = vld [vmem:[%s638 + $0x20] sm:$0xff]
      %v644 = vld [vmem:[%s638 + $0x28] sm:$0xff]
      %v645 = vld [vmem:[%s638 + $0x30] sm:$0xff]
      %v646 = vld [vmem:[%s638 + $0x38] sm:$0xff]
      %v647 = vld [vmem:[%s638 + $0x40] sm:$0xff]
      %v648 = vld [vmem:[%s638 + $0x48] sm:$0xff]
      %v649 = vld [vmem:[%s638 + $0x50] sm:$0xff]
      %v650 = vld [vmem:[%s638 + $0x58] sm:$0xff]
      %v651 = vld [vmem:[%s638 + $0x60] sm:$0xff]
      %v652 = vld [vmem:[%s638 + $0x68] sm:$0xff]
      %v653 = vld [vmem:[%s638 + $0x70] sm:$0xff]
      %v654 = vld [vmem:[%s638 + $0x78] sm:$0xff]
      %v655 = vld [vmem:[%s638 + $0x80] sm:$0xff]
      %v656 = vld [vmem:[%s638 + $0x88] sm:$0xff]
      %v657 = vld [vmem:[%s638 + $0x90] sm:$0xff]
      %v658 = vld [vmem:[%s638 + $0x98] sm:$0xff]
      %v659 = vld [vmem:[%s638 + $0xa0] sm:$0xff]
      %v660 = vld [vmem:[%s638 + $0xa8] sm:$0xff]
      %v661 = vld [vmem:[%s638 + $0xb0] sm:$0xff]
      %v662 = vld [vmem:[%s638 + $0xb8] sm:$0xff]
      %v663 = vld [vmem:[%s638 + $0xc0] sm:$0xff]
      %v664 = vld [vmem:[%s638 + $0xc8] sm:$0xff]
      %v665 = vld [vmem:[%s638 + $0xd0] sm:$0xff]
      %v666 = vld [vmem:[%s638 + $0xd8] sm:$0xff]
      %v667 = vld [vmem:[%s638 + $0xe0] sm:$0xff]
      %v668 = vld [vmem:[%s638 + $0xe8] sm:$0xff]
      %v669 = vld [vmem:[%s638 + $0xf0] sm:$0xff]
      %v670 = vld [vmem:[%s638 + $0xf8] sm:$0xff]
      %v671 = vld [vmem:[%s638 + $0x100] sm:$0xff]
      %v672 = vld [vmem:[%s638 + $0x108] sm:$0xff]
      %v673 = vld [vmem:[%s638 + $0x110] sm:$0xff]
      %v674 = vld [vmem:[%s638 + $0x118] sm:$0xff]
      %v675 = vld [vmem:[%s638 + $0x120] sm:$0xff]
      %v676 = vld [vmem:[%s638 + $0x128] sm:$0xff]
      %v677 = vld [vmem:[%s638 + $0x130] sm:$0xff]
      %v678 = vld [vmem:[%s638 + $0x138] sm:$0xff]
      %v679 = vld [vmem:[%s638 + $0x140] sm:$0xff]
      %v680 = vld [vmem:[%s638 + $0x148] sm:$0xff]
      %v681 = vld [vmem:[%s638 + $0x150] sm:$0xff]
      %v682 = vld [vmem:[%s638 + $0x158] sm:$0xff]
      %v683 = vld [vmem:[%s638 + $0x160] sm:$0xff]
      %v684 = vld [vmem:[%s638 + $0x168] sm:$0xff]
      %v685 = vld [vmem:[%s638 + $0x170] sm:$0xff]
      %v686 = vld [vmem:[%s638 + $0x178] sm:$0xff]
      %v687 = vrot.slane %v476, 6
      %v688 = vrot.slane %v537, 4
      %v689 = vrot.slane %v478, 6
      %v690 = vrot.slane %v539, 4
      %v691 = vrot.slane %v477, 6
      %v692 = vrot.slane %v538, 4
      %v693 = vrot.slane %v481, 6
      %v694 = vrot.slane %v542, 4
      %v695 = vrot.slane %v483, 6
      %v696 = vrot.slane %v544, 4
      %v697 = vrot.slane %v482, 6
      %v698 = vrot.slane %v543, 4
      %v699 = vrot.slane %v486, 6
      %v700 = vrot.slane %v547, 4
      %v701 = vrot.slane %v488, 6
      %v702 = vrot.slane %v549, 4
      %v703 = vrot.slane %v487, 6
      %v704 = vrot.slane %v548, 4
      %v705 = vrot.slane %v491, 6
      %v706 = vrot.slane %v552, 4
      %v707 = vrot.slane %v493, 6
      %v708 = vrot.slane %v554, 4
      %v709 = vrot.slane %v492, 6
      %v710 = vrot.slane %v553, 4
      %v711 = vrot.slane %v496, 6
      %v712 = vrot.slane %v557, 4
      %v713 = vrot.slane %v498, 6
      %v714 = vrot.slane %v559, 4
      %v715 = vrot.slane %v497, 6
      %v716 = vrot.slane %v558, 4
      %v717 = vrot.slane %v501, 6
      %v718 = vrot.slane %v562, 4
      %v719 = vrot.slane %v503, 6
      %v720 = vrot.slane %v564, 4
      %v721 = vrot.slane %v502, 6
      %v722 = vrot.slane %v563, 4
      %v723 = vrot.slane %v506, 6
      %v724 = vrot.slane %v567, 4
      %v725 = vrot.slane %v508, 6
      %v726 = vrot.slane %v569, 4
      %v727 = vrot.slane %v507, 6
      %v728 = vrot.slane %v568, 4
      %v729 = vrot.slane %v511, 6
      %v730 = vrot.slane %v572, 4
      %v731 = vrot.slane %v513, 6
      %v732 = vrot.slane %v574, 4
      %v733 = vrot.slane %v512, 6
      %v734 = vrot.slane %v573, 4
      %v735 = vrot.slane %v516, 6
      %v736 = vrot.slane %v577, 4
      %v737 = vrot.slane %v518, 6
      %v738 = vrot.slane %v579, 4
      %v739 = vrot.slane %v517, 6
      %v740 = vrot.slane %v578, 4
      %v741 = vrot.slane %v521, 6
      %v742 = vrot.slane %v582, 4
      %v743 = vrot.slane %v523, 6
      %v744 = vrot.slane %v584, 4
      %v745 = vrot.slane %v522, 6
      %v746 = vrot.slane %v583, 4
      %vm747 = vcmask 1041408
      %v748 = vsel %vm747, %v399, %v687
      %vm749 = vcmask 1043456
      %v750 = vsel %vm749, %v748, %v688
      %vm751 = vcmask 1043458
      %v752 = vsel %vm751, %v399, %v687
      %vm753 = vcmask 1045506
      %v754 = vsel %vm753, %v752, %v688
      %v755 = vrot.slane %v754, 2
      %vm756 = vcmask 1045508
      %v757 = vsel %vm756, %v399, %v687
      %v758 = vsel %vm749, %v688, %v757
      %v759 = vrot.slane %v758, 4
      %v760 = vsel %vm529, %v687, %v399
      %v761 = vsel %vm753, %v688, %v760
      %v762 = vrot.slane %v761, 6
      %v763 = vsel %vm747, %v400, %v689
      %v764 = vsel %vm749, %v763, %v690
      %v765 = vsel %vm751, %v400, %v689
      %v766 = vsel %vm753, %v765, %v690
      %v767 = vrot.slane %v766, 2
      %v768 = vsel %vm756, %v400, %v689
      %v769 = vsel %vm749, %v690, %v768
      %v770 = vrot.slane %v769, 4
      %v771 = vsel %vm529, %v689, %v400
      %v772 = vsel %vm753, %v690, %v771
      %v773 = vrot.slane %v772, 6
      %v774 = vsel %vm747, %v401, %v691
      %v775 = vsel %vm749, %v774, %v692
      %v776 = vsel %vm747, %v402, %v693
      %v777 = vsel %vm749, %v776, %v694
      %v778 = vsel %vm751, %v402, %v693
      %v779 = vsel %vm753, %v778, %v694
      %v780 = vrot.slane %v779, 2
      %v781 = vsel %vm756, %v402, %v693
      %v782 = vsel %vm749, %v694, %v781
      %v783 = vrot.slane %v782, 4
      %v784 = vsel %vm529, %v693, %v402
      %v785 = vsel %vm753, %v694, %v784
      %v786 = vrot.slane %v785, 6
      %v787 = vsel %vm747, %v403, %v695
      %v788 = vsel %vm749, %v787, %v696
      %v789 = vsel %vm751, %v403, %v695
      %v790 = vsel %vm753, %v789, %v696
      %v791 = vrot.slane %v790, 2
      %v792 = vsel %vm756, %v403, %v695
      %v793 = vsel %vm749, %v696, %v792
      %v794 = vrot.slane %v793, 4
      %v795 = vsel %vm529, %v695, %v403
      %v796 = vsel %vm753, %v696, %v795
      %v797 = vrot.slane %v796, 6
      %v798 = vsel %vm747, %v404, %v697
      %v799 = vsel %vm749, %v798, %v698
      %v800 = vsel %vm747, %v405, %v699
      %v801 = vsel %vm749, %v800, %v700
      %v802 = vsel %vm751, %v405, %v699
      %v803 = vsel %vm753, %v802, %v700
      %v804 = vrot.slane %v803, 2
      %v805 = vsel %vm756, %v405, %v699
      %v806 = vsel %vm749, %v700, %v805
      %v807 = vrot.slane %v806, 4
      %v808 = vsel %vm529, %v699, %v405
      %v809 = vsel %vm753, %v700, %v808
      %v810 = vrot.slane %v809, 6
      %v811 = vsel %vm747, %v406, %v701
      %v812 = vsel %vm749, %v811, %v702
      %v813 = vsel %vm751, %v406, %v701
      %v814 = vsel %vm753, %v813, %v702
      %v815 = vrot.slane %v814, 2
      %v816 = vsel %vm756, %v406, %v701
      %v817 = vsel %vm749, %v702, %v816
      %v818 = vrot.slane %v817, 4
      %v819 = vsel %vm529, %v701, %v406
      %v820 = vsel %vm753, %v702, %v819
      %v821 = vrot.slane %v820, 6
      %v822 = vsel %vm747, %v407, %v703
      %v823 = vsel %vm749, %v822, %v704
      %v824 = vsel %vm747, %v408, %v705
      %v825 = vsel %vm749, %v824, %v706
      %v826 = vsel %vm751, %v408, %v705
      %v827 = vsel %vm753, %v826, %v706
      %v828 = vrot.slane %v827, 2
      %v829 = vsel %vm756, %v408, %v705
      %v830 = vsel %vm749, %v706, %v829
      %v831 = vrot.slane %v830, 4
      %v832 = vsel %vm529, %v705, %v408
      %v833 = vsel %vm753, %v706, %v832
      %v834 = vrot.slane %v833, 6
      %v835 = vsel %vm747, %v409, %v707
      %v836 = vsel %vm749, %v835, %v708
      %v837 = vsel %vm751, %v409, %v707
      %v838 = vsel %vm753, %v837, %v708
      %v839 = vrot.slane %v838, 2
      %v840 = vsel %vm756, %v409, %v707
      %v841 = vsel %vm749, %v708, %v840
      %v842 = vrot.slane %v841, 4
      %v843 = vsel %vm529, %v707, %v409
      %v844 = vsel %vm753, %v708, %v843
      %v845 = vrot.slane %v844, 6
      %v846 = vsel %vm747, %v410, %v709
      %v847 = vsel %vm749, %v846, %v710
      %v848 = vsel %vm747, %v411, %v711
      %v849 = vsel %vm749, %v848, %v712
      %v850 = vsel %vm751, %v411, %v711
      %v851 = vsel %vm753, %v850, %v712
      %v852 = vrot.slane %v851, 2
      %v853 = vsel %vm756, %v411, %v711
      %v854 = vsel %vm749, %v712, %v853
      %v855 = vrot.slane %v854, 4
      %v856 = vsel %vm529, %v711, %v411
      %v857 = vsel %vm753, %v712, %v856
      %v858 = vrot.slane %v857, 6
      %v859 = vsel %vm747, %v412, %v713
      %v860 = vsel %vm749, %v859, %v714
      %v861 = vsel %vm751, %v412, %v713
      %v862 = vsel %vm753, %v861, %v714
      %v863 = vrot.slane %v862, 2
      %v864 = vsel %vm756, %v412, %v713
      %v865 = vsel %vm749, %v714, %v864
      %v866 = vrot.slane %v865, 4
      %v867 = vsel %vm529, %v713, %v412
      %v868 = vsel %vm753, %v714, %v867
      %v869 = vrot.slane %v868, 6
      %v870 = vsel %vm747, %v413, %v715
      %v871 = vsel %vm749, %v870, %v716
      %v872 = vsel %vm747, %v414, %v717
      %v873 = vsel %vm749, %v872, %v718
      %v874 = vsel %vm751, %v414, %v717
      %v875 = vsel %vm753, %v874, %v718
      %v876 = vrot.slane %v875, 2
      %v877 = vsel %vm756, %v414, %v717
      %v878 = vsel %vm749, %v718, %v877
      %v879 = vrot.slane %v878, 4
      %v880 = vsel %vm529, %v717, %v414
      %v881 = vsel %vm753, %v718, %v880
      %v882 = vrot.slane %v881, 6
      %v883 = vsel %vm747, %v415, %v719
      %v884 = vsel %vm749, %v883, %v720
      %v885 = vsel %vm751, %v415, %v719
      %v886 = vsel %vm753, %v885, %v720
      %v887 = vrot.slane %v886, 2
      %v888 = vsel %vm756, %v415, %v719
      %v889 = vsel %vm749, %v720, %v888
      %v890 = vrot.slane %v889, 4
      %v891 = vsel %vm529, %v719, %v415
      %v892 = vsel %vm753, %v720, %v891
      %v893 = vrot.slane %v892, 6
      %v894 = vsel %vm747, %v416, %v721
      %v895 = vsel %vm749, %v894, %v722
      %v896 = vsel %vm747, %v417, %v723
      %v897 = vsel %vm749, %v896, %v724
      %v898 = vsel %vm751, %v417, %v723
      %v899 = vsel %vm753, %v898, %v724
      %v900 = vrot.slane %v899, 2
      %v901 = vsel %vm756, %v417, %v723
      %v902 = vsel %vm749, %v724, %v901
      %v903 = vrot.slane %v902, 4
      %v904 = vsel %vm529, %v723, %v417
      %v905 = vsel %vm753, %v724, %v904
      %v906 = vrot.slane %v905, 6
      %v907 = vsel %vm747, %v418, %v725
      %v908 = vsel %vm749, %v907, %v726
      %v909 = vsel %vm751, %v418, %v725
      %v910 = vsel %vm753, %v909, %v726
      %v911 = vrot.slane %v910, 2
      %v912 = vsel %vm756, %v418, %v725
      %v913 = vsel %vm749, %v726, %v912
      %v914 = vrot.slane %v913, 4
      %v915 = vsel %vm529, %v725, %v418
      %v916 = vsel %vm753, %v726, %v915
      %v917 = vrot.slane %v916, 6
      %v918 = vsel %vm747, %v419, %v727
      %v919 = vsel %vm749, %v918, %v728
      %v920 = vsel %vm747, %v420, %v729
      %v921 = vsel %vm749, %v920, %v730
      %v922 = vsel %vm751, %v420, %v729
      %v923 = vsel %vm753, %v922, %v730
      %v924 = vrot.slane %v923, 2
      %v925 = vsel %vm756, %v420, %v729
      %v926 = vsel %vm749, %v730, %v925
      %v927 = vrot.slane %v926, 4
      %v928 = vsel %vm529, %v729, %v420
      %v929 = vsel %vm753, %v730, %v928
      %v930 = vrot.slane %v929, 6
      %v931 = vsel %vm747, %v421, %v731
      %v932 = vsel %vm749, %v931, %v732
      %v933 = vsel %vm751, %v421, %v731
      %v934 = vsel %vm753, %v933, %v732
      %v935 = vrot.slane %v934, 2
      %v936 = vsel %vm756, %v421, %v731
      %v937 = vsel %vm749, %v732, %v936
      %v938 = vrot.slane %v937, 4
      %v939 = vsel %vm529, %v731, %v421
      %v940 = vsel %vm753, %v732, %v939
      %v941 = vrot.slane %v940, 6
      %v942 = vsel %vm747, %v422, %v733
      %v943 = vsel %vm749, %v942, %v734
      %v944 = vsel %vm747, %v423, %v735
      %v945 = vsel %vm749, %v944, %v736
      %v946 = vsel %vm751, %v423, %v735
      %v947 = vsel %vm753, %v946, %v736
      %v948 = vrot.slane %v947, 2
      %v949 = vsel %vm756, %v423, %v735
      %v950 = vsel %vm749, %v736, %v949
      %v951 = vrot.slane %v950, 4
      %v952 = vsel %vm529, %v735, %v423
      %v953 = vsel %vm753, %v736, %v952
      %v954 = vrot.slane %v953, 6
      %v955 = vsel %vm747, %v424, %v737
      %v956 = vsel %vm749, %v955, %v738
      %v957 = vsel %vm751, %v424, %v737
      %v958 = vsel %vm753, %v957, %v738
      %v959 = vrot.slane %v958, 2
      %v960 = vsel %vm756, %v424, %v737
      %v961 = vsel %vm749, %v738, %v960
      %v962 = vrot.slane %v961, 4
      %v963 = vsel %vm529, %v737, %v424
      %v964 = vsel %vm753, %v738, %v963
      %v965 = vrot.slane %v964, 6
      %v966 = vsel %vm747, %v425, %v739
      %v967 = vsel %vm749, %v966, %v740
      %v968 = vsel %vm747, %v426, %v741
      %v969 = vsel %vm749, %v968, %v742
      %v970 = vsel %vm751, %v426, %v741
      %v971 = vsel %vm753, %v970, %v742
      %v972 = vrot.slane %v971, 2
      %v973 = vsel %vm756, %v426, %v741
      %v974 = vsel %vm749, %v742, %v973
      %v975 = vrot.slane %v974, 4
      %v976 = vsel %vm529, %v741, %v426
      %v977 = vsel %vm753, %v742, %v976
      %v978 = vrot.slane %v977, 6
      %v979 = vsel %vm747, %v427, %v743
      %v980 = vsel %vm749, %v979, %v744
      %v981 = vsel %vm751, %v427, %v743
      %v982 = vsel %vm753, %v981, %v744
      %v983 = vrot.slane %v982, 2
      %v984 = vsel %vm756, %v427, %v743
      %v985 = vsel %vm749, %v744, %v984
      %v986 = vrot.slane %v985, 4
      %v987 = vsel %vm529, %v743, %v427
      %v988 = vsel %vm753, %v744, %v987
      %v989 = vrot.slane %v988, 6
      %v990 = vsel %vm747, %v428, %v745
      %v991 = vsel %vm749, %v990, %v746
      %992 = vst [vmem:[#allocation1] ss:$4 sm:$0xff] %v750
      %s993 = scalar_lea.vmem [#allocation1], 1
      %994 = vst [vmem:[%s993] ss:$4 sm:$0xff] %v755
      %s995 = scalar_lea.vmem [#allocation1], 2
      %996 = vst [vmem:[%s995] ss:$4 sm:$0xff] %v759
      %s997 = scalar_lea.vmem [#allocation1], 3
      %998 = vst [vmem:[%s997] ss:$4 sm:$0xff] %v762
      %s999 = scalar_lea.vmem [#allocation1], 32
      %1000 = vst [vmem:[%s999] ss:$4 sm:$0xff] %v764
      %s1001 = scalar_lea.vmem [#allocation1], 33
      %1002 = vst [vmem:[%s1001] ss:$4 sm:$0xff] %v767
      %s1003 = scalar_lea.vmem [#allocation1], 34
      %1004 = vst [vmem:[%s1003] ss:$4 sm:$0xff] %v770
      %s1005 = scalar_lea.vmem [#allocation1], 35
      %1006 = vst [vmem:[%s1005] ss:$4 sm:$0xff] %v773
      %v1007 = vld.sshfl [vmem:[#allocation1] sm:$0xff pattern:$0x73625140]
      %v1008 = vld.sshfl [vmem:[#allocation1 + $0x8] sm:$0xff pattern:$0x73625140]
      %v1009 = vld.sshfl [vmem:[#allocation1 + $0x10] sm:$0xff pattern:$0x73625140]
      %v1010 = vld.sshfl [vmem:[#allocation1 + $0x20] sm:$0xff pattern:$0x73625140]
      %v1011 = vld.sshfl [vmem:[#allocation1 + $0x28] sm:$0xff pattern:$0x73625140]
      %v1012 = vld.sshfl [vmem:[#allocation1 + $0x30] sm:$0xff pattern:$0x73625140]
      %1013 = vst [vmem:[#allocation1] ss:$4 sm:$0xff] %v775
      %1014 = vst [vmem:[%s993] ss:$4 sm:$0xff] %v777
      %1015 = vst [vmem:[%s995] ss:$4 sm:$0xff] %v780
      %1016 = vst [vmem:[%s997] ss:$4 sm:$0xff] %v783
      %1017 = vst [vmem:[%s999] ss:$4 sm:$0xff] %v786
      %1018 = vst [vmem:[%s1001] ss:$4 sm:$0xff] %v788
      %1019 = vst [vmem:[%s1003] ss:$4 sm:$0xff] %v791
      %1020 = vst [vmem:[%s1005] ss:$4 sm:$0xff] %v794
      %v1021 = vld.sshfl [vmem:[#allocation1] sm:$0xff pattern:$0x73625140]
      %v1022 = vld.sshfl [vmem:[#allocation1 + $0x8] sm:$0xff pattern:$0x73625140]
      %v1023 = vld.sshfl [vmem:[#allocation1 + $0x10] sm:$0xff pattern:$0x73625140]
      %v1024 = vld.sshfl [vmem:[#allocation1 + $0x20] sm:$0xff pattern:$0x73625140]
      %v1025 = vld.sshfl [vmem:[#allocation1 + $0x28] sm:$0xff pattern:$0x73625140]
      %v1026 = vld.sshfl [vmem:[#allocation1 + $0x30] sm:$0xff pattern:$0x73625140]
      %1027 = vst [vmem:[#allocation1] ss:$4 sm:$0xff] %v797
      %1028 = vst [vmem:[%s993] ss:$4 sm:$0xff] %v799
      %1029 = vst [vmem:[%s995] ss:$4 sm:$0xff] %v801
      %1030 = vst [vmem:[%s997] ss:$4 sm:$0xff] %v804
      %1031 = vst [vmem:[%s999] ss:$4 sm:$0xff] %v807
      %1032 = vst [vmem:[%s1001] ss:$4 sm:$0xff] %v810
      %1033 = vst [vmem:[%s1003] ss:$4 sm:$0xff] %v812
      %1034 = vst [vmem:[%s1005] ss:$4 sm:$0xff] %v815
      %v1035 = vld.sshfl [vmem:[#allocation1] sm:$0xff pattern:$0x73625140]
      %v1036 = vld.sshfl [vmem:[#allocation1 + $0x8] sm:$0xff pattern:$0x73625140]
      %v1037 = vld.sshfl [vmem:[#allocation1 + $0x10] sm:$0xff pattern:$0x73625140]
      %v1038 = vld.sshfl [vmem:[#allocation1 + $0x20] sm:$0xff pattern:$0x73625140]
      %v1039 = vld.sshfl [vmem:[#allocation1 + $0x28] sm:$0xff pattern:$0x73625140]
      %v1040 = vld.sshfl [vmem:[#allocation1 + $0x30] sm:$0xff pattern:$0x73625140]
      %1041 = vst [vmem:[#allocation1] ss:$4 sm:$0xff] %v818
      %1042 = vst [vmem:[%s993] ss:$4 sm:$0xff] %v821
      %1043 = vst [vmem:[%s995] ss:$4 sm:$0xff] %v823
      %1044 = vst [vmem:[%s997] ss:$4 sm:$0xff] %v825
      %1045 = vst [vmem:[%s999] ss:$4 sm:$0xff] %v828
      %1046 = vst [vmem:[%s1001] ss:$4 sm:$0xff] %v831
      %1047 = vst [vmem:[%s1003] ss:$4 sm:$0xff] %v834
      %1048 = vst [vmem:[%s1005] ss:$4 sm:$0xff] %v836
      %v1049 = vld.sshfl [vmem:[#allocation1] sm:$0xff pattern:$0x73625140]
      %v1050 = vld.sshfl [vmem:[#allocation1 + $0x8] sm:$0xff pattern:$0x73625140]
      %v1051 = vld.sshfl [vmem:[#allocation1 + $0x10] sm:$0xff pattern:$0x73625140]
      %v1052 = vld.sshfl [vmem:[#allocation1 + $0x20] sm:$0xff pattern:$0x73625140]
      %v1053 = vld.sshfl [vmem:[#allocation1 + $0x28] sm:$0xff pattern:$0x73625140]
      %v1054 = vld.sshfl [vmem:[#allocation1 + $0x30] sm:$0xff pattern:$0x73625140]
      %1055 = vst [vmem:[#allocation1] ss:$4 sm:$0xff] %v839
      %1056 = vst [vmem:[%s993] ss:$4 sm:$0xff] %v842
      %1057 = vst [vmem:[%s995] ss:$4 sm:$0xff] %v845
      %1058 = vst [vmem:[%s997] ss:$4 sm:$0xff] %v847
      %1059 = vst [vmem:[%s999] ss:$4 sm:$0xff] %v849
      %1060 = vst [vmem:[%s1001] ss:$4 sm:$0xff] %v852
      %1061 = vst [vmem:[%s1003] ss:$4 sm:$0xff] %v855
      %1062 = vst [vmem:[%s1005] ss:$4 sm:$0xff] %v858
      %v1063 = vld.sshfl [vmem:[#allocation1] sm:$0xff pattern:$0x73625140]
      %v1064 = vld.sshfl [vmem:[#allocation1 + $0x8] sm:$0xff pattern:$0x73625140]
      %v1065 = vld.sshfl [vmem:[#allocation1 + $0x10] sm:$0xff pattern:$0x73625140]
      %v1066 = vld.sshfl [vmem:[#allocation1 + $0x20] sm:$0xff pattern:$0x73625140]
      %v1067 = vld.sshfl [vmem:[#allocation1 + $0x28] sm:$0xff pattern:$0x73625140]
      %v1068 = vld.sshfl [vmem:[#allocation1 + $0x30] sm:$0xff pattern:$0x73625140]
      %1069 = vst [vmem:[#allocation1] ss:$4 sm:$0xff] %v860
      %1070 = vst [vmem:[%s993] ss:$4 sm:$0xff] %v863
      %1071 = vst [vmem:[%s995] ss:$4 sm:$0xff] %v866
      %1072 = vst [vmem:[%s997] ss:$4 sm:$0xff] %v869
      %1073 = vst [vmem:[%s999] ss:$4 sm:$0xff] %v871
      %1074 = vst [vmem:[%s1001] ss:$4 sm:$0xff] %v873
      %1075 = vst [vmem:[%s1003] ss:$4 sm:$0xff] %v876
      %1076 = vst [vmem:[%s1005] ss:$4 sm:$0xff] %v879
      %v1077 = vld.sshfl [vmem:[#allocation1] sm:$0xff pattern:$0x73625140]
      %v1078 = vld.sshfl [vmem:[#allocation1 + $0x8] sm:$0xff pattern:$0x73625140]
      %v1079 = vld.sshfl [vmem:[#allocation1 + $0x10] sm:$0xff pattern:$0x73625140]
      %v1080 = vld.sshfl [vmem:[#allocation1 + $0x20] sm:$0xff pattern:$0x73625140]
      %v1081 = vld.sshfl [vmem:[#allocation1 + $0x28] sm:$0xff pattern:$0x73625140]
      %v1082 = vld.sshfl [vmem:[#allocation1 + $0x30] sm:$0xff pattern:$0x73625140]
      %1083 = vst [vmem:[#allocation1] ss:$4 sm:$0xff] %v882
      %1084 = vst [vmem:[%s993] ss:$4 sm:$0xff] %v884
      %1085 = vst [vmem:[%s995] ss:$4 sm:$0xff] %v887
      %1086 = vst [vmem:[%s997] ss:$4 sm:$0xff] %v890
      %1087 = vst [vmem:[%s999] ss:$4 sm:$0xff] %v893
      %1088 = vst [vmem:[%s1001] ss:$4 sm:$0xff] %v895
      %1089 = vst [vmem:[%s1003] ss:$4 sm:$0xff] %v897
      %1090 = vst [vmem:[%s1005] ss:$4 sm:$0xff] %v900
      %v1091 = vld.sshfl [vmem:[#allocation1] sm:$0xff pattern:$0x73625140]
      %v1092 = vld.sshfl [vmem:[#allocation1 + $0x8] sm:$0xff pattern:$0x73625140]
      %v1093 = vld.sshfl [vmem:[#allocation1 + $0x10] sm:$0xff pattern:$0x73625140]
      %v1094 = vld.sshfl [vmem:[#allocation1 + $0x20] sm:$0xff pattern:$0x73625140]
      %v1095 = vld.sshfl [vmem:[#allocation1 + $0x28] sm:$0xff pattern:$0x73625140]
      %v1096 = vld.sshfl [vmem:[#allocation1 + $0x30] sm:$0xff pattern:$0x73625140]
      %1097 = vst [vmem:[#allocation1] ss:$4 sm:$0xff] %v903
      %1098 = vst [vmem:[%s993] ss:$4 sm:$0xff] %v906
      %1099 = vst [vmem:[%s995] ss:$4 sm:$0xff] %v908
      %1100 = vst [vmem:[%s997] ss:$4 sm:$0xff] %v911
      %1101 = vst [vmem:[%s999] ss:$4 sm:$0xff] %v914
      %1102 = vst [vmem:[%s1001] ss:$4 sm:$0xff] %v917
      %1103 = vst [vmem:[%s1003] ss:$4 sm:$0xff] %v919
      %1104 = vst [vmem:[%s1005] ss:$4 sm:$0xff] %v921
      %v1105 = vld.sshfl [vmem:[#allocation1] sm:$0xff pattern:$0x73625140]
      %v1106 = vld.sshfl [vmem:[#allocation1 + $0x8] sm:$0xff pattern:$0x73625140]
      %v1107 = vld.sshfl [vmem:[#allocation1 + $0x10] sm:$0xff pattern:$0x73625140]
      %v1108 = vld.sshfl [vmem:[#allocation1 + $0x20] sm:$0xff pattern:$0x73625140]
      %v1109 = vld.sshfl [vmem:[#allocation1 + $0x28] sm:$0xff pattern:$0x73625140]
      %v1110 = vld.sshfl [vmem:[#allocation1 + $0x30] sm:$0xff pattern:$0x73625140]
      %1111 = vst [vmem:[#allocation1] ss:$4 sm:$0xff] %v924
      %1112 = vst [vmem:[%s993] ss:$4 sm:$0xff] %v927
      %1113 = vst [vmem:[%s995] ss:$4 sm:$0xff] %v930
      %1114 = vst [vmem:[%s997] ss:$4 sm:$0xff] %v932
      %1115 = vst [vmem:[%s999] ss:$4 sm:$0xff] %v935
      %1116 = vst [vmem:[%s1001] ss:$4 sm:$0xff] %v938
      %1117 = vst [vmem:[%s1003] ss:$4 sm:$0xff] %v941
      %1118 = vst [vmem:[%s1005] ss:$4 sm:$0xff] %v943
      %v1119 = vld.sshfl [vmem:[#allocation1] sm:$0xff pattern:$0x73625140]
      %v1120 = vld.sshfl [vmem:[#allocation1 + $0x8] sm:$0xff pattern:$0x73625140]
      %v1121 = vld.sshfl [vmem:[#allocation1 + $0x10] sm:$0xff pattern:$0x73625140]
      %v1122 = vld.sshfl [vmem:[#allocation1 + $0x20] sm:$0xff pattern:$0x73625140]
      %v1123 = vld.sshfl [vmem:[#allocation1 + $0x28] sm:$0xff pattern:$0x73625140]
      %v1124 = vld.sshfl [vmem:[#allocation1 + $0x30] sm:$0xff pattern:$0x73625140]
      %1125 = vst [vmem:[#allocation1] ss:$4 sm:$0xff] %v945
      %1126 = vst [vmem:[%s993] ss:$4 sm:$0xff] %v948
      %1127 = vst [vmem:[%s995] ss:$4 sm:$0xff] %v951
      %1128 = vst [vmem:[%s997] ss:$4 sm:$0xff] %v954
      %1129 = vst [vmem:[%s999] ss:$4 sm:$0xff] %v956
      %1130 = vst [vmem:[%s1001] ss:$4 sm:$0xff] %v959
      %1131 = vst [vmem:[%s1003] ss:$4 sm:$0xff] %v962
      %1132 = vst [vmem:[%s1005] ss:$4 sm:$0xff] %v965
      %v1133 = vld.sshfl [vmem:[#allocation1] sm:$0xff pattern:$0x73625140]
      %v1134 = vld.sshfl [vmem:[#allocation1 + $0x8] sm:$0xff pattern:$0x73625140]
      %v1135 = vld.sshfl [vmem:[#allocation1 + $0x10] sm:$0xff pattern:$0x73625140]
      %v1136 = vld.sshfl [vmem:[#allocation1 + $0x20] sm:$0xff pattern:$0x73625140]
      %v1137 = vld.sshfl [vmem:[#allocation1 + $0x28] sm:$0xff pattern:$0x73625140]
      %v1138 = vld.sshfl [vmem:[#allocation1 + $0x30] sm:$0xff pattern:$0x73625140]
      %1139 = vst [vmem:[#allocation1] ss:$4 sm:$0xff] %v967
      %1140 = vst [vmem:[%s993] ss:$4 sm:$0xff] %v969
      %1141 = vst [vmem:[%s995] ss:$4 sm:$0xff] %v972
      %1142 = vst [vmem:[%s997] ss:$4 sm:$0xff] %v975
      %1143 = vst [vmem:[%s999] ss:$4 sm:$0xff] %v978
      %1144 = vst [vmem:[%s1001] ss:$4 sm:$0xff] %v980
      %1145 = vst [vmem:[%s1003] ss:$4 sm:$0xff] %v983
      %1146 = vst [vmem:[%s1005] ss:$4 sm:$0xff] %v986
      %v1147 = vld.sshfl [vmem:[#allocation1] sm:$0xff pattern:$0x73625140]
      %v1148 = vld.sshfl [vmem:[#allocation1 + $0x8] sm:$0xff pattern:$0x73625140]
      %v1149 = vld.sshfl [vmem:[#allocation1 + $0x10] sm:$0xff pattern:$0x73625140]
      %v1150 = vld.sshfl [vmem:[#allocation1 + $0x20] sm:$0xff pattern:$0x73625140]
      %v1151 = vld.sshfl [vmem:[#allocation1 + $0x28] sm:$0xff pattern:$0x73625140]
      %v1152 = vld.sshfl [vmem:[#allocation1 + $0x30] sm:$0xff pattern:$0x73625140]
      %1153 = vst [vmem:[#allocation1] ss:$4 sm:$0xff] %v989
      %1154 = vst [vmem:[%s993] ss:$4 sm:$0xff] %v991
      %v1155 = vld.sshfl [vmem:[#allocation1] sm:$0xff pattern:$0x73625140]
      %v1156 = vld.sshfl [vmem:[#allocation1 + $0x8] sm:$0xff pattern:$0x73625140]
      %v1157 = vld.sshfl [vmem:[#allocation1 + $0x10] sm:$0xff pattern:$0x73625140]
      %1227 = vmatpush.msra.mxu0 %v654
      %1228 = vmatpush.msra.mxu0 %v653
      %1229 = vmatpush.msra.mxu0 %v652
      %1230 = vmatpush.msra.mxu0 %v651
      %1231 = vmatpush.msra.mxu0 %v650
      %1232 = vmatpush.msra.mxu0 %v649
      %1233 = vmatpush.msra.mxu0 %v648
      %1234 = vmatpush.msra.mxu0 %v647
      %1235 = vmatpush.msra.mxu0 %v646
      %1236 = vmatpush.msra.mxu0 %v645
      %1237 = vmatpush.msra.mxu0 %v644
      %1238 = vmatpush.msra.mxu0 %v643
      %1239 = vmatpush.msra.mxu0 %v642
      %1240 = vmatpush.msra.mxu0 %v641
      %1241 = vmatpush.msra.mxu0 %v640
      %1242 = vmatpush.msra.mxu0 %v639
      %1243 = vmatmul.f32.gmra.mxu0 %v1007
      %v1244 = vpop.f32.mrf.mxu0
      %v1245 = vadd.f32 0.0, %v1244
      %1246 = vmatmul.f32.gmra.mxu0 %v1010
      %v1247 = vpop.f32.mrf.mxu0
      %v1248 = vadd.f32 0.0, %v1247
      %1249 = vmatmul.f32.gmra.mxu0 %v1021
      %v1250 = vpop.f32.mrf.mxu0
      %v1251 = vadd.f32 0.0, %v1250
      %1252 = vmatmul.f32.gmra.mxu0 %v1024
      %v1253 = vpop.f32.mrf.mxu0
      %v1254 = vadd.f32 0.0, %v1253
      %1255 = vmatmul.f32.gmra.mxu0 %v1035
      %v1256 = vpop.f32.mrf.mxu0
      %v1257 = vadd.f32 0.0, %v1256
      %1258 = vmatmul.f32.gmra.mxu0 %v1038
      %v1259 = vpop.f32.mrf.mxu0
      %v1260 = vadd.f32 0.0, %v1259
      %1261 = vmatmul.f32.gmra.mxu0 %v1049
      %v1262 = vpop.f32.mrf.mxu0
      %v1263 = vadd.f32 0.0, %v1262
      %1264 = vmatmul.f32.gmra.mxu0 %v1052
      %v1265 = vpop.f32.mrf.mxu0
      %v1266 = vadd.f32 0.0, %v1265
      %1267 = vmatmul.f32.gmra.mxu0 %v1063
      %v1268 = vpop.f32.mrf.mxu0
      %v1269 = vadd.f32 0.0, %v1268
      %1270 = vmatmul.f32.gmra.mxu0 %v1066
      %v1271 = vpop.f32.mrf.mxu0
      %v1272 = vadd.f32 0.0, %v1271
      %1273 = vmatmul.f32.gmra.mxu0 %v1077
      %v1274 = vpop.f32.mrf.mxu0
      %v1275 = vadd.f32 0.0, %v1274
      %1276 = vmatmul.f32.gmra.mxu0 %v1080
      %v1277 = vpop.f32.mrf.mxu0
      %v1278 = vadd.f32 0.0, %v1277
      %1279 = vmatmul.f32.gmra.mxu0 %v1091
      %v1280 = vpop.f32.mrf.mxu0
      %v1281 = vadd.f32 0.0, %v1280
      %1282 = vmatmul.f32.gmra.mxu0 %v1094
      %v1283 = vpop.f32.mrf.mxu0
      %v1284 = vadd.f32 0.0, %v1283
      %1285 = vmatmul.f32.gmra.mxu0 %v1105
      %v1286 = vpop.f32.mrf.mxu0
      %v1287 = vadd.f32 0.0, %v1286
      %1288 = vmatmul.f32.gmra.mxu0 %v1108
      %v1289 = vpop.f32.mrf.mxu0
      %v1290 = vadd.f32 0.0, %v1289
      %1291 = vmatmul.f32.gmra.mxu0 %v1119
      %v1292 = vpop.f32.mrf.mxu0
      %v1293 = vadd.f32 0.0, %v1292
      %1294 = vmatmul.f32.gmra.mxu0 %v1122
      %v1295 = vpop.f32.mrf.mxu0
      %v1296 = vadd.f32 0.0, %v1295
      %1297 = vmatmul.f32.gmra.mxu0 %v1133
      %v1298 = vpop.f32.mrf.mxu0
      %v1299 = vadd.f32 0.0, %v1298
      %1300 = vmatmul.f32.gmra.mxu0 %v1136
      %v1301 = vpop.f32.mrf.mxu0
      %v1302 = vadd.f32 0.0, %v1301
      %1303 = vmatmul.f32.gmra.mxu0 %v1147
      %v1304 = vpop.f32.mrf.mxu0
      %v1305 = vadd.f32 0.0, %v1304
      %1306 = vmatmul.f32.gmra.mxu0 %v1150
      %v1307 = vpop.f32.mrf.mxu0
      %v1308 = vadd.f32 0.0, %v1307
      %1309 = vmatmul.f32.gmra.mxu0 %v1155
      %v1310 = vpop.f32.mrf.mxu0
      %v1311 = vadd.f32 0.0, %v1310
      %1312 = vdwg.mxu0
      %1313 = vmatpush.msra.mxu0 %v670
      %1314 = vmatpush.msra.mxu0 %v669
      %1315 = vmatpush.msra.mxu0 %v668
      %1316 = vmatpush.msra.mxu0 %v667
      %1317 = vmatpush.msra.mxu0 %v666
      %1318 = vmatpush.msra.mxu0 %v665
      %1319 = vmatpush.msra.mxu0 %v664
      %1320 = vmatpush.msra.mxu0 %v663
      %1321 = vmatpush.msra.mxu0 %v662
      %1322 = vmatpush.msra.mxu0 %v661
      %1323 = vmatpush.msra.mxu0 %v660
      %1324 = vmatpush.msra.mxu0 %v659
      %1325 = vmatpush.msra.mxu0 %v658
      %1326 = vmatpush.msra.mxu0 %v657
      %1327 = vmatpush.msra.mxu0 %v656
      %1328 = vmatpush.msra.mxu0 %v655
      %1329 = vmatmul.f32.gmra.mxu0 %v1008
      %v1330 = vpop.f32.mrf.mxu0
      %v1331 = vadd.f32 %v1245, %v1330
      %1332 = vmatmul.f32.gmra.mxu0 %v1011
      %v1333 = vpop.f32.mrf.mxu0
      %v1334 = vadd.f32 %v1248, %v1333
      %1335 = vmatmul.f32.gmra.mxu0 %v1022
      %v1336 = vpop.f32.mrf.mxu0
      %v1337 = vadd.f32 %v1251, %v1336
      %1338 = vmatmul.f32.gmra.mxu0 %v1025
      %v1339 = vpop.f32.mrf.mxu0
      %v1340 = vadd.f32 %v1254, %v1339
      %1341 = vmatmul.f32.gmra.mxu0 %v1036
      %v1342 = vpop.f32.mrf.mxu0
      %v1343 = vadd.f32 %v1257, %v1342
      %1344 = vmatmul.f32.gmra.mxu0 %v1039
      %v1345 = vpop.f32.mrf.mxu0
      %v1346 = vadd.f32 %v1260, %v1345
      %1347 = vmatmul.f32.gmra.mxu0 %v1050
      %v1348 = vpop.f32.mrf.mxu0
      %v1349 = vadd.f32 %v1263, %v1348
      %1350 = vmatmul.f32.gmra.mxu0 %v1053
      %v1351 = vpop.f32.mrf.mxu0
      %v1352 = vadd.f32 %v1266, %v1351
      %1353 = vmatmul.f32.gmra.mxu0 %v1064
      %v1354 = vpop.f32.mrf.mxu0
      %v1355 = vadd.f32 %v1269, %v1354
      %1356 = vmatmul.f32.gmra.mxu0 %v1067
      %v1357 = vpop.f32.mrf.mxu0
      %v1358 = vadd.f32 %v1272, %v1357
      %1359 = vmatmul.f32.gmra.mxu0 %v1078
      %v1360 = vpop.f32.mrf.mxu0
      %v1361 = vadd.f32 %v1275, %v1360
      %1362 = vmatmul.f32.gmra.mxu0 %v1081
      %v1363 = vpop.f32.mrf.mxu0
      %v1364 = vadd.f32 %v1278, %v1363
      %1365 = vmatmul.f32.gmra.mxu0 %v1092
      %v1366 = vpop.f32.mrf.mxu0
      %v1367 = vadd.f32 %v1281, %v1366
      %1368 = vmatmul.f32.gmra.mxu0 %v1095
      %v1369 = vpop.f32.mrf.mxu0
      %v1370 = vadd.f32 %v1284, %v1369
      %1371 = vmatmul.f32.gmra.mxu0 %v1106
      %v1372 = vpop.f32.mrf.mxu0
      %v1373 = vadd.f32 %v1287, %v1372
      %1374 = vmatmul.f32.gmra.mxu0 %v1109
      %v1375 = vpop.f32.mrf.mxu0
      %v1376 = vadd.f32 %v1290, %v1375
      %1377 = vmatmul.f32.gmra.mxu0 %v1120
      %v1378 = vpop.f32.mrf.mxu0
      %v1379 = vadd.f32 %v1293, %v1378
      %1380 = vmatmul.f32.gmra.mxu0 %v1123
      %v1381 = vpop.f32.mrf.mxu0
      %v1382 = vadd.f32 %v1296, %v1381
      %1383 = vmatmul.f32.gmra.mxu0 %v1134
      %v1384 = vpop.f32.mrf.mxu0
      %v1385 = vadd.f32 %v1299, %v1384
      %1386 = vmatmul.f32.gmra.mxu0 %v1137
      %v1387 = vpop.f32.mrf.mxu0
      %v1388 = vadd.f32 %v1302, %v1387
      %1389 = vmatmul.f32.gmra.mxu0 %v1148
      %v1390 = vpop.f32.mrf.mxu0
      %v1391 = vadd.f32 %v1305, %v1390
      %1392 = vmatmul.f32.gmra.mxu0 %v1151
      %v1393 = vpop.f32.mrf.mxu0
      %v1394 = vadd.f32 %v1308, %v1393
      %1395 = vmatmul.f32.gmra.mxu0 %v1156
      %v1396 = vpop.f32.mrf.mxu0
      %v1397 = vadd.f32 %v1311, %v1396
      %1398 = vdwg.mxu0
      %1399 = vmatpush.msra.mxu0 %v686
      %1400 = vmatpush.msra.mxu0 %v685
      %1401 = vmatpush.msra.mxu0 %v684
      %1402 = vmatpush.msra.mxu0 %v683
      %1403 = vmatpush.msra.mxu0 %v682
      %1404 = vmatpush.msra.mxu0 %v681
      %1405 = vmatpush.msra.mxu0 %v680
      %1406 = vmatpush.msra.mxu0 %v679
      %1407 = vmatpush.msra.mxu0 %v678
      %1408 = vmatpush.msra.mxu0 %v677
      %1409 = vmatpush.msra.mxu0 %v676
      %1410 = vmatpush.msra.mxu0 %v675
      %1411 = vmatpush.msra.mxu0 %v674
      %1412 = vmatpush.msra.mxu0 %v673
      %1413 = vmatpush.msra.mxu0 %v672
      %1414 = vmatpush.msra.mxu0 %v671
      %1415 = vmatmul.f32.gmra.mxu0 %v1009
      %v1416 = vpop.f32.mrf.mxu0
      %v1417 = vadd.f32 %v1331, %v1416
      %1418 = vmatmul.f32.gmra.mxu0 %v1012
      %v1419 = vpop.f32.mrf.mxu0
      %v1420 = vadd.f32 %v1334, %v1419
      %1421 = vmatmul.f32.gmra.mxu0 %v1023
      %v1422 = vpop.f32.mrf.mxu0
      %v1423 = vadd.f32 %v1337, %v1422
      %1424 = vmatmul.f32.gmra.mxu0 %v1026
      %v1425 = vpop.f32.mrf.mxu0
      %v1426 = vadd.f32 %v1340, %v1425
      %1427 = vmatmul.f32.gmra.mxu0 %v1037
      %v1428 = vpop.f32.mrf.mxu0
      %v1429 = vadd.f32 %v1343, %v1428
      %1430 = vmatmul.f32.gmra.mxu0 %v1040
      %v1431 = vpop.f32.mrf.mxu0
      %v1432 = vadd.f32 %v1346, %v1431
      %1433 = vmatmul.f32.gmra.mxu0 %v1051
      %v1434 = vpop.f32.mrf.mxu0
      %v1435 = vadd.f32 %v1349, %v1434
      %1436 = vmatmul.f32.gmra.mxu0 %v1054
      %v1437 = vpop.f32.mrf.mxu0
      %v1438 = vadd.f32 %v1352, %v1437
      %1439 = vmatmul.f32.gmra.mxu0 %v1065
      %v1440 = vpop.f32.mrf.mxu0
      %v1441 = vadd.f32 %v1355, %v1440
      %1442 = vmatmul.f32.gmra.mxu0 %v1068
      %v1443 = vpop.f32.mrf.mxu0
      %v1444 = vadd.f32 %v1358, %v1443
      %1445 = vmatmul.f32.gmra.mxu0 %v1079
      %v1446 = vpop.f32.mrf.mxu0
      %v1447 = vadd.f32 %v1361, %v1446
      %1448 = vmatmul.f32.gmra.mxu0 %v1082
      %v1449 = vpop.f32.mrf.mxu0
      %v1450 = vadd.f32 %v1364, %v1449
      %1451 = vmatmul.f32.gmra.mxu0 %v1093
      %v1452 = vpop.f32.mrf.mxu0
      %v1453 = vadd.f32 %v1367, %v1452
      %1454 = vmatmul.f32.gmra.mxu0 %v1096
      %v1455 = vpop.f32.mrf.mxu0
      %v1456 = vadd.f32 %v1370, %v1455
      %1457 = vmatmul.f32.gmra.mxu0 %v1107
      %v1458 = vpop.f32.mrf.mxu0
      %v1459 = vadd.f32 %v1373, %v1458
      %1460 = vmatmul.f32.gmra.mxu0 %v1110
      %v1461 = vpop.f32.mrf.mxu0
      %v1462 = vadd.f32 %v1376, %v1461
      %1463 = vmatmul.f32.gmra.mxu0 %v1121
      %v1464 = vpop.f32.mrf.mxu0
      %v1465 = vadd.f32 %v1379, %v1464
      %1466 = vmatmul.f32.gmra.mxu0 %v1124
      %v1467 = vpop.f32.mrf.mxu0
      %v1468 = vadd.f32 %v1382, %v1467
      %1469 = vmatmul.f32.gmra.mxu0 %v1135
      %v1470 = vpop.f32.mrf.mxu0
      %v1471 = vadd.f32 %v1385, %v1470
      %1472 = vmatmul.f32.gmra.mxu0 %v1138
      %v1473 = vpop.f32.mrf.mxu0
      %v1474 = vadd.f32 %v1388, %v1473
      %1475 = vmatmul.f32.gmra.mxu0 %v1149
      %v1476 = vpop.f32.mrf.mxu0
      %v1477 = vadd.f32 %v1391, %v1476
      %1478 = vmatmul.f32.gmra.mxu0 %v1152
      %v1479 = vpop.f32.mrf.mxu0
      %v1480 = vadd.f32 %v1394, %v1479
      %1481 = vmatmul.f32.gmra.mxu0 %v1157
      %v1482 = vpop.f32.mrf.mxu0
      %v1483 = vadd.f32 %v1397, %v1482
      %1484 = vdwg.mxu0
      %v1485 = vrot.slane %v471, 6
      %v1486 = vrot.slane %v532, 4
      %v1487 = vrot.slane %v473, 6
      %v1488 = vrot.slane %v534, 4
      %v1489 = vrot.slane %v472, 6
      %v1490 = vrot.slane %v533, 4
      %v1491 = vsel %vm747, %v396, %v1485
      %v1492 = vsel %vm749, %v1491, %v1486
      %v1493 = vsel %vm751, %v396, %v1485
      %v1494 = vsel %vm753, %v1493, %v1486
      %v1495 = vrot.slane %v1494, 2
      %v1496 = vsel %vm756, %v396, %v1485
      %v1497 = vsel %vm749, %v1486, %v1496
      %v1498 = vrot.slane %v1497, 4
      %v1499 = vsel %vm529, %v1485, %v396
      %v1500 = vsel %vm753, %v1486, %v1499
      %v1501 = vrot.slane %v1500, 6
      %v1502 = vsel %vm747, %v397, %v1487
      %v1503 = vsel %vm749, %v1502, %v1488
      %v1504 = vsel %vm751, %v397, %v1487
      %v1505 = vsel %vm753, %v1504, %v1488
      %v1506 = vrot.slane %v1505, 2
      %v1507 = vsel %vm756, %v397, %v1487
      %v1508 = vsel %vm749, %v1488, %v1507
      %v1509 = vrot.slane %v1508, 4
      %v1510 = vsel %vm529, %v1487, %v397
      %v1511 = vsel %vm753, %v1488, %v1510
      %v1512 = vrot.slane %v1511, 6
      %v1513 = vsel %vm747, %v398, %v1489
      %v1514 = vsel %vm749, %v1513, %v1490
      %1515 = vst [vmem:[#allocation1] ss:$4 sm:$0xff] %v1492
      %s1516 = scalar_lea.vmem [#allocation1], 1
      %1517 = vst [vmem:[%s1516] ss:$4 sm:$0xff] %v1495
      %s1518 = scalar_lea.vmem [#allocation1], 2
      %1519 = vst [vmem:[%s1518] ss:$4 sm:$0xff] %v1498
      %s1520 = scalar_lea.vmem [#allocation1], 3
      %1521 = vst [vmem:[%s1520] ss:$4 sm:$0xff] %v1501
      %s1522 = scalar_lea.vmem [#allocation1], 32
      %1523 = vst [vmem:[%s1522] ss:$4 sm:$0xff] %v1503
      %s1524 = scalar_lea.vmem [#allocation1], 33
      %1525 = vst [vmem:[%s1524] ss:$4 sm:$0xff] %v1506
      %s1526 = scalar_lea.vmem [#allocation1], 34
      %1527 = vst [vmem:[%s1526] ss:$4 sm:$0xff] %v1509
      %s1528 = scalar_lea.vmem [#allocation1], 35
      %1529 = vst [vmem:[%s1528] ss:$4 sm:$0xff] %v1512
      %v1530 = vld.sshfl [vmem:[#allocation1] sm:$0xff pattern:$0x73625140]
      %v1531 = vld.sshfl [vmem:[#allocation1 + $0x8] sm:$0xff pattern:$0x73625140]
      %v1532 = vld.sshfl [vmem:[#allocation1 + $0x10] sm:$0xff pattern:$0x73625140]
      %v1533 = vld.sshfl [vmem:[#allocation1 + $0x20] sm:$0xff pattern:$0x73625140]
      %v1534 = vld.sshfl [vmem:[#allocation1 + $0x28] sm:$0xff pattern:$0x73625140]
      %v1535 = vld.sshfl [vmem:[#allocation1 + $0x30] sm:$0xff pattern:$0x73625140]
      %1536 = vst [vmem:[#allocation1] ss:$4 sm:$0xff] %v1514
      %1537 = vst [vmem:[%s1516] ss:$4 sm:$0xff] %v750
      %1538 = vst [vmem:[%s1518] ss:$4 sm:$0xff] %v755
      %1539 = vst [vmem:[%s1520] ss:$4 sm:$0xff] %v759
      %1540 = vst [vmem:[%s1522] ss:$4 sm:$0xff] %v762
      %1541 = vst [vmem:[%s1524] ss:$4 sm:$0xff] %v764
      %1542 = vst [vmem:[%s1526] ss:$4 sm:$0xff] %v767
      %1543 = vst [vmem:[%s1528] ss:$4 sm:$0xff] %v770
      %v1544 = vld.sshfl [vmem:[#allocation1] sm:$0xff pattern:$0x73625140]
      %v1545 = vld.sshfl [vmem:[#allocation1 + $0x8] sm:$0xff pattern:$0x73625140]
      %v1546 = vld.sshfl [vmem:[#allocation1 + $0x10] sm:$0xff pattern:$0x73625140]
      %v1547 = vld.sshfl [vmem:[#allocation1 + $0x20] sm:$0xff pattern:$0x73625140]
      %v1548 = vld.sshfl [vmem:[#allocation1 + $0x28] sm:$0xff pattern:$0x73625140]
      %v1549 = vld.sshfl [vmem:[#allocation1 + $0x30] sm:$0xff pattern:$0x73625140]
      %1550 = vst [vmem:[#allocation1] ss:$4 sm:$0xff] %v773
      %1551 = vst [vmem:[%s1516] ss:$4 sm:$0xff] %v775
      %1552 = vst [vmem:[%s1518] ss:$4 sm:$0xff] %v777
      %1553 = vst [vmem:[%s1520] ss:$4 sm:$0xff] %v780
      %1554 = vst [vmem:[%s1522] ss:$4 sm:$0xff] %v783
      %1555 = vst [vmem:[%s1524] ss:$4 sm:$0xff] %v786
      %1556 = vst [vmem:[%s1526] ss:$4 sm:$0xff] %v788
      %1557 = vst [vmem:[%s1528] ss:$4 sm:$0xff] %v791
      %v1558 = vld.sshfl [vmem:[#allocation1] sm:$0xff pattern:$0x73625140]
      %v1559 = vld.sshfl [vmem:[#allocation1 + $0x8] sm:$0xff pattern:$0x73625140]
      %v1560 = vld.sshfl [vmem:[#allocation1 + $0x10] sm:$0xff pattern:$0x73625140]
      %v1561 = vld.sshfl [vmem:[#allocation1 + $0x20] sm:$0xff pattern:$0x73625140]
      %v1562 = vld.sshfl [vmem:[#allocation1 + $0x28] sm:$0xff pattern:$0x73625140]
      %v1563 = vld.sshfl [vmem:[#allocation1 + $0x30] sm:$0xff pattern:$0x73625140]
      %1564 = vst [vmem:[#allocation1] ss:$4 sm:$0xff] %v794
      %1565 = vst [vmem:[%s1516] ss:$4 sm:$0xff] %v797
      %1566 = vst [vmem:[%s1518] ss:$4 sm:$0xff] %v799
      %1567 = vst [vmem:[%s1520] ss:$4 sm:$0xff] %v801
      %1568 = vst [vmem:[%s1522] ss:$4 sm:$0xff] %v804
      %1569 = vst [vmem:[%s1524] ss:$4 sm:$0xff] %v807
      %1570 = vst [vmem:[%s1526] ss:$4 sm:$0xff] %v810
      %1571 = vst [vmem:[%s1528] ss:$4 sm:$0xff] %v812
      %v1572 = vld.sshfl [vmem:[#allocation1] sm:$0xff pattern:$0x73625140]
      %v1573 = vld.sshfl [vmem:[#allocation1 + $0x8] sm:$0xff pattern:$0x73625140]
      %v1574 = vld.sshfl [vmem:[#allocation1 + $0x10] sm:$0xff pattern:$0x73625140]
      %v1575 = vld.sshfl [vmem:[#allocation1 + $0x20] sm:$0xff pattern:$0x73625140]
      %v1576 = vld.sshfl [vmem:[#allocation1 + $0x28] sm:$0xff pattern:$0x73625140]
      %v1577 = vld.sshfl [vmem:[#allocation1 + $0x30] sm:$0xff pattern:$0x73625140]
      %1578 = vst [vmem:[#allocation1] ss:$4 sm:$0xff] %v815
      %1579 = vst [vmem:[%s1516] ss:$4 sm:$0xff] %v818
      %1580 = vst [vmem:[%s1518] ss:$4 sm:$0xff] %v821
      %1581 = vst [vmem:[%s1520] ss:$4 sm:$0xff] %v823
      %1582 = vst [vmem:[%s1522] ss:$4 sm:$0xff] %v825
      %1583 = vst [vmem:[%s1524] ss:$4 sm:$0xff] %v828
      %1584 = vst [vmem:[%s1526] ss:$4 sm:$0xff] %v831
      %1585 = vst [vmem:[%s1528] ss:$4 sm:$0xff] %v834
      %v1586 = vld.sshfl [vmem:[#allocation1] sm:$0xff pattern:$0x73625140]
      %v1587 = vld.sshfl [vmem:[#allocation1 + $0x8] sm:$0xff pattern:$0x73625140]
      %v1588 = vld.sshfl [vmem:[#allocation1 + $0x10] sm:$0xff pattern:$0x73625140]
      %v1589 = vld.sshfl [vmem:[#allocation1 + $0x20] sm:$0xff pattern:$0x73625140]
      %v1590 = vld.sshfl [vmem:[#allocation1 + $0x28] sm:$0xff pattern:$0x73625140]
      %v1591 = vld.sshfl [vmem:[#allocation1 + $0x30] sm:$0xff pattern:$0x73625140]
      %1592 = vst [vmem:[#allocation1] ss:$4 sm:$0xff] %v836
      %1593 = vst [vmem:[%s1516] ss:$4 sm:$0xff] %v839
      %1594 = vst [vmem:[%s1518] ss:$4 sm:$0xff] %v842
      %1595 = vst [vmem:[%s1520] ss:$4 sm:$0xff] %v845
      %1596 = vst [vmem:[%s1522] ss:$4 sm:$0xff] %v847
      %1597 = vst [vmem:[%s1524] ss:$4 sm:$0xff] %v849
      %1598 = vst [vmem:[%s1526] ss:$4 sm:$0xff] %v852
      %1599 = vst [vmem:[%s1528] ss:$4 sm:$0xff] %v855
      %v1600 = vld.sshfl [vmem:[#allocation1] sm:$0xff pattern:$0x73625140]
      %v1601 = vld.sshfl [vmem:[#allocation1 + $0x8] sm:$0xff pattern:$0x73625140]
      %v1602 = vld.sshfl [vmem:[#allocation1 + $0x10] sm:$0xff pattern:$0x73625140]
      %v1603 = vld.sshfl [vmem:[#allocation1 + $0x20] sm:$0xff pattern:$0x73625140]
      %v1604 = vld.sshfl [vmem:[#allocation1 + $0x28] sm:$0xff pattern:$0x73625140]
      %v1605 = vld.sshfl [vmem:[#allocation1 + $0x30] sm:$0xff pattern:$0x73625140]
      %1606 = vst [vmem:[#allocation1] ss:$4 sm:$0xff] %v858
      %1607 = vst [vmem:[%s1516] ss:$4 sm:$0xff] %v860
      %1608 = vst [vmem:[%s1518] ss:$4 sm:$0xff] %v863
      %1609 = vst [vmem:[%s1520] ss:$4 sm:$0xff] %v866
      %1610 = vst [vmem:[%s1522] ss:$4 sm:$0xff] %v869
      %1611 = vst [vmem:[%s1524] ss:$4 sm:$0xff] %v871
      %1612 = vst [vmem:[%s1526] ss:$4 sm:$0xff] %v873
      %1613 = vst [vmem:[%s1528] ss:$4 sm:$0xff] %v876
      %v1614 = vld.sshfl [vmem:[#allocation1] sm:$0xff pattern:$0x73625140]
      %v1615 = vld.sshfl [vmem:[#allocation1 + $0x8] sm:$0xff pattern:$0x73625140]
      %v1616 = vld.sshfl [vmem:[#allocation1 + $0x10] sm:$0xff pattern:$0x73625140]
      %v1617 = vld.sshfl [vmem:[#allocation1 + $0x20] sm:$0xff pattern:$0x73625140]
      %v1618 = vld.sshfl [vmem:[#allocation1 + $0x28] sm:$0xff pattern:$0x73625140]
      %v1619 = vld.sshfl [vmem:[#allocation1 + $0x30] sm:$0xff pattern:$0x73625140]
      %1620 = vst [vmem:[#allocation1] ss:$4 sm:$0xff] %v879
      %1621 = vst [vmem:[%s1516] ss:$4 sm:$0xff] %v882
      %1622 = vst [vmem:[%s1518] ss:$4 sm:$0xff] %v884
      %1623 = vst [vmem:[%s1520] ss:$4 sm:$0xff] %v887
      %1624 = vst [vmem:[%s1522] ss:$4 sm:$0xff] %v890
      %1625 = vst [vmem:[%s1524] ss:$4 sm:$0xff] %v893
      %1626 = vst [vmem:[%s1526] ss:$4 sm:$0xff] %v895
      %1627 = vst [vmem:[%s1528] ss:$4 sm:$0xff] %v897
      %v1628 = vld.sshfl [vmem:[#allocation1] sm:$0xff pattern:$0x73625140]
      %v1629 = vld.sshfl [vmem:[#allocation1 + $0x8] sm:$0xff pattern:$0x73625140]
      %v1630 = vld.sshfl [vmem:[#allocation1 + $0x10] sm:$0xff pattern:$0x73625140]
      %v1631 = vld.sshfl [vmem:[#allocation1 + $0x20] sm:$0xff pattern:$0x73625140]
      %v1632 = vld.sshfl [vmem:[#allocation1 + $0x28] sm:$0xff pattern:$0x73625140]
      %v1633 = vld.sshfl [vmem:[#allocation1 + $0x30] sm:$0xff pattern:$0x73625140]
      %1634 = vst [vmem:[#allocation1] ss:$4 sm:$0xff] %v900
      %1635 = vst [vmem:[%s1516] ss:$4 sm:$0xff] %v903
      %1636 = vst [vmem:[%s1518] ss:$4 sm:$0xff] %v906
      %1637 = vst [vmem:[%s1520] ss:$4 sm:$0xff] %v908
      %1638 = vst [vmem:[%s1522] ss:$4 sm:$0xff] %v911
      %1639 = vst [vmem:[%s1524] ss:$4 sm:$0xff] %v914
      %1640 = vst [vmem:[%s1526] ss:$4 sm:$0xff] %v917
      %1641 = vst [vmem:[%s1528] ss:$4 sm:$0xff] %v919
      %v1642 = vld.sshfl [vmem:[#allocation1] sm:$0xff pattern:$0x73625140]
      %v1643 = vld.sshfl [vmem:[#allocation1 + $0x8] sm:$0xff pattern:$0x73625140]
      %v1644 = vld.sshfl [vmem:[#allocation1 + $0x10] sm:$0xff pattern:$0x73625140]
      %v1645 = vld.sshfl [vmem:[#allocation1 + $0x20] sm:$0xff pattern:$0x73625140]
      %v1646 = vld.sshfl [vmem:[#allocation1 + $0x28] sm:$0xff pattern:$0x73625140]
      %v1647 = vld.sshfl [vmem:[#allocation1 + $0x30] sm:$0xff pattern:$0x73625140]
      %1648 = vst [vmem:[#allocation1] ss:$4 sm:$0xff] %v921
      %1649 = vst [vmem:[%s1516] ss:$4 sm:$0xff] %v924
      %1650 = vst [vmem:[%s1518] ss:$4 sm:$0xff] %v927
      %1651 = vst [vmem:[%s1520] ss:$4 sm:$0xff] %v930
      %1652 = vst [vmem:[%s1522] ss:$4 sm:$0xff] %v932
      %1653 = vst [vmem:[%s1524] ss:$4 sm:$0xff] %v935
      %1654 = vst [vmem:[%s1526] ss:$4 sm:$0xff] %v938
      %1655 = vst [vmem:[%s1528] ss:$4 sm:$0xff] %v941
      %v1656 = vld.sshfl [vmem:[#allocation1] sm:$0xff pattern:$0x73625140]
      %v1657 = vld.sshfl [vmem:[#allocation1 + $0x8] sm:$0xff pattern:$0x73625140]
      %v1658 = vld.sshfl [vmem:[#allocation1 + $0x10] sm:$0xff pattern:$0x73625140]
      %v1659 = vld.sshfl [vmem:[#allocation1 + $0x20] sm:$0xff pattern:$0x73625140]
      %v1660 = vld.sshfl [vmem:[#allocation1 + $0x28] sm:$0xff pattern:$0x73625140]
      %v1661 = vld.sshfl [vmem:[#allocation1 + $0x30] sm:$0xff pattern:$0x73625140]
      %1662 = vst [vmem:[#allocation1] ss:$4 sm:$0xff] %v943
      %1663 = vst [vmem:[%s1516] ss:$4 sm:$0xff] %v945
      %1664 = vst [vmem:[%s1518] ss:$4 sm:$0xff] %v948
      %1665 = vst [vmem:[%s1520] ss:$4 sm:$0xff] %v951
      %1666 = vst [vmem:[%s1522] ss:$4 sm:$0xff] %v954
      %1667 = vst [vmem:[%s1524] ss:$4 sm:$0xff] %v956
      %1668 = vst [vmem:[%s1526] ss:$4 sm:$0xff] %v959
      %1669 = vst [vmem:[%s1528] ss:$4 sm:$0xff] %v962
      %v1670 = vld.sshfl [vmem:[#allocation1] sm:$0xff pattern:$0x73625140]
      %v1671 = vld.sshfl [vmem:[#allocation1 + $0x8] sm:$0xff pattern:$0x73625140]
      %v1672 = vld.sshfl [vmem:[#allocation1 + $0x10] sm:$0xff pattern:$0x73625140]
      %v1673 = vld.sshfl [vmem:[#allocation1 + $0x20] sm:$0xff pattern:$0x73625140]
      %v1674 = vld.sshfl [vmem:[#allocation1 + $0x28] sm:$0xff pattern:$0x73625140]
      %v1675 = vld.sshfl [vmem:[#allocation1 + $0x30] sm:$0xff pattern:$0x73625140]
      %1676 = vst [vmem:[#allocation1] ss:$4 sm:$0xff] %v965
      %1677 = vst [vmem:[%s1516] ss:$4 sm:$0xff] %v967
      %v1678 = vld.sshfl [vmem:[#allocation1] sm:$0xff pattern:$0x73625140]
      %v1679 = vld.sshfl [vmem:[#allocation1 + $0x8] sm:$0xff pattern:$0x73625140]
      %v1680 = vld.sshfl [vmem:[#allocation1 + $0x10] sm:$0xff pattern:$0x73625140]
      %1750 = vmatpush.msra.mxu0 %v605
      %1751 = vmatpush.msra.mxu0 %v604
      %1752 = vmatpush.msra.mxu0 %v603
      %1753 = vmatpush.msra.mxu0 %v602
      %1754 = vmatpush.msra.mxu0 %v601
      %1755 = vmatpush.msra.mxu0 %v600
      %1756 = vmatpush.msra.mxu0 %v599
      %1757 = vmatpush.msra.mxu0 %v598
      %1758 = vmatpush.msra.mxu0 %v597
      %1759 = vmatpush.msra.mxu0 %v596
      %1760 = vmatpush.msra.mxu0 %v595
      %1761 = vmatpush.msra.mxu0 %v594
      %1762 = vmatpush.msra.mxu0 %v593
      %1763 = vmatpush.msra.mxu0 %v592
      %1764 = vmatpush.msra.mxu0 %v591
      %1765 = vmatpush.msra.mxu0 %v590
      %1766 = vmatmul.f32.gmra.mxu0 %v1530
      %v1767 = vpop.f32.mrf.mxu0
      %v1768 = vadd.f32 %v1417, %v1767
      %1769 = vmatmul.f32.gmra.mxu0 %v1533
      %v1770 = vpop.f32.mrf.mxu0
      %v1771 = vadd.f32 %v1420, %v1770
      %1772 = vmatmul.f32.gmra.mxu0 %v1544
      %v1773 = vpop.f32.mrf.mxu0
      %v1774 = vadd.f32 %v1423, %v1773
      %1775 = vmatmul.f32.gmra.mxu0 %v1547
      %v1776 = vpop.f32.mrf.mxu0
      %v1777 = vadd.f32 %v1426, %v1776
      %1778 = vmatmul.f32.gmra.mxu0 %v1558
      %v1779 = vpop.f32.mrf.mxu0
      %v1780 = vadd.f32 %v1429, %v1779
      %1781 = vmatmul.f32.gmra.mxu0 %v1561
      %v1782 = vpop.f32.mrf.mxu0
      %v1783 = vadd.f32 %v1432, %v1782
      %1784 = vmatmul.f32.gmra.mxu0 %v1572
      %v1785 = vpop.f32.mrf.mxu0
      %v1786 = vadd.f32 %v1435, %v1785
      %1787 = vmatmul.f32.gmra.mxu0 %v1575
      %v1788 = vpop.f32.mrf.mxu0
      %v1789 = vadd.f32 %v1438, %v1788
      %1790 = vmatmul.f32.gmra.mxu0 %v1586
      %v1791 = vpop.f32.mrf.mxu0
      %v1792 = vadd.f32 %v1441, %v1791
      %1793 = vmatmul.f32.gmra.mxu0 %v1589
      %v1794 = vpop.f32.mrf.mxu0
      %v1795 = vadd.f32 %v1444, %v1794
      %1796 = vmatmul.f32.gmra.mxu0 %v1600
      %v1797 = vpop.f32.mrf.mxu0
      %v1798 = vadd.f32 %v1447, %v1797
      %1799 = vmatmul.f32.gmra.mxu0 %v1603
      %v1800 = vpop.f32.mrf.mxu0
      %v1801 = vadd.f32 %v1450, %v1800
      %1802 = vmatmul.f32.gmra.mxu0 %v1614
      %v1803 = vpop.f32.mrf.mxu0
      %v1804 = vadd.f32 %v1453, %v1803
      %1805 = vmatmul.f32.gmra.mxu0 %v1617
      %v1806 = vpop.f32.mrf.mxu0
      %v1807 = vadd.f32 %v1456, %v1806
      %1808 = vmatmul.f32.gmra.mxu0 %v1628
      %v1809 = vpop.f32.mrf.mxu0
      %v1810 = vadd.f32 %v1459, %v1809
      %1811 = vmatmul.f32.gmra.mxu0 %v1631
      %v1812 = vpop.f32.mrf.mxu0
      %v1813 = vadd.f32 %v1462, %v1812
      %1814 = vmatmul.f32.gmra.mxu0 %v1642
      %v1815 = vpop.f32.mrf.mxu0
      %v1816 = vadd.f32 %v1465, %v1815
      %1817 = vmatmul.f32.gmra.mxu0 %v1645
      %v1818 = vpop.f32.mrf.mxu0
      %v1819 = vadd.f32 %v1468, %v1818
      %1820 = vmatmul.f32.gmra.mxu0 %v1656
      %v1821 = vpop.f32.mrf.mxu0
      %v1822 = vadd.f32 %v1471, %v1821
      %1823 = vmatmul.f32.gmra.mxu0 %v1659
      %v1824 = vpop.f32.mrf.mxu0
      %v1825 = vadd.f32 %v1474, %v1824
      %1826 = vmatmul.f32.gmra.mxu0 %v1670
      %v1827 = vpop.f32.mrf.mxu0
      %v1828 = vadd.f32 %v1477, %v1827
      %1829 = vmatmul.f32.gmra.mxu0 %v1673
      %v1830 = vpop.f32.mrf.mxu0
      %v1831 = vadd.f32 %v1480, %v1830
      %1832 = vmatmul.f32.gmra.mxu0 %v1678
      %v1833 = vpop.f32.mrf.mxu0
      %v1834 = vadd.f32 %v1483, %v1833
      %1835 = vdwg.mxu0
      %1836 = vmatpush.msra.mxu0 %v621
      %1837 = vmatpush.msra.mxu0 %v620
      %1838 = vmatpush.msra.mxu0 %v619
      %1839 = vmatpush.msra.mxu0 %v618
      %1840 = vmatpush.msra.mxu0 %v617
      %1841 = vmatpush.msra.mxu0 %v616
      %1842 = vmatpush.msra.mxu0 %v615
      %1843 = vmatpush.msra.mxu0 %v614
      %1844 = vmatpush.msra.mxu0 %v613
      %1845 = vmatpush.msra.mxu0 %v612
      %1846 = vmatpush.msra.mxu0 %v611
      %1847 = vmatpush.msra.mxu0 %v610
      %1848 = vmatpush.msra.mxu0 %v609
      %1849 = vmatpush.msra.mxu0 %v608
      %1850 = vmatpush.msra.mxu0 %v607
      %1851 = vmatpush.msra.mxu0 %v606
      %1852 = vmatmul.f32.gmra.mxu0 %v1531
      %v1853 = vpop.f32.mrf.mxu0
      %v1854 = vadd.f32 %v1768, %v1853
      %1855 = vmatmul.f32.gmra.mxu0 %v1534
      %v1856 = vpop.f32.mrf.mxu0
      %v1857 = vadd.f32 %v1771, %v1856
      %1858 = vmatmul.f32.gmra.mxu0 %v1545
      %v1859 = vpop.f32.mrf.mxu0
      %v1860 = vadd.f32 %v1774, %v1859
      %1861 = vmatmul.f32.gmra.mxu0 %v1548
      %v1862 = vpop.f32.mrf.mxu0
      %v1863 = vadd.f32 %v1777, %v1862
      %1864 = vmatmul.f32.gmra.mxu0 %v1559
      %v1865 = vpop.f32.mrf.mxu0
      %v1866 = vadd.f32 %v1780, %v1865
      %1867 = vmatmul.f32.gmra.mxu0 %v1562
      %v1868 = vpop.f32.mrf.mxu0
      %v1869 = vadd.f32 %v1783, %v1868
      %1870 = vmatmul.f32.gmra.mxu0 %v1573
      %v1871 = vpop.f32.mrf.mxu0
      %v1872 = vadd.f32 %v1786, %v1871
      %1873 = vmatmul.f32.gmra.mxu0 %v1576
      %v1874 = vpop.f32.mrf.mxu0
      %v1875 = vadd.f32 %v1789, %v1874
      %1876 = vmatmul.f32.gmra.mxu0 %v1587
      %v1877 = vpop.f32.mrf.mxu0
      %v1878 = vadd.f32 %v1792, %v1877
      %1879 = vmatmul.f32.gmra.mxu0 %v1590
      %v1880 = vpop.f32.mrf.mxu0
      %v1881 = vadd.f32 %v1795, %v1880
      %1882 = vmatmul.f32.gmra.mxu0 %v1601
      %v1883 = vpop.f32.mrf.mxu0
      %v1884 = vadd.f32 %v1798, %v1883
      %1885 = vmatmul.f32.gmra.mxu0 %v1604
      %v1886 = vpop.f32.mrf.mxu0
      %v1887 = vadd.f32 %v1801, %v1886
      %1888 = vmatmul.f32.gmra.mxu0 %v1615
      %v1889 = vpop.f32.mrf.mxu0
      %v1890 = vadd.f32 %v1804, %v1889
      %1891 = vmatmul.f32.gmra.mxu0 %v1618
      %v1892 = vpop.f32.mrf.mxu0
      %v1893 = vadd.f32 %v1807, %v1892
      %1894 = vmatmul.f32.gmra.mxu0 %v1629
      %v1895 = vpop.f32.mrf.mxu0
      %v1896 = vadd.f32 %v1810, %v1895
      %1897 = vmatmul.f32.gmra.mxu0 %v1632
      %v1898 = vpop.f32.mrf.mxu0
      %v1899 = vadd.f32 %v1813, %v1898
      %1900 = vmatmul.f32.gmra.mxu0 %v1643
      %v1901 = vpop.f32.mrf.mxu0
      %v1902 = vadd.f32 %v1816, %v1901
      %1903 = vmatmul.f32.gmra.mxu0 %v1646
      %v1904 = vpop.f32.mrf.mxu0
      %v1905 = vadd.f32 %v1819, %v1904
      %1906 = vmatmul.f32.gmra.mxu0 %v1657
      %v1907 = vpop.f32.mrf.mxu0
      %v1908 = vadd.f32 %v1822, %v1907
      %1909 = vmatmul.f32.gmra.mxu0 %v1660
      %v1910 = vpop.f32.mrf.mxu0
      %v1911 = vadd.f32 %v1825, %v1910
      %1912 = vmatmul.f32.gmra.mxu0 %v1671
      %v1913 = vpop.f32.mrf.mxu0
      %v1914 = vadd.f32 %v1828, %v1913
      %1915 = vmatmul.f32.gmra.mxu0 %v1674
      %v1916 = vpop.f32.mrf.mxu0
      %v1917 = vadd.f32 %v1831, %v1916
      %1918 = vmatmul.f32.gmra.mxu0 %v1679
      %v1919 = vpop.f32.mrf.mxu0
      %v1920 = vadd.f32 %v1834, %v1919
      %1921 = vdwg.mxu0
      %1922 = vmatpush.msra.mxu0 %v637
      %1923 = vmatpush.msra.mxu0 %v636
      %1924 = vmatpush.msra.mxu0 %v635
      %1925 = vmatpush.msra.mxu0 %v634
      %1926 = vmatpush.msra.mxu0 %v633
      %1927 = vmatpush.msra.mxu0 %v632
      %1928 = vmatpush.msra.mxu0 %v631
      %1929 = vmatpush.msra.mxu0 %v630
      %1930 = vmatpush.msra.mxu0 %v629
      %1931 = vmatpush.msra.mxu0 %v628
      %1932 = vmatpush.msra.mxu0 %v627
      %1933 = vmatpush.msra.mxu0 %v626
      %1934 = vmatpush.msra.mxu0 %v625
      %1935 = vmatpush.msra.mxu0 %v624
      %1936 = vmatpush.msra.mxu0 %v623
      %1937 = vmatpush.msra.mxu0 %v622
      %1938 = vmatmul.f32.gmra.mxu0 %v1532
      %v1939 = vpop.f32.mrf.mxu0
      %v1940 = vadd.f32 %v1854, %v1939
      %1941 = vmatmul.f32.gmra.mxu0 %v1535
      %v1942 = vpop.f32.mrf.mxu0
      %v1943 = vadd.f32 %v1857, %v1942
      %1944 = vmatmul.f32.gmra.mxu0 %v1546
      %v1945 = vpop.f32.mrf.mxu0
      %v1946 = vadd.f32 %v1860, %v1945
      %1947 = vmatmul.f32.gmra.mxu0 %v1549
      %v1948 = vpop.f32.mrf.mxu0
      %v1949 = vadd.f32 %v1863, %v1948
      %1950 = vmatmul.f32.gmra.mxu0 %v1560
      %v1951 = vpop.f32.mrf.mxu0
      %v1952 = vadd.f32 %v1866, %v1951
      %1953 = vmatmul.f32.gmra.mxu0 %v1563
      %v1954 = vpop.f32.mrf.mxu0
      %v1955 = vadd.f32 %v1869, %v1954
      %1956 = vmatmul.f32.gmra.mxu0 %v1574
      %v1957 = vpop.f32.mrf.mxu0
      %v1958 = vadd.f32 %v1872, %v1957
      %1959 = vmatmul.f32.gmra.mxu0 %v1577
      %v1960 = vpop.f32.mrf.mxu0
      %v1961 = vadd.f32 %v1875, %v1960
      %1962 = vmatmul.f32.gmra.mxu0 %v1588
      %v1963 = vpop.f32.mrf.mxu0
      %v1964 = vadd.f32 %v1878, %v1963
      %1965 = vmatmul.f32.gmra.mxu0 %v1591
      %v1966 = vpop.f32.mrf.mxu0
      %v1967 = vadd.f32 %v1881, %v1966
      %1968 = vmatmul.f32.gmra.mxu0 %v1602
      %v1969 = vpop.f32.mrf.mxu0
      %v1970 = vadd.f32 %v1884, %v1969
      %1971 = vmatmul.f32.gmra.mxu0 %v1605
      %v1972 = vpop.f32.mrf.mxu0
      %v1973 = vadd.f32 %v1887, %v1972
      %1974 = vmatmul.f32.gmra.mxu0 %v1616
      %v1975 = vpop.f32.mrf.mxu0
      %v1976 = vadd.f32 %v1890, %v1975
      %1977 = vmatmul.f32.gmra.mxu0 %v1619
      %v1978 = vpop.f32.mrf.mxu0
      %v1979 = vadd.f32 %v1893, %v1978
      %1980 = vmatmul.f32.gmra.mxu0 %v1630
      %v1981 = vpop.f32.mrf.mxu0
      %v1982 = vadd.f32 %v1896, %v1981
      %1983 = vmatmul.f32.gmra.mxu0 %v1633
      %v1984 = vpop.f32.mrf.mxu0
      %v1985 = vadd.f32 %v1899, %v1984
      %1986 = vmatmul.f32.gmra.mxu0 %v1644
      %v1987 = vpop.f32.mrf.mxu0
      %v1988 = vadd.f32 %v1902, %v1987
      %1989 = vmatmul.f32.gmra.mxu0 %v1647
      %v1990 = vpop.f32.mrf.mxu0
      %v1991 = vadd.f32 %v1905, %v1990
      %1992 = vmatmul.f32.gmra.mxu0 %v1658
      %v1993 = vpop.f32.mrf.mxu0
      %v1994 = vadd.f32 %v1908, %v1993
      %1995 = vmatmul.f32.gmra.mxu0 %v1661
      %v1996 = vpop.f32.mrf.mxu0
      %v1997 = vadd.f32 %v1911, %v1996
      %1998 = vmatmul.f32.gmra.mxu0 %v1672
      %v1999 = vpop.f32.mrf.mxu0
      %v2000 = vadd.f32 %v1914, %v1999
      %2001 = vmatmul.f32.gmra.mxu0 %v1675
      %v2002 = vpop.f32.mrf.mxu0
      %v2003 = vadd.f32 %v1917, %v2002
      %2004 = vmatmul.f32.gmra.mxu0 %v1680
      %v2005 = vpop.f32.mrf.mxu0
      %v2006 = vadd.f32 %v1920, %v2005
      %2007 = vdwg.mxu0
      %v2031 = vrot.slane %v1940, 2
      %v2032 = vrot.slane %v1940, 4
      %v2033 = vrot.slane %v1940, 6
      %v2034 = vrot.slane %v1943, 2
      %v2035 = vrot.slane %v1943, 4
      %v2036 = vrot.slane %v1943, 6
      %v2037 = vrot.slane %v1946, 2
      %v2038 = vrot.slane %v1946, 4
      %v2039 = vrot.slane %v1946, 6
      %v2040 = vrot.slane %v1949, 2
      %v2041 = vrot.slane %v1949, 4
      %v2042 = vrot.slane %v1949, 6
      %v2043 = vrot.slane %v1952, 2
      %v2044 = vrot.slane %v1952, 4
      %v2045 = vrot.slane %v1952, 6
      %v2046 = vrot.slane %v1955, 2
      %v2047 = vrot.slane %v1955, 4
      %v2048 = vrot.slane %v1955, 6
      %v2049 = vrot.slane %v1958, 2
      %v2050 = vrot.slane %v1958, 4
      %v2051 = vrot.slane %v1958, 6
      %v2052 = vrot.slane %v1961, 2
      %v2053 = vrot.slane %v1961, 4
      %v2054 = vrot.slane %v1961, 6
      %v2055 = vrot.slane %v1964, 2
      %v2056 = vrot.slane %v1964, 4
      %v2057 = vrot.slane %v1964, 6
      %v2058 = vrot.slane %v1967, 2
      %v2059 = vrot.slane %v1967, 4
      %v2060 = vrot.slane %v1967, 6
      %v2061 = vrot.slane %v1970, 2
      %v2062 = vrot.slane %v1970, 4
      %v2063 = vrot.slane %v1970, 6
      %v2064 = vrot.slane %v1973, 2
      %v2065 = vrot.slane %v1973, 4
      %v2066 = vrot.slane %v1973, 6
      %v2067 = vrot.slane %v1976, 2
      %v2068 = vrot.slane %v1976, 4
      %v2069 = vrot.slane %v1976, 6
      %v2070 = vrot.slane %v1979, 2
      %v2071 = vrot.slane %v1979, 4
      %v2072 = vrot.slane %v1979, 6
      %v2073 = vrot.slane %v1982, 2
      %v2074 = vrot.slane %v1982, 4
      %v2075 = vrot.slane %v1982, 6
      %v2076 = vrot.slane %v1985, 2
      %v2077 = vrot.slane %v1985, 4
      %v2078 = vrot.slane %v1985, 6
      %v2079 = vrot.slane %v1988, 2
      %v2080 = vrot.slane %v1988, 4
      %v2081 = vrot.slane %v1988, 6
      %v2082 = vrot.slane %v1991, 2
      %v2083 = vrot.slane %v1991, 4
      %v2084 = vrot.slane %v1991, 6
      %v2085 = vrot.slane %v1994, 2
      %v2086 = vrot.slane %v1994, 4
      %v2087 = vrot.slane %v1994, 6
      %v2088 = vrot.slane %v1997, 2
      %v2089 = vrot.slane %v1997, 4
      %v2090 = vrot.slane %v1997, 6
      %v2091 = vrot.slane %v2000, 2
      %v2092 = vrot.slane %v2000, 4
      %v2093 = vrot.slane %v2000, 6
      %v2094 = vrot.slane %v2003, 2
      %v2095 = vrot.slane %v2003, 4
      %v2096 = vrot.slane %v2003, 6
      %v2097 = vrot.slane %v2006, 2
      %s2165 = scalar_lea.vmem %s2, 768
      %v2166 = vld [vmem:[%s2165] sm:$0xff]
      %v2167 = vld [vmem:[%s2165 + $0x8] sm:$0xff]
      %v2168 = vld [vmem:[%s2165 + $0x10] sm:$0xff]
      %v2169 = vld [vmem:[%s2165 + $0x18] sm:$0xff]
      %v2170 = vld [vmem:[%s2165 + $0x20] sm:$0xff]
      %v2171 = vld [vmem:[%s2165 + $0x28] sm:$0xff]
      %v2172 = vld [vmem:[%s2165 + $0x30] sm:$0xff]
      %v2173 = vld [vmem:[%s2165 + $0x38] sm:$0xff]
      %v2174 = vld [vmem:[%s2165 + $0x40] sm:$0xff]
      %v2175 = vld [vmem:[%s2165 + $0x48] sm:$0xff]
      %v2176 = vld [vmem:[%s2165 + $0x50] sm:$0xff]
      %v2177 = vld [vmem:[%s2165 + $0x58] sm:$0xff]
      %v2178 = vld [vmem:[%s2165 + $0x60] sm:$0xff]
      %v2179 = vld [vmem:[%s2165 + $0x68] sm:$0xff]
      %v2180 = vld [vmem:[%s2165 + $0x70] sm:$0xff]
      %v2181 = vld [vmem:[%s2165 + $0x78] sm:$0xff]
      %v2182 = vld [vmem:[%s2165 + $0x80] sm:$0xff]
      %v2183 = vld [vmem:[%s2165 + $0x88] sm:$0xff]
      %v2184 = vld [vmem:[%s2165 + $0x90] sm:$0xff]
      %v2185 = vld [vmem:[%s2165 + $0x98] sm:$0xff]
      %v2186 = vld [vmem:[%s2165 + $0xa0] sm:$0xff]
      %v2187 = vld [vmem:[%s2165 + $0xa8] sm:$0xff]
      %v2188 = vld [vmem:[%s2165 + $0xb0] sm:$0xff]
      %v2189 = vld [vmem:[%s2165 + $0xb8] sm:$0xff]
      %v2190 = vld [vmem:[%s2165 + $0xc0] sm:$0xff]
      %v2191 = vld [vmem:[%s2165 + $0xc8] sm:$0xff]
      %v2192 = vld [vmem:[%s2165 + $0xd0] sm:$0xff]
      %v2193 = vld [vmem:[%s2165 + $0xd8] sm:$0xff]
      %v2194 = vld [vmem:[%s2165 + $0xe0] sm:$0xff]
      %v2195 = vld [vmem:[%s2165 + $0xe8] sm:$0xff]
      %v2196 = vld [vmem:[%s2165 + $0xf0] sm:$0xff]
      %v2197 = vld [vmem:[%s2165 + $0xf8] sm:$0xff]
      %v2198 = vld [vmem:[%s2165 + $0x100] sm:$0xff]
      %v2199 = vld [vmem:[%s2165 + $0x108] sm:$0xff]
      %v2200 = vld [vmem:[%s2165 + $0x110] sm:$0xff]
      %v2201 = vld [vmem:[%s2165 + $0x118] sm:$0xff]
      %v2202 = vld [vmem:[%s2165 + $0x120] sm:$0xff]
      %v2203 = vld [vmem:[%s2165 + $0x128] sm:$0xff]
      %v2204 = vld [vmem:[%s2165 + $0x130] sm:$0xff]
      %v2205 = vld [vmem:[%s2165 + $0x138] sm:$0xff]
      %v2206 = vld [vmem:[%s2165 + $0x140] sm:$0xff]
      %v2207 = vld [vmem:[%s2165 + $0x148] sm:$0xff]
      %v2208 = vld [vmem:[%s2165 + $0x150] sm:$0xff]
      %v2209 = vld [vmem:[%s2165 + $0x158] sm:$0xff]
      %v2210 = vld [vmem:[%s2165 + $0x160] sm:$0xff]
      %v2211 = vld [vmem:[%s2165 + $0x168] sm:$0xff]
      %v2212 = vld [vmem:[%s2165 + $0x170] sm:$0xff]
      %v2213 = vld [vmem:[%s2165 + $0x178] sm:$0xff]
      %v2214 = vrot.slane %v526, 6
      %v2215 = vrot.slane %v587, 4
      %v2216 = vrot.slane %v528, 6
      %v2217 = vrot.slane %v589, 4
      %v2218 = vrot.slane %v527, 6
      %v2219 = vrot.slane %v588, 4
      %v2220 = vsel %vm747, %v429, %v2214
      %v2221 = vsel %vm749, %v2220, %v2215
      %v2222 = vsel %vm751, %v429, %v2214
      %v2223 = vsel %vm753, %v2222, %v2215
      %v2224 = vrot.slane %v2223, 2
      %v2225 = vsel %vm756, %v429, %v2214
      %v2226 = vsel %vm749, %v2215, %v2225
      %v2227 = vrot.slane %v2226, 4
      %v2228 = vsel %vm529, %v2214, %v429
      %v2229 = vsel %vm753, %v2215, %v2228
      %v2230 = vrot.slane %v2229, 6
      %v2231 = vsel %vm747, %v430, %v2216
      %v2232 = vsel %vm749, %v2231, %v2217
      %v2233 = vsel %vm751, %v430, %v2216
      %v2234 = vsel %vm753, %v2233, %v2217
      %v2235 = vrot.slane %v2234, 2
      %v2236 = vsel %vm756, %v430, %v2216
      %v2237 = vsel %vm749, %v2217, %v2236
      %v2238 = vrot.slane %v2237, 4
      %v2239 = vsel %vm529, %v2216, %v430
      %v2240 = vsel %vm753, %v2217, %v2239
      %v2241 = vrot.slane %v2240, 6
      %v2242 = vsel %vm747, %v431, %v2218
      %v2243 = vsel %vm749, %v2242, %v2219
      %2244 = vst [vmem:[#allocation1] ss:$4 sm:$0xff] %v777
      %s2245 = scalar_lea.vmem [#allocation1], 1
      %2246 = vst [vmem:[%s2245] ss:$4 sm:$0xff] %v780
      %s2247 = scalar_lea.vmem [#allocation1], 2
      %2248 = vst [vmem:[%s2247] ss:$4 sm:$0xff] %v783
      %s2249 = scalar_lea.vmem [#allocation1], 3
      %2250 = vst [vmem:[%s2249] ss:$4 sm:$0xff] %v786
      %s2251 = scalar_lea.vmem [#allocation1], 32
      %2252 = vst [vmem:[%s2251] ss:$4 sm:$0xff] %v788
      %s2253 = scalar_lea.vmem [#allocation1], 33
      %2254 = vst [vmem:[%s2253] ss:$4 sm:$0xff] %v791
      %s2255 = scalar_lea.vmem [#allocation1], 34
      %2256 = vst [vmem:[%s2255] ss:$4 sm:$0xff] %v794
      %s2257 = scalar_lea.vmem [#allocation1], 35
      %2258 = vst [vmem:[%s2257] ss:$4 sm:$0xff] %v797
      %v2259 = vld.sshfl [vmem:[#allocation1] sm:$0xff pattern:$0x73625140]
      %v2260 = vld.sshfl [vmem:[#allocation1 + $0x8] sm:$0xff pattern:$0x73625140]
      %v2261 = vld.sshfl [vmem:[#allocation1 + $0x10] sm:$0xff pattern:$0x73625140]
      %v2262 = vld.sshfl [vmem:[#allocation1 + $0x20] sm:$0xff pattern:$0x73625140]
      %v2263 = vld.sshfl [vmem:[#allocation1 + $0x28] sm:$0xff pattern:$0x73625140]
      %v2264 = vld.sshfl [vmem:[#allocation1 + $0x30] sm:$0xff pattern:$0x73625140]
      %2265 = vst [vmem:[#allocation1] ss:$4 sm:$0xff] %v799
      %2266 = vst [vmem:[%s2245] ss:$4 sm:$0xff] %v801
      %2267 = vst [vmem:[%s2247] ss:$4 sm:$0xff] %v804
      %2268 = vst [vmem:[%s2249] ss:$4 sm:$0xff] %v807
      %2269 = vst [vmem:[%s2251] ss:$4 sm:$0xff] %v810
      %2270 = vst [vmem:[%s2253] ss:$4 sm:$0xff] %v812
      %2271 = vst [vmem:[%s2255] ss:$4 sm:$0xff] %v815
      %2272 = vst [vmem:[%s2257] ss:$4 sm:$0xff] %v818
      %v2273 = vld.sshfl [vmem:[#allocation1] sm:$0xff pattern:$0x73625140]
      %v2274 = vld.sshfl [vmem:[#allocation1 + $0x8] sm:$0xff pattern:$0x73625140]
      %v2275 = vld.sshfl [vmem:[#allocation1 + $0x10] sm:$0xff pattern:$0x73625140]
      %v2276 = vld.sshfl [vmem:[#allocation1 + $0x20] sm:$0xff pattern:$0x73625140]
      %v2277 = vld.sshfl [vmem:[#allocation1 + $0x28] sm:$0xff pattern:$0x73625140]
      %v2278 = vld.sshfl [vmem:[#allocation1 + $0x30] sm:$0xff pattern:$0x73625140]
      %2279 = vst [vmem:[#allocation1] ss:$4 sm:$0xff] %v821
      %2280 = vst [vmem:[%s2245] ss:$4 sm:$0xff] %v823
      %2281 = vst [vmem:[%s2247] ss:$4 sm:$0xff] %v825
      %2282 = vst [vmem:[%s2249] ss:$4 sm:$0xff] %v828
      %2283 = vst [vmem:[%s2251] ss:$4 sm:$0xff] %v831
      %2284 = vst [vmem:[%s2253] ss:$4 sm:$0xff] %v834
      %2285 = vst [vmem:[%s2255] ss:$4 sm:$0xff] %v836
      %2286 = vst [vmem:[%s2257] ss:$4 sm:$0xff] %v839
      %v2287 = vld.sshfl [vmem:[#allocation1] sm:$0xff pattern:$0x73625140]
      %v2288 = vld.sshfl [vmem:[#allocation1 + $0x8] sm:$0xff pattern:$0x73625140]
      %v2289 = vld.sshfl [vmem:[#allocation1 + $0x10] sm:$0xff pattern:$0x73625140]
      %v2290 = vld.sshfl [vmem:[#allocation1 + $0x20] sm:$0xff pattern:$0x73625140]
      %v2291 = vld.sshfl [vmem:[#allocation1 + $0x28] sm:$0xff pattern:$0x73625140]
      %v2292 = vld.sshfl [vmem:[#allocation1 + $0x30] sm:$0xff pattern:$0x73625140]
      %2293 = vst [vmem:[#allocation1] ss:$4 sm:$0xff] %v842
      %2294 = vst [vmem:[%s2245] ss:$4 sm:$0xff] %v845
      %2295 = vst [vmem:[%s2247] ss:$4 sm:$0xff] %v847
      %2296 = vst [vmem:[%s2249] ss:$4 sm:$0xff] %v849
      %2297 = vst [vmem:[%s2251] ss:$4 sm:$0xff] %v852
      %2298 = vst [vmem:[%s2253] ss:$4 sm:$0xff] %v855
      %2299 = vst [vmem:[%s2255] ss:$4 sm:$0xff] %v858
      %2300 = vst [vmem:[%s2257] ss:$4 sm:$0xff] %v860
      %v2301 = vld.sshfl [vmem:[#allocation1] sm:$0xff pattern:$0x73625140]
      %v2302 = vld.sshfl [vmem:[#allocation1 + $0x8] sm:$0xff pattern:$0x73625140]
      %v2303 = vld.sshfl [vmem:[#allocation1 + $0x10] sm:$0xff pattern:$0x73625140]
      %v2304 = vld.sshfl [vmem:[#allocation1 + $0x20] sm:$0xff pattern:$0x73625140]
      %v2305 = vld.sshfl [vmem:[#allocation1 + $0x28] sm:$0xff pattern:$0x73625140]
      %v2306 = vld.sshfl [vmem:[#allocation1 + $0x30] sm:$0xff pattern:$0x73625140]
      %2307 = vst [vmem:[#allocation1] ss:$4 sm:$0xff] %v863
      %2308 = vst [vmem:[%s2245] ss:$4 sm:$0xff] %v866
      %2309 = vst [vmem:[%s2247] ss:$4 sm:$0xff] %v869
      %2310 = vst [vmem:[%s2249] ss:$4 sm:$0xff] %v871
      %2311 = vst [vmem:[%s2251] ss:$4 sm:$0xff] %v873
      %2312 = vst [vmem:[%s2253] ss:$4 sm:$0xff] %v876
      %2313 = vst [vmem:[%s2255] ss:$4 sm:$0xff] %v879
      %2314 = vst [vmem:[%s2257] ss:$4 sm:$0xff] %v882
      %v2315 = vld.sshfl [vmem:[#allocation1] sm:$0xff pattern:$0x73625140]
      %v2316 = vld.sshfl [vmem:[#allocation1 + $0x8] sm:$0xff pattern:$0x73625140]
      %v2317 = vld.sshfl [vmem:[#allocation1 + $0x10] sm:$0xff pattern:$0x73625140]
      %v2318 = vld.sshfl [vmem:[#allocation1 + $0x20] sm:$0xff pattern:$0x73625140]
      %v2319 = vld.sshfl [vmem:[#allocation1 + $0x28] sm:$0xff pattern:$0x73625140]
      %v2320 = vld.sshfl [vmem:[#allocation1 + $0x30] sm:$0xff pattern:$0x73625140]
      %2321 = vst [vmem:[#allocation1] ss:$4 sm:$0xff] %v884
      %2322 = vst [vmem:[%s2245] ss:$4 sm:$0xff] %v887
      %2323 = vst [vmem:[%s2247] ss:$4 sm:$0xff] %v890
      %2324 = vst [vmem:[%s2249] ss:$4 sm:$0xff] %v893
      %2325 = vst [vmem:[%s2251] ss:$4 sm:$0xff] %v895
      %2326 = vst [vmem:[%s2253] ss:$4 sm:$0xff] %v897
      %2327 = vst [vmem:[%s2255] ss:$4 sm:$0xff] %v900
      %2328 = vst [vmem:[%s2257] ss:$4 sm:$0xff] %v903
      %v2329 = vld.sshfl [vmem:[#allocation1] sm:$0xff pattern:$0x73625140]
      %v2330 = vld.sshfl [vmem:[#allocation1 + $0x8] sm:$0xff pattern:$0x73625140]
      %v2331 = vld.sshfl [vmem:[#allocation1 + $0x10] sm:$0xff pattern:$0x73625140]
      %v2332 = vld.sshfl [vmem:[#allocation1 + $0x20] sm:$0xff pattern:$0x73625140]
      %v2333 = vld.sshfl [vmem:[#allocation1 + $0x28] sm:$0xff pattern:$0x73625140]
      %v2334 = vld.sshfl [vmem:[#allocation1 + $0x30] sm:$0xff pattern:$0x73625140]
      %2335 = vst [vmem:[#allocation1] ss:$4 sm:$0xff] %v906
      %2336 = vst [vmem:[%s2245] ss:$4 sm:$0xff] %v908
      %2337 = vst [vmem:[%s2247] ss:$4 sm:$0xff] %v911
      %2338 = vst [vmem:[%s2249] ss:$4 sm:$0xff] %v914
      %2339 = vst [vmem:[%s2251] ss:$4 sm:$0xff] %v917
      %2340 = vst [vmem:[%s2253] ss:$4 sm:$0xff] %v919
      %2341 = vst [vmem:[%s2255] ss:$4 sm:$0xff] %v921
      %2342 = vst [vmem:[%s2257] ss:$4 sm:$0xff] %v924
      %v2343 = vld.sshfl [vmem:[#allocation1] sm:$0xff pattern:$0x73625140]
      %v2344 = vld.sshfl [vmem:[#allocation1 + $0x8] sm:$0xff pattern:$0x73625140]
      %v2345 = vld.sshfl [vmem:[#allocation1 + $0x10] sm:$0xff pattern:$0x73625140]
      %v2346 = vld.sshfl [vmem:[#allocation1 + $0x20] sm:$0xff pattern:$0x73625140]
      %v2347 = vld.sshfl [vmem:[#allocation1 + $0x28] sm:$0xff pattern:$0x73625140]
      %v2348 = vld.sshfl [vmem:[#allocation1 + $0x30] sm:$0xff pattern:$0x73625140]
      %2349 = vst [vmem:[#allocation1] ss:$4 sm:$0xff] %v927
      %2350 = vst [vmem:[%s2245] ss:$4 sm:$0xff] %v930
      %2351 = vst [vmem:[%s2247] ss:$4 sm:$0xff] %v932
      %2352 = vst [vmem:[%s2249] ss:$4 sm:$0xff] %v935
      %2353 = vst [vmem:[%s2251] ss:$4 sm:$0xff] %v938
      %2354 = vst [vmem:[%s2253] ss:$4 sm:$0xff] %v941
      %2355 = vst [vmem:[%s2255] ss:$4 sm:$0xff] %v943
      %2356 = vst [vmem:[%s2257] ss:$4 sm:$0xff] %v945
      %v2357 = vld.sshfl [vmem:[#allocation1] sm:$0xff pattern:$0x73625140]
      %v2358 = vld.sshfl [vmem:[#allocation1 + $0x8] sm:$0xff pattern:$0x73625140]
      %v2359 = vld.sshfl [vmem:[#allocation1 + $0x10] sm:$0xff pattern:$0x73625140]
      %v2360 = vld.sshfl [vmem:[#allocation1 + $0x20] sm:$0xff pattern:$0x73625140]
      %v2361 = vld.sshfl [vmem:[#allocation1 + $0x28] sm:$0xff pattern:$0x73625140]
      %v2362 = vld.sshfl [vmem:[#allocation1 + $0x30] sm:$0xff pattern:$0x73625140]
      %2363 = vst [vmem:[#allocation1] ss:$4 sm:$0xff] %v948
      %2364 = vst [vmem:[%s2245] ss:$4 sm:$0xff] %v951
      %2365 = vst [vmem:[%s2247] ss:$4 sm:$0xff] %v954
      %2366 = vst [vmem:[%s2249] ss:$4 sm:$0xff] %v956
      %2367 = vst [vmem:[%s2251] ss:$4 sm:$0xff] %v959
      %2368 = vst [vmem:[%s2253] ss:$4 sm:$0xff] %v962
      %2369 = vst [vmem:[%s2255] ss:$4 sm:$0xff] %v965
      %2370 = vst [vmem:[%s2257] ss:$4 sm:$0xff] %v967
      %v2371 = vld.sshfl [vmem:[#allocation1] sm:$0xff pattern:$0x73625140]
      %v2372 = vld.sshfl [vmem:[#allocation1 + $0x8] sm:$0xff pattern:$0x73625140]
      %v2373 = vld.sshfl [vmem:[#allocation1 + $0x10] sm:$0xff pattern:$0x73625140]
      %v2374 = vld.sshfl [vmem:[#allocation1 + $0x20] sm:$0xff pattern:$0x73625140]
      %v2375 = vld.sshfl [vmem:[#allocation1 + $0x28] sm:$0xff pattern:$0x73625140]
      %v2376 = vld.sshfl [vmem:[#allocation1 + $0x30] sm:$0xff pattern:$0x73625140]
      %2377 = vst [vmem:[#allocation1] ss:$4 sm:$0xff] %v969
      %2378 = vst [vmem:[%s2245] ss:$4 sm:$0xff] %v972
      %2379 = vst [vmem:[%s2247] ss:$4 sm:$0xff] %v975
      %2380 = vst [vmem:[%s2249] ss:$4 sm:$0xff] %v978
      %2381 = vst [vmem:[%s2251] ss:$4 sm:$0xff] %v980
      %2382 = vst [vmem:[%s2253] ss:$4 sm:$0xff] %v983
      %2383 = vst [vmem:[%s2255] ss:$4 sm:$0xff] %v986
      %2384 = vst [vmem:[%s2257] ss:$4 sm:$0xff] %v989
      %v2385 = vld.sshfl [vmem:[#allocation1] sm:$0xff pattern:$0x73625140]
      %v2386 = vld.sshfl [vmem:[#allocation1 + $0x8] sm:$0xff pattern:$0x73625140]
      %v2387 = vld.sshfl [vmem:[#allocation1 + $0x10] sm:$0xff pattern:$0x73625140]
      %v2388 = vld.sshfl [vmem:[#allocation1 + $0x20] sm:$0xff pattern:$0x73625140]
      %v2389 = vld.sshfl [vmem:[#allocation1 + $0x28] sm:$0xff pattern:$0x73625140]
      %v2390 = vld.sshfl [vmem:[#allocation1 + $0x30] sm:$0xff pattern:$0x73625140]
      %2391 = vst [vmem:[#allocation1] ss:$4 sm:$0xff] %v991
      %2392 = vst [vmem:[%s2245] ss:$4 sm:$0xff] %v2221
      %2393 = vst [vmem:[%s2247] ss:$4 sm:$0xff] %v2224
      %2394 = vst [vmem:[%s2249] ss:$4 sm:$0xff] %v2227
      %2395 = vst [vmem:[%s2251] ss:$4 sm:$0xff] %v2230
      %2396 = vst [vmem:[%s2253] ss:$4 sm:$0xff] %v2232
      %2397 = vst [vmem:[%s2255] ss:$4 sm:$0xff] %v2235
      %2398 = vst [vmem:[%s2257] ss:$4 sm:$0xff] %v2238
      %v2399 = vld.sshfl [vmem:[#allocation1] sm:$0xff pattern:$0x73625140]
      %v2400 = vld.sshfl [vmem:[#allocation1 + $0x8] sm:$0xff pattern:$0x73625140]
      %v2401 = vld.sshfl [vmem:[#allocation1 + $0x10] sm:$0xff pattern:$0x73625140]
      %v2402 = vld.sshfl [vmem:[#allocation1 + $0x20] sm:$0xff pattern:$0x73625140]
      %v2403 = vld.sshfl [vmem:[#allocation1 + $0x28] sm:$0xff pattern:$0x73625140]
      %v2404 = vld.sshfl [vmem:[#allocation1 + $0x30] sm:$0xff pattern:$0x73625140]
      %2405 = vst [vmem:[#allocation1] ss:$4 sm:$0xff] %v2241
      %2406 = vst [vmem:[%s2245] ss:$4 sm:$0xff] %v2243
      %v2407 = vld.sshfl [vmem:[#allocation1] sm:$0xff pattern:$0x73625140]
      %v2408 = vld.sshfl [vmem:[#allocation1 + $0x8] sm:$0xff pattern:$0x73625140]
      %v2409 = vld.sshfl [vmem:[#allocation1 + $0x10] sm:$0xff pattern:$0x73625140]
      %2479 = vmatpush.msra.mxu0 %v2181
      %2480 = vmatpush.msra.mxu0 %v2180
      %2481 = vmatpush.msra.mxu0 %v2179
      %2482 = vmatpush.msra.mxu0 %v2178
      %2483 = vmatpush.msra.mxu0 %v2177
      %2484 = vmatpush.msra.mxu0 %v2176
      %2485 = vmatpush.msra.mxu0 %v2175
      %2486 = vmatpush.msra.mxu0 %v2174
      %2487 = vmatpush.msra.mxu0 %v2173
      %2488 = vmatpush.msra.mxu0 %v2172
      %2489 = vmatpush.msra.mxu0 %v2171
      %2490 = vmatpush.msra.mxu0 %v2170
      %2491 = vmatpush.msra.mxu0 %v2169
      %2492 = vmatpush.msra.mxu0 %v2168
      %2493 = vmatpush.msra.mxu0 %v2167
      %2494 = vmatpush.msra.mxu0 %v2166
      %2495 = vmatmul.f32.gmra.mxu0 %v2259
      %v2496 = vpop.f32.mrf.mxu0
      %v2497 = vadd.f32 0.0, %v2496
      %2498 = vmatmul.f32.gmra.mxu0 %v2262
      %v2499 = vpop.f32.mrf.mxu0
      %v2500 = vadd.f32 0.0, %v2499
      %2501 = vmatmul.f32.gmra.mxu0 %v2273
      %v2502 = vpop.f32.mrf.mxu0
      %v2503 = vadd.f32 0.0, %v2502
      %2504 = vmatmul.f32.gmra.mxu0 %v2276
      %v2505 = vpop.f32.mrf.mxu0
      %v2506 = vadd.f32 0.0, %v2505
      %2507 = vmatmul.f32.gmra.mxu0 %v2287
      %v2508 = vpop.f32.mrf.mxu0
      %v2509 = vadd.f32 0.0, %v2508
      %2510 = vmatmul.f32.gmra.mxu0 %v2290
      %v2511 = vpop.f32.mrf.mxu0
      %v2512 = vadd.f32 0.0, %v2511
      %2513 = vmatmul.f32.gmra.mxu0 %v2301
      %v2514 = vpop.f32.mrf.mxu0
      %v2515 = vadd.f32 0.0, %v2514
      %2516 = vmatmul.f32.gmra.mxu0 %v2304
      %v2517 = vpop.f32.mrf.mxu0
      %v2518 = vadd.f32 0.0, %v2517
      %2519 = vmatmul.f32.gmra.mxu0 %v2315
      %v2520 = vpop.f32.mrf.mxu0
      %v2521 = vadd.f32 0.0, %v2520
      %2522 = vmatmul.f32.gmra.mxu0 %v2318
      %v2523 = vpop.f32.mrf.mxu0
      %v2524 = vadd.f32 0.0, %v2523
      %2525 = vmatmul.f32.gmra.mxu0 %v2329
      %v2526 = vpop.f32.mrf.mxu0
      %v2527 = vadd.f32 0.0, %v2526
      %2528 = vmatmul.f32.gmra.mxu0 %v2332
      %v2529 = vpop.f32.mrf.mxu0
      %v2530 = vadd.f32 0.0, %v2529
      %2531 = vmatmul.f32.gmra.mxu0 %v2343
      %v2532 = vpop.f32.mrf.mxu0
      %v2533 = vadd.f32 0.0, %v2532
      %2534 = vmatmul.f32.gmra.mxu0 %v2346
      %v2535 = vpop.f32.mrf.mxu0
      %v2536 = vadd.f32 0.0, %v2535
      %2537 = vmatmul.f32.gmra.mxu0 %v2357
      %v2538 = vpop.f32.mrf.mxu0
      %v2539 = vadd.f32 0.0, %v2538
      %2540 = vmatmul.f32.gmra.mxu0 %v2360
      %v2541 = vpop.f32.mrf.mxu0
      %v2542 = vadd.f32 0.0, %v2541
      %2543 = vmatmul.f32.gmra.mxu0 %v2371
      %v2544 = vpop.f32.mrf.mxu0
      %v2545 = vadd.f32 0.0, %v2544
      %2546 = vmatmul.f32.gmra.mxu0 %v2374
      %v2547 = vpop.f32.mrf.mxu0
      %v2548 = vadd.f32 0.0, %v2547
      %2549 = vmatmul.f32.gmra.mxu0 %v2385
      %v2550 = vpop.f32.mrf.mxu0
      %v2551 = vadd.f32 0.0, %v2550
      %2552 = vmatmul.f32.gmra.mxu0 %v2388
      %v2553 = vpop.f32.mrf.mxu0
      %v2554 = vadd.f32 0.0, %v2553
      %2555 = vmatmul.f32.gmra.mxu0 %v2399
      %v2556 = vpop.f32.mrf.mxu0
      %v2557 = vadd.f32 0.0, %v2556
      %2558 = vmatmul.f32.gmra.mxu0 %v2402
      %v2559 = vpop.f32.mrf.mxu0
      %v2560 = vadd.f32 0.0, %v2559
      %2561 = vmatmul.f32.gmra.mxu0 %v2407
      %v2562 = vpop.f32.mrf.mxu0
      %v2563 = vadd.f32 0.0, %v2562
      %2564 = vdwg.mxu0
      %2565 = vmatpush.msra.mxu0 %v2197
      %2566 = vmatpush.msra.mxu0 %v2196
      %2567 = vmatpush.msra.mxu0 %v2195
      %2568 = vmatpush.msra.mxu0 %v2194
      %2569 = vmatpush.msra.mxu0 %v2193
      %2570 = vmatpush.msra.mxu0 %v2192
      %2571 = vmatpush.msra.mxu0 %v2191
      %2572 = vmatpush.msra.mxu0 %v2190
      %2573 = vmatpush.msra.mxu0 %v2189
      %2574 = vmatpush.msra.mxu0 %v2188
      %2575 = vmatpush.msra.mxu0 %v2187
      %2576 = vmatpush.msra.mxu0 %v2186
      %2577 = vmatpush.msra.mxu0 %v2185
      %2578 = vmatpush.msra.mxu0 %v2184
      %2579 = vmatpush.msra.mxu0 %v2183
      %2580 = vmatpush.msra.mxu0 %v2182
      %2581 = vmatmul.f32.gmra.mxu0 %v2260
      %v2582 = vpop.f32.mrf.mxu0
      %v2583 = vadd.f32 %v2497, %v2582
      %2584 = vmatmul.f32.gmra.mxu0 %v2263
      %v2585 = vpop.f32.mrf.mxu0
      %v2586 = vadd.f32 %v2500, %v2585
      %2587 = vmatmul.f32.gmra.mxu0 %v2274
      %v2588 = vpop.f32.mrf.mxu0
      %v2589 = vadd.f32 %v2503, %v2588
      %2590 = vmatmul.f32.gmra.mxu0 %v2277
      %v2591 = vpop.f32.mrf.mxu0
      %v2592 = vadd.f32 %v2506, %v2591
      %2593 = vmatmul.f32.gmra.mxu0 %v2288
      %v2594 = vpop.f32.mrf.mxu0
      %v2595 = vadd.f32 %v2509, %v2594
      %2596 = vmatmul.f32.gmra.mxu0 %v2291
      %v2597 = vpop.f32.mrf.mxu0
      %v2598 = vadd.f32 %v2512, %v2597
      %2599 = vmatmul.f32.gmra.mxu0 %v2302
      %v2600 = vpop.f32.mrf.mxu0
      %v2601 = vadd.f32 %v2515, %v2600
      %2602 = vmatmul.f32.gmra.mxu0 %v2305
      %v2603 = vpop.f32.mrf.mxu0
      %v2604 = vadd.f32 %v2518, %v2603
      %2605 = vmatmul.f32.gmra.mxu0 %v2316
      %v2606 = vpop.f32.mrf.mxu0
      %v2607 = vadd.f32 %v2521, %v2606
      %2608 = vmatmul.f32.gmra.mxu0 %v2319
      %v2609 = vpop.f32.mrf.mxu0
      %v2610 = vadd.f32 %v2524, %v2609
      %2611 = vmatmul.f32.gmra.mxu0 %v2330
      %v2612 = vpop.f32.mrf.mxu0
      %v2613 = vadd.f32 %v2527, %v2612
      %2614 = vmatmul.f32.gmra.mxu0 %v2333
      %v2615 = vpop.f32.mrf.mxu0
      %v2616 = vadd.f32 %v2530, %v2615
      %2617 = vmatmul.f32.gmra.mxu0 %v2344
      %v2618 = vpop.f32.mrf.mxu0
      %v2619 = vadd.f32 %v2533, %v2618
      %2620 = vmatmul.f32.gmra.mxu0 %v2347
      %v2621 = vpop.f32.mrf.mxu0
      %v2622 = vadd.f32 %v2536, %v2621
      %2623 = vmatmul.f32.gmra.mxu0 %v2358
      %v2624 = vpop.f32.mrf.mxu0
      %v2625 = vadd.f32 %v2539, %v2624
      %2626 = vmatmul.f32.gmra.mxu0 %v2361
      %v2627 = vpop.f32.mrf.mxu0
      %v2628 = vadd.f32 %v2542, %v2627
      %2629 = vmatmul.f32.gmra.mxu0 %v2372
      %v2630 = vpop.f32.mrf.mxu0
      %v2631 = vadd.f32 %v2545, %v2630
      %2632 = vmatmul.f32.gmra.mxu0 %v2375
      %v2633 = vpop.f32.mrf.mxu0
      %v2634 = vadd.f32 %v2548, %v2633
      %2635 = vmatmul.f32.gmra.mxu0 %v2386
      %v2636 = vpop.f32.mrf.mxu0
      %v2637 = vadd.f32 %v2551, %v2636
      %2638 = vmatmul.f32.gmra.mxu0 %v2389
      %v2639 = vpop.f32.mrf.mxu0
      %v2640 = vadd.f32 %v2554, %v2639
      %2641 = vmatmul.f32.gmra.mxu0 %v2400
      %v2642 = vpop.f32.mrf.mxu0
      %v2643 = vadd.f32 %v2557, %v2642
      %2644 = vmatmul.f32.gmra.mxu0 %v2403
      %v2645 = vpop.f32.mrf.mxu0
      %v2646 = vadd.f32 %v2560, %v2645
      %2647 = vmatmul.f32.gmra.mxu0 %v2408
      %v2648 = vpop.f32.mrf.mxu0
      %v2649 = vadd.f32 %v2563, %v2648
      %2650 = vdwg.mxu0
      %2651 = vmatpush.msra.mxu0 %v2213
      %2652 = vmatpush.msra.mxu0 %v2212
      %2653 = vmatpush.msra.mxu0 %v2211
      %2654 = vmatpush.msra.mxu0 %v2210
      %2655 = vmatpush.msra.mxu0 %v2209
      %2656 = vmatpush.msra.mxu0 %v2208
      %2657 = vmatpush.msra.mxu0 %v2207
      %2658 = vmatpush.msra.mxu0 %v2206
      %2659 = vmatpush.msra.mxu0 %v2205
      %2660 = vmatpush.msra.mxu0 %v2204
      %2661 = vmatpush.msra.mxu0 %v2203
      %2662 = vmatpush.msra.mxu0 %v2202
      %2663 = vmatpush.msra.mxu0 %v2201
      %2664 = vmatpush.msra.mxu0 %v2200
      %2665 = vmatpush.msra.mxu0 %v2199
      %2666 = vmatpush.msra.mxu0 %v2198
      %2667 = vmatmul.f32.gmra.mxu0 %v2261
      %v2668 = vpop.f32.mrf.mxu0
      %v2669 = vadd.f32 %v2583, %v2668
      %2670 = vmatmul.f32.gmra.mxu0 %v2264
      %v2671 = vpop.f32.mrf.mxu0
      %v2672 = vadd.f32 %v2586, %v2671
      %2673 = vmatmul.f32.gmra.mxu0 %v2275
      %v2674 = vpop.f32.mrf.mxu0
      %v2675 = vadd.f32 %v2589, %v2674
      %2676 = vmatmul.f32.gmra.mxu0 %v2278
      %v2677 = vpop.f32.mrf.mxu0
      %v2678 = vadd.f32 %v2592, %v2677
      %2679 = vmatmul.f32.gmra.mxu0 %v2289
      %v2680 = vpop.f32.mrf.mxu0
      %v2681 = vadd.f32 %v2595, %v2680
      %2682 = vmatmul.f32.gmra.mxu0 %v2292
      %v2683 = vpop.f32.mrf.mxu0
      %v2684 = vadd.f32 %v2598, %v2683
      %2685 = vmatmul.f32.gmra.mxu0 %v2303
      %v2686 = vpop.f32.mrf.mxu0
      %v2687 = vadd.f32 %v2601, %v2686
      %2688 = vmatmul.f32.gmra.mxu0 %v2306
      %v2689 = vpop.f32.mrf.mxu0
      %v2690 = vadd.f32 %v2604, %v2689
      %2691 = vmatmul.f32.gmra.mxu0 %v2317
      %v2692 = vpop.f32.mrf.mxu0
      %v2693 = vadd.f32 %v2607, %v2692
      %2694 = vmatmul.f32.gmra.mxu0 %v2320
      %v2695 = vpop.f32.mrf.mxu0
      %v2696 = vadd.f32 %v2610, %v2695
      %2697 = vmatmul.f32.gmra.mxu0 %v2331
      %v2698 = vpop.f32.mrf.mxu0
      %v2699 = vadd.f32 %v2613, %v2698
      %2700 = vmatmul.f32.gmra.mxu0 %v2334
      %v2701 = vpop.f32.mrf.mxu0
      %v2702 = vadd.f32 %v2616, %v2701
      %2703 = vmatmul.f32.gmra.mxu0 %v2345
      %v2704 = vpop.f32.mrf.mxu0
      %v2705 = vadd.f32 %v2619, %v2704
      %2706 = vmatmul.f32.gmra.mxu0 %v2348
      %v2707 = vpop.f32.mrf.mxu0
      %v2708 = vadd.f32 %v2622, %v2707
      %2709 = vmatmul.f32.gmra.mxu0 %v2359
      %v2710 = vpop.f32.mrf.mxu0
      %v2711 = vadd.f32 %v2625, %v2710
      %2712 = vmatmul.f32.gmra.mxu0 %v2362
      %v2713 = vpop.f32.mrf.mxu0
      %v2714 = vadd.f32 %v2628, %v2713
      %2715 = vmatmul.f32.gmra.mxu0 %v2373
      %v2716 = vpop.f32.mrf.mxu0
      %v2717 = vadd.f32 %v2631, %v2716
      %2718 = vmatmul.f32.gmra.mxu0 %v2376
      %v2719 = vpop.f32.mrf.mxu0
      %v2720 = vadd.f32 %v2634, %v2719
      %2721 = vmatmul.f32.gmra.mxu0 %v2387
      %v2722 = vpop.f32.mrf.mxu0
      %v2723 = vadd.f32 %v2637, %v2722
      %2724 = vmatmul.f32.gmra.mxu0 %v2390
      %v2725 = vpop.f32.mrf.mxu0
      %v2726 = vadd.f32 %v2640, %v2725
      %2727 = vmatmul.f32.gmra.mxu0 %v2401
      %v2728 = vpop.f32.mrf.mxu0
      %v2729 = vadd.f32 %v2643, %v2728
      %2730 = vmatmul.f32.gmra.mxu0 %v2404
      %v2731 = vpop.f32.mrf.mxu0
      %v2732 = vadd.f32 %v2646, %v2731
      %2733 = vmatmul.f32.gmra.mxu0 %v2409
      %v2734 = vpop.f32.mrf.mxu0
      %v2735 = vadd.f32 %v2649, %v2734
      %2736 = vdwg.mxu0
      %v2760 = vrot.slane %v2669, 2
      %v2761 = vrot.slane %v2669, 4
      %v2762 = vrot.slane %v2669, 6
      %v2763 = vrot.slane %v2672, 2
      %v2764 = vrot.slane %v2672, 4
      %v2765 = vrot.slane %v2672, 6
      %v2766 = vrot.slane %v2675, 2
      %v2767 = vrot.slane %v2675, 4
      %v2768 = vrot.slane %v2675, 6
      %v2769 = vrot.slane %v2678, 2
      %v2770 = vrot.slane %v2678, 4
      %v2771 = vrot.slane %v2678, 6
      %v2772 = vrot.slane %v2681, 2
      %v2773 = vrot.slane %v2681, 4
      %v2774 = vrot.slane %v2681, 6
      %v2775 = vrot.slane %v2684, 2
      %v2776 = vrot.slane %v2684, 4
      %v2777 = vrot.slane %v2684, 6
      %v2778 = vrot.slane %v2687, 2
      %v2779 = vrot.slane %v2687, 4
      %v2780 = vrot.slane %v2687, 6
      %v2781 = vrot.slane %v2690, 2
      %v2782 = vrot.slane %v2690, 4
      %v2783 = vrot.slane %v2690, 6
      %v2784 = vrot.slane %v2693, 2
      %v2785 = vrot.slane %v2693, 4
      %v2786 = vrot.slane %v2693, 6
      %v2787 = vrot.slane %v2696, 2
      %v2788 = vrot.slane %v2696, 4
      %v2789 = vrot.slane %v2696, 6
      %v2790 = vrot.slane %v2699, 2
      %v2791 = vrot.slane %v2699, 4
      %v2792 = vrot.slane %v2699, 6
      %v2793 = vrot.slane %v2702, 2
      %v2794 = vrot.slane %v2702, 4
      %v2795 = vrot.slane %v2702, 6
      %v2796 = vrot.slane %v2705, 2
      %v2797 = vrot.slane %v2705, 4
      %v2798 = vrot.slane %v2705, 6
      %v2799 = vrot.slane %v2708, 2
      %v2800 = vrot.slane %v2708, 4
      %v2801 = vrot.slane %v2708, 6
      %v2802 = vrot.slane %v2711, 2
      %v2803 = vrot.slane %v2711, 4
      %v2804 = vrot.slane %v2711, 6
      %v2805 = vrot.slane %v2714, 2
      %v2806 = vrot.slane %v2714, 4
      %v2807 = vrot.slane %v2714, 6
      %v2808 = vrot.slane %v2717, 2
      %v2809 = vrot.slane %v2717, 4
      %v2810 = vrot.slane %v2717, 6
      %v2811 = vrot.slane %v2720, 2
      %v2812 = vrot.slane %v2720, 4
      %v2813 = vrot.slane %v2720, 6
      %v2814 = vrot.slane %v2723, 2
      %v2815 = vrot.slane %v2723, 4
      %v2816 = vrot.slane %v2723, 6
      %v2817 = vrot.slane %v2726, 2
      %v2818 = vrot.slane %v2726, 4
      %v2819 = vrot.slane %v2726, 6
      %v2820 = vrot.slane %v2729, 2
      %v2821 = vrot.slane %v2729, 4
      %v2822 = vrot.slane %v2729, 6
      %v2823 = vrot.slane %v2732, 2
      %v2824 = vrot.slane %v2732, 4
      %v2825 = vrot.slane %v2732, 6
      %v2826 = vrot.slane %v2735, 2
      %v2894 = vadd.f32 %v1940, %v2669
      %v2895 = vadd.f32 %v2031, %v2760
      %v2896 = vadd.f32 %v2032, %v2761
      %v2897 = vadd.f32 %v2033, %v2762
      %v2898 = vadd.f32 %v1943, %v2672
      %v2899 = vadd.f32 %v2034, %v2763
      %v2900 = vadd.f32 %v2035, %v2764
      %v2901 = vadd.f32 %v2036, %v2765
      %v2902 = vadd.f32 %v1946, %v2675
      %v2903 = vadd.f32 %v2037, %v2766
      %v2904 = vadd.f32 %v2038, %v2767
      %v2905 = vadd.f32 %v2039, %v2768
      %v2906 = vadd.f32 %v1949, %v2678
      %v2907 = vadd.f32 %v2040, %v2769
      %v2908 = vadd.f32 %v2041, %v2770
      %v2909 = vadd.f32 %v2042, %v2771
      %v2910 = vadd.f32 %v1952, %v2681
      %v2911 = vadd.f32 %v2043, %v2772
      %v2912 = vadd.f32 %v2044, %v2773
      %v2913 = vadd.f32 %v2045, %v2774
      %v2914 = vadd.f32 %v1955, %v2684
      %v2915 = vadd.f32 %v2046, %v2775
      %v2916 = vadd.f32 %v2047, %v2776
      %v2917 = vadd.f32 %v2048, %v2777
      %v2918 = vadd.f32 %v1958, %v2687
      %v2919 = vadd.f32 %v2049, %v2778
      %v2920 = vadd.f32 %v2050, %v2779
      %v2921 = vadd.f32 %v2051, %v2780
      %v2922 = vadd.f32 %v1961, %v2690
      %v2923 = vadd.f32 %v2052, %v2781
      %v2924 = vadd.f32 %v2053, %v2782
      %v2925 = vadd.f32 %v2054, %v2783
      %v2926 = vadd.f32 %v1964, %v2693
      %v2927 = vadd.f32 %v2055, %v2784
      %v2928 = vadd.f32 %v2056, %v2785
      %v2929 = vadd.f32 %v2057, %v2786
      %v2930 = vadd.f32 %v1967, %v2696
      %v2931 = vadd.f32 %v2058, %v2787
      %v2932 = vadd.f32 %v2059, %v2788
      %v2933 = vadd.f32 %v2060, %v2789
      %v2934 = vadd.f32 %v1970, %v2699
      %v2935 = vadd.f32 %v2061, %v2790
      %v2936 = vadd.f32 %v2062, %v2791
      %v2937 = vadd.f32 %v2063, %v2792
      %v2938 = vadd.f32 %v1973, %v2702
      %v2939 = vadd.f32 %v2064, %v2793
      %v2940 = vadd.f32 %v2065, %v2794
      %v2941 = vadd.f32 %v2066, %v2795
      %v2942 = vadd.f32 %v1976, %v2705
      %v2943 = vadd.f32 %v2067, %v2796
      %v2944 = vadd.f32 %v2068, %v2797
      %v2945 = vadd.f32 %v2069, %v2798
      %v2946 = vadd.f32 %v1979, %v2708
      %v2947 = vadd.f32 %v2070, %v2799
      %v2948 = vadd.f32 %v2071, %v2800
      %v2949 = vadd.f32 %v2072, %v2801
      %v2950 = vadd.f32 %v1982, %v2711
      %v2951 = vadd.f32 %v2073, %v2802
      %v2952 = vadd.f32 %v2074, %v2803
      %v2953 = vadd.f32 %v2075, %v2804
      %v2954 = vadd.f32 %v1985, %v2714
      %v2955 = vadd.f32 %v2076, %v2805
      %v2956 = vadd.f32 %v2077, %v2806
      %v2957 = vadd.f32 %v2078, %v2807
      %v2958 = vadd.f32 %v1988, %v2717
      %v2959 = vadd.f32 %v2079, %v2808
      %v2960 = vadd.f32 %v2080, %v2809
      %v2961 = vadd.f32 %v2081, %v2810
      %v2962 = vadd.f32 %v1991, %v2720
      %v2963 = vadd.f32 %v2082, %v2811
      %v2964 = vadd.f32 %v2083, %v2812
      %v2965 = vadd.f32 %v2084, %v2813
      %v2966 = vadd.f32 %v1994, %v2723
      %v2967 = vadd.f32 %v2085, %v2814
      %v2968 = vadd.f32 %v2086, %v2815
      %v2969 = vadd.f32 %v2087, %v2816
      %v2970 = vadd.f32 %v1997, %v2726
      %v2971 = vadd.f32 %v2088, %v2817
      %v2972 = vadd.f32 %v2089, %v2818
      %v2973 = vadd.f32 %v2090, %v2819
      %v2974 = vadd.f32 %v2000, %v2729
      %v2975 = vadd.f32 %v2091, %v2820
      %v2976 = vadd.f32 %v2092, %v2821
      %v2977 = vadd.f32 %v2093, %v2822
      %v2978 = vadd.f32 %v2003, %v2732
      %v2979 = vadd.f32 %v2094, %v2823
      %v2980 = vadd.f32 %v2095, %v2824
      %v2981 = vadd.f32 %v2096, %v2825
      %v2982 = vadd.f32 %v2006, %v2735
      %v2983 = vadd.f32 %v2097, %v2826
      %v2984 = vld [vmem:[%s3] sm:$0x1]
      %v2986 = vperm.slane %v2984, 0
      %v2988 = vrot.slane %v2986, 2
      %v2989 = vrot.slane %v2986, 4
      %v2990 = vrot.slane %v2986, 6
      %v2994 = vmul.f32 %v2894, %v2986
      %v2995 = vmul.f32 %v2895, %v2988
      %v2996 = vmul.f32 %v2896, %v2989
      %v2997 = vmul.f32 %v2897, %v2990
      %v2998 = vmul.f32 %v2898, %v2986
      %v2999 = vmul.f32 %v2899, %v2988
      %v3000 = vmul.f32 %v2900, %v2989
      %v3001 = vmul.f32 %v2901, %v2990
      %v3002 = vmul.f32 %v2902, %v2986
      %v3003 = vmul.f32 %v2903, %v2986
      %v3004 = vmul.f32 %v2904, %v2988
      %v3005 = vmul.f32 %v2905, %v2989
      %v3006 = vmul.f32 %v2906, %v2990
      %v3007 = vmul.f32 %v2907, %v2986
      %v3008 = vmul.f32 %v2908, %v2988
      %v3009 = vmul.f32 %v2909, %v2989
      %v3010 = vmul.f32 %v2910, %v2990
      %v3011 = vmul.f32 %v2911, %v2986
      %v3012 = vmul.f32 %v2912, %v2986
      %v3013 = vmul.f32 %v2913, %v2988
      %v3014 = vmul.f32 %v2914, %v2989
      %v3015 = vmul.f32 %v2915, %v2990
      %v3016 = vmul.f32 %v2916, %v2986
      %v3017 = vmul.f32 %v2917, %v2988
      %v3018 = vmul.f32 %v2918, %v2989
      %v3019 = vmul.f32 %v2919, %v2990
      %v3020 = vmul.f32 %v2920, %v2986
      %v3021 = vmul.f32 %v2921, %v2986
      %v3022 = vmul.f32 %v2922, %v2988
      %v3023 = vmul.f32 %v2923, %v2989
      %v3024 = vmul.f32 %v2924, %v2990
      %v3025 = vmul.f32 %v2925, %v2986
      %v3026 = vmul.f32 %v2926, %v2988
      %v3027 = vmul.f32 %v2927, %v2989
      %v3028 = vmul.f32 %v2928, %v2990
      %v3029 = vmul.f32 %v2929, %v2986
      %v3030 = vmul.f32 %v2930, %v2986
      %v3031 = vmul.f32 %v2931, %v2988
      %v3032 = vmul.f32 %v2932, %v2989
      %v3033 = vmul.f32 %v2933, %v2990
      %v3034 = vmul.f32 %v2934, %v2986
      %v3035 = vmul.f32 %v2935, %v2988
      %v3036 = vmul.f32 %v2936, %v2989
      %v3037 = vmul.f32 %v2937, %v2990
      %v3038 = vmul.f32 %v2938, %v2986
      %v3039 = vmul.f32 %v2939, %v2986
      %v3040 = vmul.f32 %v2940, %v2988
      %v3041 = vmul.f32 %v2941, %v2989
      %v3042 = vmul.f32 %v2942, %v2990
      %v3043 = vmul.f32 %v2943, %v2986
      %v3044 = vmul.f32 %v2944, %v2988
      %v3045 = vmul.f32 %v2945, %v2989
      %v3046 = vmul.f32 %v2946, %v2990
      %v3047 = vmul.f32 %v2947, %v2986
      %v3048 = vmul.f32 %v2948, %v2986
      %v3049 = vmul.f32 %v2949, %v2988
      %v3050 = vmul.f32 %v2950, %v2989
      %v3051 = vmul.f32 %v2951, %v2990
      %v3052 = vmul.f32 %v2952, %v2986
      %v3053 = vmul.f32 %v2953, %v2988
      %v3054 = vmul.f32 %v2954, %v2989
      %v3055 = vmul.f32 %v2955, %v2990
      %v3056 = vmul.f32 %v2956, %v2986
      %v3057 = vmul.f32 %v2957, %v2986
      %v3058 = vmul.f32 %v2958, %v2988
      %v3059 = vmul.f32 %v2959, %v2989
      %v3060 = vmul.f32 %v2960, %v2990
      %v3061 = vmul.f32 %v2961, %v2986
      %v3062 = vmul.f32 %v2962, %v2988
      %v3063 = vmul.f32 %v2963, %v2989
      %v3064 = vmul.f32 %v2964, %v2990
      %v3065 = vmul.f32 %v2965, %v2986
      %v3066 = vmul.f32 %v2966, %v2986
      %v3067 = vmul.f32 %v2967, %v2988
      %v3068 = vmul.f32 %v2968, %v2989
      %v3069 = vmul.f32 %v2969, %v2990
      %v3070 = vmul.f32 %v2970, %v2986
      %v3071 = vmul.f32 %v2971, %v2988
      %v3072 = vmul.f32 %v2972, %v2989
      %v3073 = vmul.f32 %v2973, %v2990
      %v3074 = vmul.f32 %v2974, %v2986
      %v3075 = vmul.f32 %v2975, %v2986
      %v3076 = vmul.f32 %v2976, %v2988
      %v3077 = vmul.f32 %v2977, %v2989
      %v3078 = vmul.f32 %v2978, %v2990
      %v3079 = vmul.f32 %v2979, %v2986
      %v3080 = vmul.f32 %v2980, %v2988
      %v3081 = vmul.f32 %v2981, %v2989
      %v3082 = vmul.f32 %v2982, %v2990
      %v3083 = vmul.f32 %v2983, %v2986
      %v3084 = vld [vmem:[%s4] sm:$0x1]
      %v3086 = vperm.slane %v3084, 0
      %v3088 = vrot.slane %v3086, 2
      %v3089 = vrot.slane %v3086, 4
      %v3090 = vrot.slane %v3086, 6
      %v3094 = vadd.f32 %v2994, %v3086
      %v3095 = vadd.f32 %v2995, %v3088
      %v3096 = vadd.f32 %v2996, %v3089
      %v3097 = vadd.f32 %v2997, %v3090
      %v3098 = vadd.f32 %v2998, %v3086
      %v3099 = vadd.f32 %v2999, %v3088
      %v3100 = vadd.f32 %v3000, %v3089
      %v3101 = vadd.f32 %v3001, %v3090
      %v3102 = vadd.f32 %v3002, %v3086
      %v3103 = vadd.f32 %v3003, %v3086
      %v3104 = vadd.f32 %v3004, %v3088
      %v3105 = vadd.f32 %v3005, %v3089
      %v3106 = vadd.f32 %v3006, %v3090
      %v3107 = vadd.f32 %v3007, %v3086
      %v3108 = vadd.f32 %v3008, %v3088
      %v3109 = vadd.f32 %v3009, %v3089
      %v3110 = vadd.f32 %v3010, %v3090
      %v3111 = vadd.f32 %v3011, %v3086
      %v3112 = vadd.f32 %v3012, %v3086
      %v3113 = vadd.f32 %v3013, %v3088
      %v3114 = vadd.f32 %v3014, %v3089
      %v3115 = vadd.f32 %v3015, %v3090
      %v3116 = vadd.f32 %v3016, %v3086
      %v3117 = vadd.f32 %v3017, %v3088
      %v3118 = vadd.f32 %v3018, %v3089
      %v3119 = vadd.f32 %v3019, %v3090
      %v3120 = vadd.f32 %v3020, %v3086
      %v3121 = vadd.f32 %v3021, %v3086
      %v3122 = vadd.f32 %v3022, %v3088
      %v3123 = vadd.f32 %v3023, %v3089
      %v3124 = vadd.f32 %v3024, %v3090
      %v3125 = vadd.f32 %v3025, %v3086
      %v3126 = vadd.f32 %v3026, %v3088
      %v3127 = vadd.f32 %v3027, %v3089
      %v3128 = vadd.f32 %v3028, %v3090
      %v3129 = vadd.f32 %v3029, %v3086
      %v3130 = vadd.f32 %v3030, %v3086
      %v3131 = vadd.f32 %v3031, %v3088
      %v3132 = vadd.f32 %v3032, %v3089
      %v3133 = vadd.f32 %v3033, %v3090
      %v3134 = vadd.f32 %v3034, %v3086
      %v3135 = vadd.f32 %v3035, %v3088
      %v3136 = vadd.f32 %v3036, %v3089
      %v3137 = vadd.f32 %v3037, %v3090
      %v3138 = vadd.f32 %v3038, %v3086
      %v3139 = vadd.f32 %v3039, %v3086
      %v3140 = vadd.f32 %v3040, %v3088
      %v3141 = vadd.f32 %v3041, %v3089
      %v3142 = vadd.f32 %v3042, %v3090
      %v3143 = vadd.f32 %v3043, %v3086
      %v3144 = vadd.f32 %v3044, %v3088
      %v3145 = vadd.f32 %v3045, %v3089
      %v3146 = vadd.f32 %v3046, %v3090
      %v3147 = vadd.f32 %v3047, %v3086
      %v3148 = vadd.f32 %v3048, %v3086
      %v3149 = vadd.f32 %v3049, %v3088
      %v3150 = vadd.f32 %v3050, %v3089
      %v3151 = vadd.f32 %v3051, %v3090
      %v3152 = vadd.f32 %v3052, %v3086
      %v3153 = vadd.f32 %v3053, %v3088
      %v3154 = vadd.f32 %v3054, %v3089
      %v3155 = vadd.f32 %v3055, %v3090
      %v3156 = vadd.f32 %v3056, %v3086
      %v3157 = vadd.f32 %v3057, %v3086
      %v3158 = vadd.f32 %v3058, %v3088
      %v3159 = vadd.f32 %v3059, %v3089
      %v3160 = vadd.f32 %v3060, %v3090
      %v3161 = vadd.f32 %v3061, %v3086
      %v3162 = vadd.f32 %v3062, %v3088
      %v3163 = vadd.f32 %v3063, %v3089
      %v3164 = vadd.f32 %v3064, %v3090
      %v3165 = vadd.f32 %v3065, %v3086
      %v3166 = vadd.f32 %v3066, %v3086
      %v3167 = vadd.f32 %v3067, %v3088
      %v3168 = vadd.f32 %v3068, %v3089
      %v3169 = vadd.f32 %v3069, %v3090
      %v3170 = vadd.f32 %v3070, %v3086
      %v3171 = vadd.f32 %v3071, %v3088
      %v3172 = vadd.f32 %v3072, %v3089
      %v3173 = vadd.f32 %v3073, %v3090
      %v3174 = vadd.f32 %v3074, %v3086
      %v3175 = vadd.f32 %v3075, %v3086
      %v3176 = vadd.f32 %v3076, %v3088
      %v3177 = vadd.f32 %v3077, %v3089
      %v3178 = vadd.f32 %v3078, %v3090
      %v3179 = vadd.f32 %v3079, %v3086
      %v3180 = vadd.f32 %v3080, %v3088
      %v3181 = vadd.f32 %v3081, %v3089
      %v3182 = vadd.f32 %v3082, %v3090
      %v3183 = vadd.f32 %v3083, %v3086
      %v3184 = vmax.f32 %v3094, 0.0
      %v3185 = vmax.f32 %v3095, 0.0
      %v3186 = vmax.f32 %v3096, 0.0
      %v3187 = vmax.f32 %v3097, 0.0
      %v3188 = vmax.f32 %v3098, 0.0
      %v3189 = vmax.f32 %v3099, 0.0
      %v3190 = vmax.f32 %v3100, 0.0
      %v3191 = vmax.f32 %v3101, 0.0
      %v3192 = vmax.f32 %v3102, 0.0
      %v3193 = vmax.f32 %v3103, 0.0
      %v3194 = vmax.f32 %v3104, 0.0
      %v3195 = vmax.f32 %v3105, 0.0
      %v3196 = vmax.f32 %v3106, 0.0
      %v3197 = vmax.f32 %v3107, 0.0
      %v3198 = vmax.f32 %v3108, 0.0
      %v3199 = vmax.f32 %v3109, 0.0
      %v3200 = vmax.f32 %v3110, 0.0
      %v3201 = vmax.f32 %v3111, 0.0
      %v3202 = vmax.f32 %v3112, 0.0
      %v3203 = vmax.f32 %v3113, 0.0
      %v3204 = vmax.f32 %v3114, 0.0
      %v3205 = vmax.f32 %v3115, 0.0
      %v3206 = vmax.f32 %v3116, 0.0
      %v3207 = vmax.f32 %v3117, 0.0
      %v3208 = vmax.f32 %v3118, 0.0
      %v3209 = vmax.f32 %v3119, 0.0
      %v3210 = vmax.f32 %v3120, 0.0
      %v3211 = vmax.f32 %v3121, 0.0
      %v3212 = vmax.f32 %v3122, 0.0
      %v3213 = vmax.f32 %v3123, 0.0
      %v3214 = vmax.f32 %v3124, 0.0
      %v3215 = vmax.f32 %v3125, 0.0
      %v3216 = vmax.f32 %v3126, 0.0
      %v3217 = vmax.f32 %v3127, 0.0
      %v3218 = vmax.f32 %v3128, 0.0
      %v3219 = vmax.f32 %v3129, 0.0
      %v3220 = vmax.f32 %v3130, 0.0
      %v3221 = vmax.f32 %v3131, 0.0
      %v3222 = vmax.f32 %v3132, 0.0
      %v3223 = vmax.f32 %v3133, 0.0
      %v3224 = vmax.f32 %v3134, 0.0
      %v3225 = vmax.f32 %v3135, 0.0
      %v3226 = vmax.f32 %v3136, 0.0
      %v3227 = vmax.f32 %v3137, 0.0
      %v3228 = vmax.f32 %v3138, 0.0
      %v3229 = vmax.f32 %v3139, 0.0
      %v3230 = vmax.f32 %v3140, 0.0
      %v3231 = vmax.f32 %v3141, 0.0
      %v3232 = vmax.f32 %v3142, 0.0
      %v3233 = vmax.f32 %v3143, 0.0
      %v3234 = vmax.f32 %v3144, 0.0
      %v3235 = vmax.f32 %v3145, 0.0
      %v3236 = vmax.f32 %v3146, 0.0
      %v3237 = vmax.f32 %v3147, 0.0
      %v3238 = vmax.f32 %v3148, 0.0
      %v3239 = vmax.f32 %v3149, 0.0
      %v3240 = vmax.f32 %v3150, 0.0
      %v3241 = vmax.f32 %v3151, 0.0
      %v3242 = vmax.f32 %v3152, 0.0
      %v3243 = vmax.f32 %v3153, 0.0
      %v3244 = vmax.f32 %v3154, 0.0
      %v3245 = vmax.f32 %v3155, 0.0
      %v3246 = vmax.f32 %v3156, 0.0
      %v3247 = vmax.f32 %v3157, 0.0
      %v3248 = vmax.f32 %v3158, 0.0
      %v3249 = vmax.f32 %v3159, 0.0
      %v3250 = vmax.f32 %v3160, 0.0
      %v3251 = vmax.f32 %v3161, 0.0
      %v3252 = vmax.f32 %v3162, 0.0
      %v3253 = vmax.f32 %v3163, 0.0
      %v3254 = vmax.f32 %v3164, 0.0
      %v3255 = vmax.f32 %v3165, 0.0
      %v3256 = vmax.f32 %v3166, 0.0
      %v3257 = vmax.f32 %v3167, 0.0
      %v3258 = vmax.f32 %v3168, 0.0
      %v3259 = vmax.f32 %v3169, 0.0
      %v3260 = vmax.f32 %v3170, 0.0
      %v3261 = vmax.f32 %v3171, 0.0
      %v3262 = vmax.f32 %v3172, 0.0
      %v3263 = vmax.f32 %v3173, 0.0
      %v3264 = vmax.f32 %v3174, 0.0
      %v3265 = vmax.f32 %v3175, 0.0
      %v3266 = vmax.f32 %v3176, 0.0
      %v3267 = vmax.f32 %v3177, 0.0
      %v3268 = vmax.f32 %v3178, 0.0
      %v3269 = vmax.f32 %v3179, 0.0
      %v3270 = vmax.f32 %v3180, 0.0
      %v3271 = vmax.f32 %v3181, 0.0
      %v3272 = vmax.f32 %v3182, 0.0
      %v3273 = vmax.f32 %v3183, 0.0
      %v3274 = vlaneseq
      %v3275 = vshrl.u32 %v3274, 7
      %v3276 = vadd.s32 %v3275, 8
      %v3277 = vadd.s32 %v3275, 16
      %s3278 = smul.u32 %s24, 8
      %v3279 = vstv %s3278
      %v3280 = vadd.s32 %v3279, 2
      %v3281 = vadd.s32 %v3279, 3
      %v3282 = vadd.s32 %v3279, 4
      %v3283 = vadd.s32 %v3279, 5
      %v3284 = vadd.s32 %v3279, 6
      %v3285 = vadd.s32 %v3279, 7
      %v3286 = vadd.s32 %v3279, 8
      %v3287 = vadd.s32 %v3279, 9
      %v3288 = vsub.s32 %v3279, 1
      %v3289 = vsub.s32 %v3280, 1
      %v3290 = vsub.s32 %v3281, 1
      %v3291 = vsub.s32 %v3282, 1
      %v3292 = vsub.s32 %v3283, 1
      %v3293 = vsub.s32 %v3284, 1
      %v3294 = vsub.s32 %v3285, 1
      %v3295 = vsub.s32 %v3286, 1
      %v3296 = vsub.s32 %v3287, 1
      %vm3297 = vcmp.ge.s32.totalorder %v3288, 0
      %vm3298 = vcmp.ge.s32.totalorder %v3279, 0
      %vm3299 = vcmp.ge.s32.totalorder %v3289, 0
      %vm3300 = vcmp.ge.s32.totalorder %v3290, 0
      %vm3301 = vcmp.ge.s32.totalorder %v3291, 0
      %vm3302 = vcmp.ge.s32.totalorder %v3292, 0
      %vm3303 = vcmp.ge.s32.totalorder %v3293, 0
      %vm3304 = vcmp.ge.s32.totalorder %v3294, 0
      %vm3305 = vcmp.ge.s32.totalorder %v3295, 0
      %vm3306 = vcmp.ge.s32.totalorder %v3296, 0
      %vm3307 = vcmp.lt.s32.totalorder %v3288, 16
      %vm3308 = vcmp.lt.s32.totalorder %v3279, 16
      %vm3309 = vcmp.lt.s32.totalorder %v3289, 16
      %vm3310 = vcmp.lt.s32.totalorder %v3290, 16
      %vm3311 = vcmp.lt.s32.totalorder %v3291, 16
      %vm3312 = vcmp.lt.s32.totalorder %v3292, 16
      %vm3313 = vcmp.lt.s32.totalorder %v3293, 16
      %vm3314 = vcmp.lt.s32.totalorder %v3294, 16
      %vm3315 = vcmp.lt.s32.totalorder %v3295, 16
      %vm3316 = vcmp.lt.s32.totalorder %v3296, 16
      %vm3317 = vmand %vm3297, %vm3307
      %vm3318 = vmand %vm3298, %vm3308
      %vm3319 = vmand %vm3299, %vm3309
      %vm3320 = vmand %vm3300, %vm3310
      %vm3321 = vmand %vm3301, %vm3311
      %vm3322 = vmand %vm3302, %vm3312
      %vm3323 = vmand %vm3303, %vm3313
      %vm3324 = vmand %vm3304, %vm3314
      %vm3325 = vmand %vm3305, %vm3315
      %vm3326 = vmand %vm3306, %vm3316
      %vm3327 = vcmp.ge.s32.totalorder %v3275, 1
      %vm3328 = vcmp.ge.s32.totalorder %v3276, 1
      %vm3329 = vcmp.ge.s32.totalorder %v3277, 1
      %vm3330 = vmand %vm3317, %vm3327
      %vm3331 = vmand %vm3317, %vm3328
      %vm3332 = vmand %vm3317, %vm3329
      %vm3333 = vmand %vm3318, %vm3327
      %vm3334 = vmand %vm3318, %vm3328
      %vm3335 = vmand %vm3318, %vm3329
      %vm3336 = vmand %vm3319, %vm3327
      %vm3337 = vmand %vm3319, %vm3328
      %vm3338 = vmand %vm3319, %vm3329
      %vm3339 = vmand %vm3320, %vm3327
      %vm3340 = vmand %vm3320, %vm3328
      %vm3341 = vmand %vm3320, %vm3329
      %vm3342 = vmand %vm3321, %vm3327
      %vm3343 = vmand %vm3321, %vm3328
      %vm3344 = vmand %vm3321, %vm3329
      %vm3345 = vmand %vm3322, %vm3327
      %vm3346 = vmand %vm3322, %vm3328
      %vm3347 = vmand %vm3322, %vm3329
      %vm3348 = vmand %vm3323, %vm3327
      %vm3349 = vmand %vm3323, %vm3328
      %vm3350 = vmand %vm3323, %vm3329
      %vm3351 = vmand %vm3324, %vm3327
      %vm3352 = vmand %vm3324, %vm3328
      %vm3353 = vmand %vm3324, %vm3329
      %vm3354 = vmand %vm3325, %vm3327
      %vm3355 = vmand %vm3325, %vm3328
      %vm3356 = vmand %vm3325, %vm3329
      %vm3357 = vmand %vm3326, %vm3327
      %vm3358 = vmand %vm3326, %vm3328
      %vm3359 = vmand %vm3326, %vm3329
      %vm3360 = vcmp.le.s32.totalorder %v3275, 16
      %vm3361 = vcmp.le.s32.totalorder %v3276, 16
      %vm3362 = vcmp.le.s32.totalorder %v3277, 16
      %vm3363 = vmand %vm3330, %vm3360
      %vm3364 = vmand %vm3331, %vm3361
      %vm3365 = vmand %vm3332, %vm3362
      %vm3366 = vmand %vm3333, %vm3360
      %vm3367 = vmand %vm3334, %vm3361
      %vm3368 = vmand %vm3335, %vm3362
      %vm3369 = vmand %vm3336, %vm3360
      %vm3370 = vmand %vm3337, %vm3361
      %vm3371 = vmand %vm3338, %vm3362
      %vm3372 = vmand %vm3339, %vm3360
      %vm3373 = vmand %vm3340, %vm3361
      %vm3374 = vmand %vm3341, %vm3362
      %vm3375 = vmand %vm3342, %vm3360
      %vm3376 = vmand %vm3343, %vm3361
      %vm3377 = vmand %vm3344, %vm3362
      %vm3378 = vmand %vm3345, %vm3360
      %vm3379 = vmand %vm3346, %vm3361
      %vm3380 = vmand %vm3347, %vm3362
      %vm3381 = vmand %vm3348, %vm3360
      %vm3382 = vmand %vm3349, %vm3361
      %vm3383 = vmand %vm3350, %vm3362
      %vm3384 = vmand %vm3351, %vm3360
      %vm3385 = vmand %vm3352, %vm3361
      %vm3386 = vmand %vm3353, %vm3362
      %vm3387 = vmand %vm3354, %vm3360
      %vm3388 = vmand %vm3355, %vm3361
      %vm3389 = vmand %vm3356, %vm3362
      %vm3390 = vmand %vm3357, %vm3360
      %vm3391 = vmand %vm3358, %vm3361
      %vm3392 = vmand %vm3359, %vm3362
      %3483 = vst [vmem:[#allocation1] ss:$4 sm:$0xff] %v3184
      %s3484 = scalar_lea.vmem [#allocation1], 1
      %3485 = vst [vmem:[%s3484] ss:$4 sm:$0xff] %v3185
      %s3486 = scalar_lea.vmem [#allocation1], 2
      %3487 = vst [vmem:[%s3486] ss:$4 sm:$0xff] %v3186
      %s3488 = scalar_lea.vmem [#allocation1], 3
      %3489 = vst [vmem:[%s3488] ss:$4 sm:$0xff] %v3187
      %s3490 = scalar_lea.vmem [#allocation1], 32
      %3491 = vst [vmem:[%s3490] ss:$4 sm:$0xff] %v3188
      %s3492 = scalar_lea.vmem [#allocation1], 33
      %3493 = vst [vmem:[%s3492] ss:$4 sm:$0xff] %v3189
      %s3494 = scalar_lea.vmem [#allocation1], 34
      %3495 = vst [vmem:[%s3494] ss:$4 sm:$0xff] %v3190
      %s3496 = scalar_lea.vmem [#allocation1], 35
      %3497 = vst [vmem:[%s3496] ss:$4 sm:$0xff] %v3191
      %v3498 = vld.sshfl [vmem:[#allocation1] sm:$0xff pattern:$0x73625140]
      %v3499 = vld.sshfl [vmem:[#allocation1 + $0x20] sm:$0xff pattern:$0x73625140]
      %3500 = vst [vmem:[#allocation1] ss:$4 sm:$0xff] %v3192
      %v3501 = vld.sshfl [vmem:[#allocation1] sm:$0xff pattern:$0x73625140]
      %3502 = vst [vmem:[%s3490] ss:$4 sm:$0xff] %v3193
      %3503 = vst [vmem:[%s3492] ss:$4 sm:$0xff] %v3194
      %3504 = vst [vmem:[%s3494] ss:$4 sm:$0xff] %v3195
      %3505 = vst [vmem:[%s3496] ss:$4 sm:$0xff] %v3196
      %v3506 = vld.sshfl [vmem:[#allocation1 + $0x20] sm:$0xff pattern:$0x73625140]
      %3507 = vst [vmem:[#allocation1] ss:$4 sm:$0xff] %v3197
      %3508 = vst [vmem:[%s3484] ss:$4 sm:$0xff] %v3198
      %3509 = vst [vmem:[%s3486] ss:$4 sm:$0xff] %v3199
      %3510 = vst [vmem:[%s3488] ss:$4 sm:$0xff] %v3200
      %3511 = vst [vmem:[%s3490] ss:$4 sm:$0xff] %v3201
      %v3512 = vld.sshfl [vmem:[#allocation1] sm:$0xff pattern:$0x73625140]
      %v3513 = vld.sshfl [vmem:[#allocation1 + $0x20] sm:$0xff pattern:$0x73625140]
      %3514 = vst [vmem:[#allocation1] ss:$4 sm:$0xff] %v3202
      %3515 = vst [vmem:[%s3484] ss:$4 sm:$0xff] %v3203
      %3516 = vst [vmem:[%s3486] ss:$4 sm:$0xff] %v3204
      %3517 = vst [vmem:[%s3488] ss:$4 sm:$0xff] %v3205
      %3518 = vst [vmem:[%s3490] ss:$4 sm:$0xff] %v3206
      %3519 = vst [vmem:[%s3492] ss:$4 sm:$0xff] %v3207
      %3520 = vst [vmem:[%s3494] ss:$4 sm:$0xff] %v3208
      %3521 = vst [vmem:[%s3496] ss:$4 sm:$0xff] %v3209
      %v3522 = vld.sshfl [vmem:[#allocation1] sm:$0xff pattern:$0x73625140]
      %v3523 = vld.sshfl [vmem:[#allocation1 + $0x20] sm:$0xff pattern:$0x73625140]
      %3524 = vst [vmem:[#allocation1] ss:$4 sm:$0xff] %v3210
      %v3525 = vld.sshfl [vmem:[#allocation1] sm:$0xff pattern:$0x73625140]
      %3526 = vst [vmem:[%s3490] ss:$4 sm:$0xff] %v3211
      %3527 = vst [vmem:[%s3492] ss:$4 sm:$0xff] %v3212
      %3528 = vst [vmem:[%s3494] ss:$4 sm:$0xff] %v3213
      %3529 = vst [vmem:[%s3496] ss:$4 sm:$0xff] %v3214
      %v3530 = vld.sshfl [vmem:[#allocation1 + $0x20] sm:$0xff pattern:$0x73625140]
      %3531 = vst [vmem:[#allocation1] ss:$4 sm:$0xff] %v3215
      %3532 = vst [vmem:[%s3484] ss:$4 sm:$0xff] %v3216
      %3533 = vst [vmem:[%s3486] ss:$4 sm:$0xff] %v3217
      %3534 = vst [vmem:[%s3488] ss:$4 sm:$0xff] %v3218
      %3535 = vst [vmem:[%s3490] ss:$4 sm:$0xff] %v3219
      %v3536 = vld.sshfl [vmem:[#allocation1] sm:$0xff pattern:$0x73625140]
      %v3537 = vld.sshfl [vmem:[#allocation1 + $0x20] sm:$0xff pattern:$0x73625140]
      %3538 = vst [vmem:[#allocation1] ss:$4 sm:$0xff] %v3220
      %3539 = vst [vmem:[%s3484] ss:$4 sm:$0xff] %v3221
      %3540 = vst [vmem:[%s3486] ss:$4 sm:$0xff] %v3222
      %3541 = vst [vmem:[%s3488] ss:$4 sm:$0xff] %v3223
      %3542 = vst [vmem:[%s3490] ss:$4 sm:$0xff] %v3224
      %3543 = vst [vmem:[%s3492] ss:$4 sm:$0xff] %v3225
      %3544 = vst [vmem:[%s3494] ss:$4 sm:$0xff] %v3226
      %3545 = vst [vmem:[%s3496] ss:$4 sm:$0xff] %v3227
      %v3546 = vld.sshfl [vmem:[#allocation1] sm:$0xff pattern:$0x73625140]
      %v3547 = vld.sshfl [vmem:[#allocation1 + $0x20] sm:$0xff pattern:$0x73625140]
      %3548 = vst [vmem:[#allocation1] ss:$4 sm:$0xff] %v3228
      %v3549 = vld.sshfl [vmem:[#allocation1] sm:$0xff pattern:$0x73625140]
      %3550 = vst [vmem:[%s3490] ss:$4 sm:$0xff] %v3229
      %3551 = vst [vmem:[%s3492] ss:$4 sm:$0xff] %v3230
      %3552 = vst [vmem:[%s3494] ss:$4 sm:$0xff] %v3231
      %3553 = vst [vmem:[%s3496] ss:$4 sm:$0xff] %v3232
      %v3554 = vld.sshfl [vmem:[#allocation1 + $0x20] sm:$0xff pattern:$0x73625140]
      %3555 = vst [vmem:[#allocation1] ss:$4 sm:$0xff] %v3233
      %3556 = vst [vmem:[%s3484] ss:$4 sm:$0xff] %v3234
      %3557 = vst [vmem:[%s3486] ss:$4 sm:$0xff] %v3235
      %3558 = vst [vmem:[%s3488] ss:$4 sm:$0xff] %v3236
      %3559 = vst [vmem:[%s3490] ss:$4 sm:$0xff] %v3237
      %v3560 = vld.sshfl [vmem:[#allocation1] sm:$0xff pattern:$0x73625140]
      %v3561 = vld.sshfl [vmem:[#allocation1 + $0x20] sm:$0xff pattern:$0x73625140]
      %3562 = vst [vmem:[#allocation1] ss:$4 sm:$0xff] %v3238
      %3563 = vst [vmem:[%s3484] ss:$4 sm:$0xff] %v3239
      %3564 = vst [vmem:[%s3486] ss:$4 sm:$0xff] %v3240
      %3565 = vst [vmem:[%s3488] ss:$4 sm:$0xff] %v3241
      %3566 = vst [vmem:[%s3490] ss:$4 sm:$0xff] %v3242
      %3567 = vst [vmem:[%s3492] ss:$4 sm:$0xff] %v3243
      %3568 = vst [vmem:[%s3494] ss:$4 sm:$0xff] %v3244
      %3569 = vst [vmem:[%s3496] ss:$4 sm:$0xff] %v3245
      %v3570 = vld.sshfl [vmem:[#allocation1] sm:$0xff pattern:$0x73625140]
      %v3571 = vld.sshfl [vmem:[#allocation1 + $0x20] sm:$0xff pattern:$0x73625140]
      %3572 = vst [vmem:[#allocation1] ss:$4 sm:$0xff] %v3246
      %v3573 = vld.sshfl [vmem:[#allocation1] sm:$0xff pattern:$0x73625140]
      %3574 = vst [vmem:[%s3490] ss:$4 sm:$0xff] %v3247
      %3575 = vst [vmem:[%s3492] ss:$4 sm:$0xff] %v3248
      %3576 = vst [vmem:[%s3494] ss:$4 sm:$0xff] %v3249
      %3577 = vst [vmem:[%s3496] ss:$4 sm:$0xff] %v3250
      %v3578 = vld.sshfl [vmem:[#allocation1 + $0x20] sm:$0xff pattern:$0x73625140]
      %3579 = vst [vmem:[#allocation1] ss:$4 sm:$0xff] %v3251
      %3580 = vst [vmem:[%s3484] ss:$4 sm:$0xff] %v3252
      %3581 = vst [vmem:[%s3486] ss:$4 sm:$0xff] %v3253
      %3582 = vst [vmem:[%s3488] ss:$4 sm:$0xff] %v3254
      %3583 = vst [vmem:[%s3490] ss:$4 sm:$0xff] %v3255
      %v3584 = vld.sshfl [vmem:[#allocation1] sm:$0xff pattern:$0x73625140]
      %v3585 = vld.sshfl [vmem:[#allocation1 + $0x20] sm:$0xff pattern:$0x73625140]
      %3586 = vst [vmem:[#allocation1] ss:$4 sm:$0xff] %v3256
      %3587 = vst [vmem:[%s3484] ss:$4 sm:$0xff] %v3257
      %3588 = vst [vmem:[%s3486] ss:$4 sm:$0xff] %v3258
      %3589 = vst [vmem:[%s3488] ss:$4 sm:$0xff] %v3259
      %3590 = vst [vmem:[%s3490] ss:$4 sm:$0xff] %v3260
      %3591 = vst [vmem:[%s3492] ss:$4 sm:$0xff] %v3261
      %3592 = vst [vmem:[%s3494] ss:$4 sm:$0xff] %v3262
      %3593 = vst [vmem:[%s3496] ss:$4 sm:$0xff] %v3263
      %v3594 = vld.sshfl [vmem:[#allocation1] sm:$0xff pattern:$0x73625140]
      %v3595 = vld.sshfl [vmem:[#allocation1 + $0x20] sm:$0xff pattern:$0x73625140]
      %3596 = vst [vmem:[#allocation1] ss:$4 sm:$0xff] %v3264
      %v3597 = vld.sshfl [vmem:[#allocation1] sm:$0xff pattern:$0x73625140]
      %3598 = vst [vmem:[%s3490] ss:$4 sm:$0xff] %v3265
      %3599 = vst [vmem:[%s3492] ss:$4 sm:$0xff] %v3266
      %3600 = vst [vmem:[%s3494] ss:$4 sm:$0xff] %v3267
      %3601 = vst [vmem:[%s3496] ss:$4 sm:$0xff] %v3268
      %v3602 = vld.sshfl [vmem:[#allocation1 + $0x20] sm:$0xff pattern:$0x73625140]
      %3603 = vst [vmem:[#allocation1] ss:$4 sm:$0xff] %v3269
      %3604 = vst [vmem:[%s3484] ss:$4 sm:$0xff] %v3270
      %3605 = vst [vmem:[%s3486] ss:$4 sm:$0xff] %v3271
      %3606 = vst [vmem:[%s3488] ss:$4 sm:$0xff] %v3272
      %3607 = vst [vmem:[%s3490] ss:$4 sm:$0xff] %v3273
      %v3608 = vld.sshfl [vmem:[#allocation1] sm:$0xff pattern:$0x73625140]
      %v3609 = vld.sshfl [vmem:[#allocation1 + $0x20] sm:$0xff pattern:$0x73625140]
      %v3640 = vsel %vm3363, %v3498, 0.0
      %v3641 = vsel %vm3364, %v3499, 0.0
      %v3642 = vsel %vm3365, %v3501, 0.0
      %v3643 = vsel %vm3366, %v3506, 0.0
      %v3644 = vsel %vm3367, %v3512, 0.0
      %v3645 = vsel %vm3368, %v3513, 0.0
      %v3646 = vsel %vm3369, %v3522, 0.0
      %v3647 = vsel %vm3370, %v3523, 0.0
      %v3648 = vsel %vm3371, %v3525, 0.0
      %v3649 = vsel %vm3372, %v3530, 0.0
      %v3650 = vsel %vm3373, %v3536, 0.0
      %v3651 = vsel %vm3374, %v3537, 0.0
      %v3652 = vsel %vm3375, %v3546, 0.0
      %v3653 = vsel %vm3376, %v3547, 0.0
      %v3654 = vsel %vm3377, %v3549, 0.0
      %v3655 = vsel %vm3378, %v3554, 0.0
      %v3656 = vsel %vm3379, %v3560, 0.0
      %v3657 = vsel %vm3380, %v3561, 0.0
      %v3658 = vsel %vm3381, %v3570, 0.0
      %v3659 = vsel %vm3382, %v3571, 0.0
      %v3660 = vsel %vm3383, %v3573, 0.0
      %v3661 = vsel %vm3384, %v3578, 0.0
      %v3662 = vsel %vm3385, %v3584, 0.0
      %v3663 = vsel %vm3386, %v3585, 0.0
      %v3664 = vsel %vm3387, %v3594, 0.0
      %v3665 = vsel %vm3388, %v3595, 0.0
      %v3666 = vsel %vm3389, %v3597, 0.0
      %v3667 = vsel %vm3390, %v3602, 0.0
      %v3668 = vsel %vm3391, %v3608, 0.0
      %v3669 = vsel %vm3392, %v3609, 0.0
      %3670 = vst [vmem:[#allocation2] sm:$0xff] %v3640
      %3671 = vst [vmem:[#allocation2 + $0x8] sm:$0xff] %v3641
      %3672 = vst [vmem:[#allocation2 + $0x10] sm:$0x3] %v3642
      %3673 = vst [vmem:[#allocation2 + $0x18] sm:$0xff] %v3643
      %3674 = vst [vmem:[#allocation2 + $0x20] sm:$0xff] %v3644
      %3675 = vst [vmem:[#allocation2 + $0x28] sm:$0x3] %v3645
      %3676 = vst [vmem:[#allocation2 + $0x30] sm:$0xff] %v3646
      %3677 = vst [vmem:[#allocation2 + $0x38] sm:$0xff] %v3647
      %3678 = vst [vmem:[#allocation2 + $0x40] sm:$0x3] %v3648
      %3679 = vst [vmem:[#allocation2 + $0x48] sm:$0xff] %v3649
      %3680 = vst [vmem:[#allocation2 + $0x50] sm:$0xff] %v3650
      %3681 = vst [vmem:[#allocation2 + $0x58] sm:$0x3] %v3651
      %3682 = vst [vmem:[#allocation2 + $0x60] sm:$0xff] %v3652
      %3683 = vst [vmem:[#allocation2 + $0x68] sm:$0xff] %v3653
      %3684 = vst [vmem:[#allocation2 + $0x70] sm:$0x3] %v3654
      %3685 = vst [vmem:[#allocation2 + $0x78] sm:$0xff] %v3655
      %3686 = vst [vmem:[#allocation2 + $0x80] sm:$0xff] %v3656
      %3687 = vst [vmem:[#allocation2 + $0x88] sm:$0x3] %v3657
      %3688 = vst [vmem:[#allocation2 + $0x90] sm:$0xff] %v3658
      %3689 = vst [vmem:[#allocation2 + $0x98] sm:$0xff] %v3659
      %3690 = vst [vmem:[#allocation2 + $0xa0] sm:$0x3] %v3660
      %3691 = vst [vmem:[#allocation2 + $0xa8] sm:$0xff] %v3661
      %3692 = vst [vmem:[#allocation2 + $0xb0] sm:$0xff] %v3662
      %3693 = vst [vmem:[#allocation2 + $0xb8] sm:$0x3] %v3663
      %3694 = vst [vmem:[#allocation2 + $0xc0] sm:$0xff] %v3664
      %3695 = vst [vmem:[#allocation2 + $0xc8] sm:$0xff] %v3665
      %3696 = vst [vmem:[#allocation2 + $0xd0] sm:$0x3] %v3666
      %3697 = vst [vmem:[#allocation2 + $0xd8] sm:$0xff] %v3667
      %3698 = vst [vmem:[#allocation2 + $0xe0] sm:$0xff] %v3668
      %3699 = vst [vmem:[#allocation2 + $0xe8] sm:$0x3] %v3669
      %v3700 = vld [vmem:[#allocation2] sm:$0xff]
      %v3701 = vld [vmem:[#allocation2 + $0x8] sm:$0xff]
      %v3702 = vld [vmem:[#allocation2 + $0x18] sm:$0xff]
      %v3703 = vld [vmem:[#allocation2 + $0x20] sm:$0xff]
      %v3704 = vld [vmem:[#allocation2 + $0x30] sm:$0xff]
      %v3705 = vld [vmem:[#allocation2 + $0x38] sm:$0xff]
      %v3706 = vld [vmem:[#allocation2 + $0x48] sm:$0xff]
      %v3707 = vld [vmem:[#allocation2 + $0x50] sm:$0xff]
      %v3708 = vld [vmem:[#allocation2 + $0x60] sm:$0xff]
      %v3709 = vld [vmem:[#allocation2 + $0x68] sm:$0xff]
      %v3710 = vld [vmem:[#allocation2 + $0x78] sm:$0xff]
      %v3711 = vld [vmem:[#allocation2 + $0x80] sm:$0xff]
      %v3712 = vld [vmem:[#allocation2 + $0x90] sm:$0xff]
      %v3713 = vld [vmem:[#allocation2 + $0x98] sm:$0xff]
      %v3714 = vld [vmem:[#allocation2 + $0xa8] sm:$0xff]
      %v3715 = vld [vmem:[#allocation2 + $0xb0] sm:$0xff]
      %v3716 = vld [vmem:[#allocation2 + $0xc0] sm:$0xff]
      %v3717 = vld [vmem:[#allocation2 + $0xc8] sm:$0xff]
      %v3718 = vld [vmem:[#allocation2 + $0xd8] sm:$0xff]
      %v3719 = vld [vmem:[#allocation2 + $0xe0] sm:$0xff]
      %v3720 = vld [vmem:[#allocation2 + $0x1] sm:$0xff]
      %v3721 = vld [vmem:[#allocation2 + $0x9] sm:$0xff]
      %v3722 = vld [vmem:[#allocation2 + $0x19] sm:$0xff]
      %v3723 = vld [vmem:[#allocation2 + $0x21] sm:$0xff]
      %v3724 = vld [vmem:[#allocation2 + $0x31] sm:$0xff]
      %v3725 = vld [vmem:[#allocation2 + $0x39] sm:$0xff]
      %v3726 = vld [vmem:[#allocation2 + $0x49] sm:$0xff]
      %v3727 = vld [vmem:[#allocation2 + $0x51] sm:$0xff]
      %v3728 = vld [vmem:[#allocation2 + $0x61] sm:$0xff]
      %v3729 = vld [vmem:[#allocation2 + $0x69] sm:$0xff]
      %v3730 = vld [vmem:[#allocation2 + $0x79] sm:$0xff]
      %v3731 = vld [vmem:[#allocation2 + $0x81] sm:$0xff]
      %v3732 = vld [vmem:[#allocation2 + $0x91] sm:$0xff]
      %v3733 = vld [vmem:[#allocation2 + $0x99] sm:$0xff]
      %v3734 = vld [vmem:[#allocation2 + $0xa9] sm:$0xff]
      %v3735 = vld [vmem:[#allocation2 + $0xb1] sm:$0xff]
      %v3736 = vld [vmem:[#allocation2 + $0xc1] sm:$0xff]
      %v3737 = vld [vmem:[#allocation2 + $0xc9] sm:$0xff]
      %v3738 = vld [vmem:[#allocation2 + $0xd9] sm:$0xff]
      %v3739 = vld [vmem:[#allocation2 + $0xe1] sm:$0xff]
      %v3740 = vld [vmem:[#allocation2 + $0x2] sm:$0xff]
      %v3741 = vld [vmem:[#allocation2 + $0xa] sm:$0xff]
      %v3742 = vld [vmem:[#allocation2 + $0x1a] sm:$0xff]
      %v3743 = vld [vmem:[#allocation2 + $0x22] sm:$0xff]
      %v3744 = vld [vmem:[#allocation2 + $0x32] sm:$0xff]
      %v3745 = vld [vmem:[#allocation2 + $0x3a] sm:$0xff]
      %v3746 = vld [vmem:[#allocation2 + $0x4a] sm:$0xff]
      %v3747 = vld [vmem:[#allocation2 + $0x52] sm:$0xff]
      %v3748 = vld [vmem:[#allocation2 + $0x62] sm:$0xff]
      %v3749 = vld [vmem:[#allocation2 + $0x6a] sm:$0xff]
      %v3750 = vld [vmem:[#allocation2 + $0x7a] sm:$0xff]
      %v3751 = vld [vmem:[#allocation2 + $0x82] sm:$0xff]
      %v3752 = vld [vmem:[#allocation2 + $0x92] sm:$0xff]
      %v3753 = vld [vmem:[#allocation2 + $0x9a] sm:$0xff]
      %v3754 = vld [vmem:[#allocation2 + $0xaa] sm:$0xff]
      %v3755 = vld [vmem:[#allocation2 + $0xb2] sm:$0xff]
      %v3756 = vld [vmem:[#allocation2 + $0xc2] sm:$0xff]
      %v3757 = vld [vmem:[#allocation2 + $0xca] sm:$0xff]
      %v3758 = vld [vmem:[#allocation2 + $0xda] sm:$0xff]
      %v3759 = vld [vmem:[#allocation2 + $0xe2] sm:$0xff]
      %v3760 = vld [vmem:[%s5] sm:$0xff]
      %v3761 = vld [vmem:[%s5 + $0x8] sm:$0xff]
      %v3762 = vld [vmem:[%s5 + $0x10] sm:$0xff]
      %v3763 = vld [vmem:[%s5 + $0x18] sm:$0xff]
      %v3764 = vld [vmem:[%s5 + $0x20] sm:$0xff]
      %v3765 = vld [vmem:[%s5 + $0x28] sm:$0xff]
      %v3766 = vld [vmem:[%s5 + $0x30] sm:$0xff]
      %v3767 = vld [vmem:[%s5 + $0x38] sm:$0xff]
      %v3768 = vld [vmem:[%s5 + $0x40] sm:$0xff]
      %v3769 = vld [vmem:[%s5 + $0x48] sm:$0xff]
      %v3770 = vld [vmem:[%s5 + $0x50] sm:$0xff]
      %v3771 = vld [vmem:[%s5 + $0x58] sm:$0xff]
      %v3772 = vld [vmem:[%s5 + $0x60] sm:$0xff]
      %v3773 = vld [vmem:[%s5 + $0x68] sm:$0xff]
      %v3774 = vld [vmem:[%s5 + $0x70] sm:$0xff]
      %v3775 = vld [vmem:[%s5 + $0x78] sm:$0xff]
      %v3776 = vld [vmem:[%s5 + $0x80] sm:$0xff]
      %v3777 = vld [vmem:[%s5 + $0x88] sm:$0xff]
      %v3778 = vld [vmem:[%s5 + $0x90] sm:$0xff]
      %v3779 = vld [vmem:[%s5 + $0x98] sm:$0xff]
      %v3780 = vld [vmem:[%s5 + $0xa0] sm:$0xff]
      %v3781 = vld [vmem:[%s5 + $0xa8] sm:$0xff]
      %v3782 = vld [vmem:[%s5 + $0xb0] sm:$0xff]
      %v3783 = vld [vmem:[%s5 + $0xb8] sm:$0xff]
      %v3784 = vld [vmem:[%s5 + $0xc0] sm:$0xff]
      %v3785 = vld [vmem:[%s5 + $0xc8] sm:$0xff]
      %v3786 = vld [vmem:[%s5 + $0xd0] sm:$0xff]
      %v3787 = vld [vmem:[%s5 + $0xd8] sm:$0xff]
      %v3788 = vld [vmem:[%s5 + $0xe0] sm:$0xff]
      %v3789 = vld [vmem:[%s5 + $0xe8] sm:$0xff]
      %v3790 = vld [vmem:[%s5 + $0xf0] sm:$0xff]
      %v3791 = vld [vmem:[%s5 + $0xf8] sm:$0xff]
      %v3792 = vld [vmem:[%s5 + $0x100] sm:$0xff]
      %v3793 = vld [vmem:[%s5 + $0x108] sm:$0xff]
      %v3794 = vld [vmem:[%s5 + $0x110] sm:$0xff]
      %v3795 = vld [vmem:[%s5 + $0x118] sm:$0xff]
      %v3796 = vld [vmem:[%s5 + $0x120] sm:$0xff]
      %v3797 = vld [vmem:[%s5 + $0x128] sm:$0xff]
      %v3798 = vld [vmem:[%s5 + $0x130] sm:$0xff]
      %v3799 = vld [vmem:[%s5 + $0x138] sm:$0xff]
      %v3800 = vld [vmem:[%s5 + $0x140] sm:$0xff]
      %v3801 = vld [vmem:[%s5 + $0x148] sm:$0xff]
      %v3802 = vld [vmem:[%s5 + $0x150] sm:$0xff]
      %v3803 = vld [vmem:[%s5 + $0x158] sm:$0xff]
      %v3804 = vld [vmem:[%s5 + $0x160] sm:$0xff]
      %v3805 = vld [vmem:[%s5 + $0x168] sm:$0xff]
      %v3806 = vld [vmem:[%s5 + $0x170] sm:$0xff]
      %v3807 = vld [vmem:[%s5 + $0x178] sm:$0xff]
      %s3808 = scalar_lea.vmem %s5, 384
      %v3809 = vld [vmem:[%s3808] sm:$0xff]
      %v3810 = vld [vmem:[%s3808 + $0x8] sm:$0xff]
      %v3811 = vld [vmem:[%s3808 + $0x10] sm:$0xff]
      %v3812 = vld [vmem:[%s3808 + $0x18] sm:$0xff]
      %v3813 = vld [vmem:[%s3808 + $0x20] sm:$0xff]
      %v3814 = vld [vmem:[%s3808 + $0x28] sm:$0xff]
      %v3815 = vld [vmem:[%s3808 + $0x30] sm:$0xff]
      %v3816 = vld [vmem:[%s3808 + $0x38] sm:$0xff]
      %v3817 = vld [vmem:[%s3808 + $0x40] sm:$0xff]
      %v3818 = vld [vmem:[%s3808 + $0x48] sm:$0xff]
      %v3819 = vld [vmem:[%s3808 + $0x50] sm:$0xff]
      %v3820 = vld [vmem:[%s3808 + $0x58] sm:$0xff]
      %v3821 = vld [vmem:[%s3808 + $0x60] sm:$0xff]
      %v3822 = vld [vmem:[%s3808 + $0x68] sm:$0xff]
      %v3823 = vld [vmem:[%s3808 + $0x70] sm:$0xff]
      %v3824 = vld [vmem:[%s3808 + $0x78] sm:$0xff]
      %v3825 = vld [vmem:[%s3808 + $0x80] sm:$0xff]
      %v3826 = vld [vmem:[%s3808 + $0x88] sm:$0xff]
      %v3827 = vld [vmem:[%s3808 + $0x90] sm:$0xff]
      %v3828 = vld [vmem:[%s3808 + $0x98] sm:$0xff]
      %v3829 = vld [vmem:[%s3808 + $0xa0] sm:$0xff]
      %v3830 = vld [vmem:[%s3808 + $0xa8] sm:$0xff]
      %v3831 = vld [vmem:[%s3808 + $0xb0] sm:$0xff]
      %v3832 = vld [vmem:[%s3808 + $0xb8] sm:$0xff]
      %v3833 = vld [vmem:[%s3808 + $0xc0] sm:$0xff]
      %v3834 = vld [vmem:[%s3808 + $0xc8] sm:$0xff]
      %v3835 = vld [vmem:[%s3808 + $0xd0] sm:$0xff]
      %v3836 = vld [vmem:[%s3808 + $0xd8] sm:$0xff]
      %v3837 = vld [vmem:[%s3808 + $0xe0] sm:$0xff]
      %v3838 = vld [vmem:[%s3808 + $0xe8] sm:$0xff]
      %v3839 = vld [vmem:[%s3808 + $0xf0] sm:$0xff]
      %v3840 = vld [vmem:[%s3808 + $0xf8] sm:$0xff]
      %v3841 = vld [vmem:[%s3808 + $0x100] sm:$0xff]
      %v3842 = vld [vmem:[%s3808 + $0x108] sm:$0xff]
      %v3843 = vld [vmem:[%s3808 + $0x110] sm:$0xff]
      %v3844 = vld [vmem:[%s3808 + $0x118] sm:$0xff]
      %v3845 = vld [vmem:[%s3808 + $0x120] sm:$0xff]
      %v3846 = vld [vmem:[%s3808 + $0x128] sm:$0xff]
      %v3847 = vld [vmem:[%s3808 + $0x130] sm:$0xff]
      %v3848 = vld [vmem:[%s3808 + $0x138] sm:$0xff]
      %v3849 = vld [vmem:[%s3808 + $0x140] sm:$0xff]
      %v3850 = vld [vmem:[%s3808 + $0x148] sm:$0xff]
      %v3851 = vld [vmem:[%s3808 + $0x150] sm:$0xff]
      %v3852 = vld [vmem:[%s3808 + $0x158] sm:$0xff]
      %v3853 = vld [vmem:[%s3808 + $0x160] sm:$0xff]
      %v3854 = vld [vmem:[%s3808 + $0x168] sm:$0xff]
      %v3855 = vld [vmem:[%s3808 + $0x170] sm:$0xff]
      %v3856 = vld [vmem:[%s3808 + $0x178] sm:$0xff]
      %3857 = vmatpush.msra.mxu0 %v3824
      %3858 = vmatpush.msra.mxu0 %v3823
      %3859 = vmatpush.msra.mxu0 %v3822
      %3860 = vmatpush.msra.mxu0 %v3821
      %3861 = vmatpush.msra.mxu0 %v3820
      %3862 = vmatpush.msra.mxu0 %v3819
      %3863 = vmatpush.msra.mxu0 %v3818
      %3864 = vmatpush.msra.mxu0 %v3817
      %3865 = vmatpush.msra.mxu0 %v3816
      %3866 = vmatpush.msra.mxu0 %v3815
      %3867 = vmatpush.msra.mxu0 %v3814
      %3868 = vmatpush.msra.mxu0 %v3813
      %3869 = vmatpush.msra.mxu0 %v3812
      %3870 = vmatpush.msra.mxu0 %v3811
      %3871 = vmatpush.msra.mxu0 %v3810
      %3872 = vmatpush.msra.mxu0 %v3809
      %3873 = vmatmul.f32.gmra.mxu0 %v3702
      %v3874 = vpop.f32.mrf.mxu0
      %v3875 = vadd.f32 0.0, %v3874
      %3876 = vmatmul.f32.gmra.mxu0 %v3703
      %v3877 = vpop.f32.mrf.mxu0
      %v3878 = vadd.f32 0.0, %v3877
      %3879 = vmatmul.f32.gmra.mxu0 %v3704
      %v3880 = vpop.f32.mrf.mxu0
      %v3881 = vadd.f32 0.0, %v3880
      %3882 = vmatmul.f32.gmra.mxu0 %v3705
      %v3883 = vpop.f32.mrf.mxu0
      %v3884 = vadd.f32 0.0, %v3883
      %3885 = vmatmul.f32.gmra.mxu0 %v3706
      %v3886 = vpop.f32.mrf.mxu0
      %v3887 = vadd.f32 0.0, %v3886
      %3888 = vmatmul.f32.gmra.mxu0 %v3707
      %v3889 = vpop.f32.mrf.mxu0
      %v3890 = vadd.f32 0.0, %v3889
      %3891 = vmatmul.f32.gmra.mxu0 %v3708
      %v3892 = vpop.f32.mrf.mxu0
      %v3893 = vadd.f32 0.0, %v3892
      %3894 = vmatmul.f32.gmra.mxu0 %v3709
      %v3895 = vpop.f32.mrf.mxu0
      %v3896 = vadd.f32 0.0, %v3895
      %3897 = vmatmul.f32.gmra.mxu0 %v3710
      %v3898 = vpop.f32.mrf.mxu0
      %v3899 = vadd.f32 0.0, %v3898
      %3900 = vmatmul.f32.gmra.mxu0 %v3711
      %v3901 = vpop.f32.mrf.mxu0
      %v3902 = vadd.f32 0.0, %v3901
      %3903 = vmatmul.f32.gmra.mxu0 %v3712
      %v3904 = vpop.f32.mrf.mxu0
      %v3905 = vadd.f32 0.0, %v3904
      %3906 = vmatmul.f32.gmra.mxu0 %v3713
      %v3907 = vpop.f32.mrf.mxu0
      %v3908 = vadd.f32 0.0, %v3907
      %3909 = vmatmul.f32.gmra.mxu0 %v3714
      %v3910 = vpop.f32.mrf.mxu0
      %v3911 = vadd.f32 0.0, %v3910
      %3912 = vmatmul.f32.gmra.mxu0 %v3715
      %v3913 = vpop.f32.mrf.mxu0
      %v3914 = vadd.f32 0.0, %v3913
      %3915 = vmatmul.f32.gmra.mxu0 %v3716
      %v3916 = vpop.f32.mrf.mxu0
      %v3917 = vadd.f32 0.0, %v3916
      %3918 = vmatmul.f32.gmra.mxu0 %v3717
      %v3919 = vpop.f32.mrf.mxu0
      %v3920 = vadd.f32 0.0, %v3919
      %3921 = vdwg.mxu0
      %3922 = vmatpush.msra.mxu0 %v3840
      %3923 = vmatpush.msra.mxu0 %v3839
      %3924 = vmatpush.msra.mxu0 %v3838
      %3925 = vmatpush.msra.mxu0 %v3837
      %3926 = vmatpush.msra.mxu0 %v3836
      %3927 = vmatpush.msra.mxu0 %v3835
      %3928 = vmatpush.msra.mxu0 %v3834
      %3929 = vmatpush.msra.mxu0 %v3833
      %3930 = vmatpush.msra.mxu0 %v3832
      %3931 = vmatpush.msra.mxu0 %v3831
      %3932 = vmatpush.msra.mxu0 %v3830
      %3933 = vmatpush.msra.mxu0 %v3829
      %3934 = vmatpush.msra.mxu0 %v3828
      %3935 = vmatpush.msra.mxu0 %v3827
      %3936 = vmatpush.msra.mxu0 %v3826
      %3937 = vmatpush.msra.mxu0 %v3825
      %3938 = vmatmul.f32.gmra.mxu0 %v3722
      %v3939 = vpop.f32.mrf.mxu0
      %v3940 = vadd.f32 %v3875, %v3939
      %3941 = vmatmul.f32.gmra.mxu0 %v3723
      %v3942 = vpop.f32.mrf.mxu0
      %v3943 = vadd.f32 %v3878, %v3942
      %3944 = vmatmul.f32.gmra.mxu0 %v3724
      %v3945 = vpop.f32.mrf.mxu0
      %v3946 = vadd.f32 %v3881, %v3945
      %3947 = vmatmul.f32.gmra.mxu0 %v3725
      %v3948 = vpop.f32.mrf.mxu0
      %v3949 = vadd.f32 %v3884, %v3948
      %3950 = vmatmul.f32.gmra.mxu0 %v3726
      %v3951 = vpop.f32.mrf.mxu0
      %v3952 = vadd.f32 %v3887, %v3951
      %3953 = vmatmul.f32.gmra.mxu0 %v3727
      %v3954 = vpop.f32.mrf.mxu0
      %v3955 = vadd.f32 %v3890, %v3954
      %3956 = vmatmul.f32.gmra.mxu0 %v3728
      %v3957 = vpop.f32.mrf.mxu0
      %v3958 = vadd.f32 %v3893, %v3957
      %3959 = vmatmul.f32.gmra.mxu0 %v3729
      %v3960 = vpop.f32.mrf.mxu0
      %v3961 = vadd.f32 %v3896, %v3960
      %3962 = vmatmul.f32.gmra.mxu0 %v3730
      %v3963 = vpop.f32.mrf.mxu0
      %v3964 = vadd.f32 %v3899, %v3963
      %3965 = vmatmul.f32.gmra.mxu0 %v3731
      %v3966 = vpop.f32.mrf.mxu0
      %v3967 = vadd.f32 %v3902, %v3966
      %3968 = vmatmul.f32.gmra.mxu0 %v3732
      %v3969 = vpop.f32.mrf.mxu0
      %v3970 = vadd.f32 %v3905, %v3969
      %3971 = vmatmul.f32.gmra.mxu0 %v3733
      %v3972 = vpop.f32.mrf.mxu0
      %v3973 = vadd.f32 %v3908, %v3972
      %3974 = vmatmul.f32.gmra.mxu0 %v3734
      %v3975 = vpop.f32.mrf.mxu0
      %v3976 = vadd.f32 %v3911, %v3975
      %3977 = vmatmul.f32.gmra.mxu0 %v3735
      %v3978 = vpop.f32.mrf.mxu0
      %v3979 = vadd.f32 %v3914, %v3978
      %3980 = vmatmul.f32.gmra.mxu0 %v3736
      %v3981 = vpop.f32.mrf.mxu0
      %v3982 = vadd.f32 %v3917, %v3981
      %3983 = vmatmul.f32.gmra.mxu0 %v3737
      %v3984 = vpop.f32.mrf.mxu0
      %v3985 = vadd.f32 %v3920, %v3984
      %3986 = vdwg.mxu0
      %3987 = vmatpush.msra.mxu0 %v3856
      %3988 = vmatpush.msra.mxu0 %v3855
      %3989 = vmatpush.msra.mxu0 %v3854
      %3990 = vmatpush.msra.mxu0 %v3853
      %3991 = vmatpush.msra.mxu0 %v3852
      %3992 = vmatpush.msra.mxu0 %v3851
      %3993 = vmatpush.msra.mxu0 %v3850
      %3994 = vmatpush.msra.mxu0 %v3849
      %3995 = vmatpush.msra.mxu0 %v3848
      %3996 = vmatpush.msra.mxu0 %v3847
      %3997 = vmatpush.msra.mxu0 %v3846
      %3998 = vmatpush.msra.mxu0 %v3845
      %3999 = vmatpush.msra.mxu0 %v3844
      %4000 = vmatpush.msra.mxu0 %v3843
      %4001 = vmatpush.msra.mxu0 %v3842
      %4002 = vmatpush.msra.mxu0 %v3841
      %4003 = vmatmul.f32.gmra.mxu0 %v3742
      %v4004 = vpop.f32.mrf.mxu0
      %v4005 = vadd.f32 %v3940, %v4004
      %4006 = vmatmul.f32.gmra.mxu0 %v3743
      %v4007 = vpop.f32.mrf.mxu0
      %v4008 = vadd.f32 %v3943, %v4007
      %4009 = vmatmul.f32.gmra.mxu0 %v3744
      %v4010 = vpop.f32.mrf.mxu0
      %v4011 = vadd.f32 %v3946, %v4010
      %4012 = vmatmul.f32.gmra.mxu0 %v3745
      %v4013 = vpop.f32.mrf.mxu0
      %v4014 = vadd.f32 %v3949, %v4013
      %4015 = vmatmul.f32.gmra.mxu0 %v3746
      %v4016 = vpop.f32.mrf.mxu0
      %v4017 = vadd.f32 %v3952, %v4016
      %4018 = vmatmul.f32.gmra.mxu0 %v3747
      %v4019 = vpop.f32.mrf.mxu0
      %v4020 = vadd.f32 %v3955, %v4019
      %4021 = vmatmul.f32.gmra.mxu0 %v3748
      %v4022 = vpop.f32.mrf.mxu0
      %v4023 = vadd.f32 %v3958, %v4022
      %4024 = vmatmul.f32.gmra.mxu0 %v3749
      %v4025 = vpop.f32.mrf.mxu0
      %v4026 = vadd.f32 %v3961, %v4025
      %4027 = vmatmul.f32.gmra.mxu0 %v3750
      %v4028 = vpop.f32.mrf.mxu0
      %v4029 = vadd.f32 %v3964, %v4028
      %4030 = vmatmul.f32.gmra.mxu0 %v3751
      %v4031 = vpop.f32.mrf.mxu0
      %v4032 = vadd.f32 %v3967, %v4031
      %4033 = vmatmul.f32.gmra.mxu0 %v3752
      %v4034 = vpop.f32.mrf.mxu0
      %v4035 = vadd.f32 %v3970, %v4034
      %4036 = vmatmul.f32.gmra.mxu0 %v3753
      %v4037 = vpop.f32.mrf.mxu0
      %v4038 = vadd.f32 %v3973, %v4037
      %4039 = vmatmul.f32.gmra.mxu0 %v3754
      %v4040 = vpop.f32.mrf.mxu0
      %v4041 = vadd.f32 %v3976, %v4040
      %4042 = vmatmul.f32.gmra.mxu0 %v3755
      %v4043 = vpop.f32.mrf.mxu0
      %v4044 = vadd.f32 %v3979, %v4043
      %4045 = vmatmul.f32.gmra.mxu0 %v3756
      %v4046 = vpop.f32.mrf.mxu0
      %v4047 = vadd.f32 %v3982, %v4046
      %4048 = vmatmul.f32.gmra.mxu0 %v3757
      %v4049 = vpop.f32.mrf.mxu0
      %v4050 = vadd.f32 %v3985, %v4049
      %4051 = vdwg.mxu0
      %4052 = vmatpush.msra.mxu0 %v3775
      %4053 = vmatpush.msra.mxu0 %v3774
      %4054 = vmatpush.msra.mxu0 %v3773
      %4055 = vmatpush.msra.mxu0 %v3772
      %4056 = vmatpush.msra.mxu0 %v3771
      %4057 = vmatpush.msra.mxu0 %v3770
      %4058 = vmatpush.msra.mxu0 %v3769
      %4059 = vmatpush.msra.mxu0 %v3768
      %4060 = vmatpush.msra.mxu0 %v3767
      %4061 = vmatpush.msra.mxu0 %v3766
      %4062 = vmatpush.msra.mxu0 %v3765
      %4063 = vmatpush.msra.mxu0 %v3764
      %4064 = vmatpush.msra.mxu0 %v3763
      %4065 = vmatpush.msra.mxu0 %v3762
      %4066 = vmatpush.msra.mxu0 %v3761
      %4067 = vmatpush.msra.mxu0 %v3760
      %4068 = vmatmul.f32.gmra.mxu0 %v3700
      %v4069 = vpop.f32.mrf.mxu0
      %v4070 = vadd.f32 %v4005, %v4069
      %4071 = vmatmul.f32.gmra.mxu0 %v3701
      %v4072 = vpop.f32.mrf.mxu0
      %v4073 = vadd.f32 %v4008, %v4072
      %4074 = vmatmul.f32.gmra.mxu0 %v3702
      %v4075 = vpop.f32.mrf.mxu0
      %v4076 = vadd.f32 %v4011, %v4075
      %4077 = vmatmul.f32.gmra.mxu0 %v3703
      %v4078 = vpop.f32.mrf.mxu0
      %v4079 = vadd.f32 %v4014, %v4078
      %4080 = vmatmul.f32.gmra.mxu0 %v3704
      %v4081 = vpop.f32.mrf.mxu0
      %v4082 = vadd.f32 %v4017, %v4081
      %4083 = vmatmul.f32.gmra.mxu0 %v3705
      %v4084 = vpop.f32.mrf.mxu0
      %v4085 = vadd.f32 %v4020, %v4084
      %4086 = vmatmul.f32.gmra.mxu0 %v3706
      %v4087 = vpop.f32.mrf.mxu0
      %v4088 = vadd.f32 %v4023, %v4087
      %4089 = vmatmul.f32.gmra.mxu0 %v3707
      %v4090 = vpop.f32.mrf.mxu0
      %v4091 = vadd.f32 %v4026, %v4090
      %4092 = vmatmul.f32.gmra.mxu0 %v3708
      %v4093 = vpop.f32.mrf.mxu0
      %v4094 = vadd.f32 %v4029, %v4093
      %4095 = vmatmul.f32.gmra.mxu0 %v3709
      %v4096 = vpop.f32.mrf.mxu0
      %v4097 = vadd.f32 %v4032, %v4096
      %4098 = vmatmul.f32.gmra.mxu0 %v3710
      %v4099 = vpop.f32.mrf.mxu0
      %v4100 = vadd.f32 %v4035, %v4099
      %4101 = vmatmul.f32.gmra.mxu0 %v3711
      %v4102 = vpop.f32.mrf.mxu0
      %v4103 = vadd.f32 %v4038, %v4102
      %4104 = vmatmul.f32.gmra.mxu0 %v3712
      %v4105 = vpop.f32.mrf.mxu0
      %v4106 = vadd.f32 %v4041, %v4105
      %4107 = vmatmul.f32.gmra.mxu0 %v3713
      %v4108 = vpop.f32.mrf.mxu0
      %v4109 = vadd.f32 %v4044, %v4108
      %4110 = vmatmul.f32.gmra.mxu0 %v3714
      %v4111 = vpop.f32.mrf.mxu0
      %v4112 = vadd.f32 %v4047, %v4111
      %4113 = vmatmul.f32.gmra.mxu0 %v3715
      %v4114 = vpop.f32.mrf.mxu0
      %v4115 = vadd.f32 %v4050, %v4114
      %4116 = vdwg.mxu0
      %4117 = vmatpush.msra.mxu0 %v3791
      %4118 = vmatpush.msra.mxu0 %v3790
      %4119 = vmatpush.msra.mxu0 %v3789
      %4120 = vmatpush.msra.mxu0 %v3788
      %4121 = vmatpush.msra.mxu0 %v3787
      %4122 = vmatpush.msra.mxu0 %v3786
      %4123 = vmatpush.msra.mxu0 %v3785
      %4124 = vmatpush.msra.mxu0 %v3784
      %4125 = vmatpush.msra.mxu0 %v3783
      %4126 = vmatpush.msra.mxu0 %v3782
      %4127 = vmatpush.msra.mxu0 %v3781
      %4128 = vmatpush.msra.mxu0 %v3780
      %4129 = vmatpush.msra.mxu0 %v3779
      %4130 = vmatpush.msra.mxu0 %v3778
      %4131 = vmatpush.msra.mxu0 %v3777
      %4132 = vmatpush.msra.mxu0 %v3776
      %4133 = vmatmul.f32.gmra.mxu0 %v3720
      %v4134 = vpop.f32.mrf.mxu0
      %v4135 = vadd.f32 %v4070, %v4134
      %4136 = vmatmul.f32.gmra.mxu0 %v3721
      %v4137 = vpop.f32.mrf.mxu0
      %v4138 = vadd.f32 %v4073, %v4137
      %4139 = vmatmul.f32.gmra.mxu0 %v3722
      %v4140 = vpop.f32.mrf.mxu0
      %v4141 = vadd.f32 %v4076, %v4140
      %4142 = vmatmul.f32.gmra.mxu0 %v3723
      %v4143 = vpop.f32.mrf.mxu0
      %v4144 = vadd.f32 %v4079, %v4143
      %4145 = vmatmul.f32.gmra.mxu0 %v3724
      %v4146 = vpop.f32.mrf.mxu0
      %v4147 = vadd.f32 %v4082, %v4146
      %4148 = vmatmul.f32.gmra.mxu0 %v3725
      %v4149 = vpop.f32.mrf.mxu0
      %v4150 = vadd.f32 %v4085, %v4149
      %4151 = vmatmul.f32.gmra.mxu0 %v3726
      %v4152 = vpop.f32.mrf.mxu0
      %v4153 = vadd.f32 %v4088, %v4152
      %4154 = vmatmul.f32.gmra.mxu0 %v3727
      %v4155 = vpop.f32.mrf.mxu0
      %v4156 = vadd.f32 %v4091, %v4155
      %4157 = vmatmul.f32.gmra.mxu0 %v3728
      %v4158 = vpop.f32.mrf.mxu0
      %v4159 = vadd.f32 %v4094, %v4158
      %4160 = vmatmul.f32.gmra.mxu0 %v3729
      %v4161 = vpop.f32.mrf.mxu0
      %v4162 = vadd.f32 %v4097, %v4161
      %4163 = vmatmul.f32.gmra.mxu0 %v3730
      %v4164 = vpop.f32.mrf.mxu0
      %v4165 = vadd.f32 %v4100, %v4164
      %4166 = vmatmul.f32.gmra.mxu0 %v3731
      %v4167 = vpop.f32.mrf.mxu0
      %v4168 = vadd.f32 %v4103, %v4167
      %4169 = vmatmul.f32.gmra.mxu0 %v3732
      %v4170 = vpop.f32.mrf.mxu0
      %v4171 = vadd.f32 %v4106, %v4170
      %4172 = vmatmul.f32.gmra.mxu0 %v3733
      %v4173 = vpop.f32.mrf.mxu0
      %v4174 = vadd.f32 %v4109, %v4173
      %4175 = vmatmul.f32.gmra.mxu0 %v3734
      %v4176 = vpop.f32.mrf.mxu0
      %v4177 = vadd.f32 %v4112, %v4176
      %4178 = vmatmul.f32.gmra.mxu0 %v3735
      %v4179 = vpop.f32.mrf.mxu0
      %v4180 = vadd.f32 %v4115, %v4179
      %4181 = vdwg.mxu0
      %4182 = vmatpush.msra.mxu0 %v3807
      %4183 = vmatpush.msra.mxu0 %v3806
      %4184 = vmatpush.msra.mxu0 %v3805
      %4185 = vmatpush.msra.mxu0 %v3804
      %4186 = vmatpush.msra.mxu0 %v3803
      %4187 = vmatpush.msra.mxu0 %v3802
      %4188 = vmatpush.msra.mxu0 %v3801
      %4189 = vmatpush.msra.mxu0 %v3800
      %4190 = vmatpush.msra.mxu0 %v3799
      %4191 = vmatpush.msra.mxu0 %v3798
      %4192 = vmatpush.msra.mxu0 %v3797
      %4193 = vmatpush.msra.mxu0 %v3796
      %4194 = vmatpush.msra.mxu0 %v3795
      %4195 = vmatpush.msra.mxu0 %v3794
      %4196 = vmatpush.msra.mxu0 %v3793
      %4197 = vmatpush.msra.mxu0 %v3792
      %4198 = vmatmul.f32.gmra.mxu0 %v3740
      %v4199 = vpop.f32.mrf.mxu0
      %v4200 = vadd.f32 %v4135, %v4199
      %4201 = vmatmul.f32.gmra.mxu0 %v3741
      %v4202 = vpop.f32.mrf.mxu0
      %v4203 = vadd.f32 %v4138, %v4202
      %4204 = vmatmul.f32.gmra.mxu0 %v3742
      %v4205 = vpop.f32.mrf.mxu0
      %v4206 = vadd.f32 %v4141, %v4205
      %4207 = vmatmul.f32.gmra.mxu0 %v3743
      %v4208 = vpop.f32.mrf.mxu0
      %v4209 = vadd.f32 %v4144, %v4208
      %4210 = vmatmul.f32.gmra.mxu0 %v3744
      %v4211 = vpop.f32.mrf.mxu0
      %v4212 = vadd.f32 %v4147, %v4211
      %4213 = vmatmul.f32.gmra.mxu0 %v3745
      %v4214 = vpop.f32.mrf.mxu0
      %v4215 = vadd.f32 %v4150, %v4214
      %4216 = vmatmul.f32.gmra.mxu0 %v3746
      %v4217 = vpop.f32.mrf.mxu0
      %v4218 = vadd.f32 %v4153, %v4217
      %4219 = vmatmul.f32.gmra.mxu0 %v3747
      %v4220 = vpop.f32.mrf.mxu0
      %v4221 = vadd.f32 %v4156, %v4220
      %4222 = vmatmul.f32.gmra.mxu0 %v3748
      %v4223 = vpop.f32.mrf.mxu0
      %v4224 = vadd.f32 %v4159, %v4223
      %4225 = vmatmul.f32.gmra.mxu0 %v3749
      %v4226 = vpop.f32.mrf.mxu0
      %v4227 = vadd.f32 %v4162, %v4226
      %4228 = vmatmul.f32.gmra.mxu0 %v3750
      %v4229 = vpop.f32.mrf.mxu0
      %v4230 = vadd.f32 %v4165, %v4229
      %4231 = vmatmul.f32.gmra.mxu0 %v3751
      %v4232 = vpop.f32.mrf.mxu0
      %v4233 = vadd.f32 %v4168, %v4232
      %4234 = vmatmul.f32.gmra.mxu0 %v3752
      %v4235 = vpop.f32.mrf.mxu0
      %v4236 = vadd.f32 %v4171, %v4235
      %4237 = vmatmul.f32.gmra.mxu0 %v3753
      %v4238 = vpop.f32.mrf.mxu0
      %v4239 = vadd.f32 %v4174, %v4238
      %4240 = vmatmul.f32.gmra.mxu0 %v3754
      %v4241 = vpop.f32.mrf.mxu0
      %v4242 = vadd.f32 %v4177, %v4241
      %4243 = vmatmul.f32.gmra.mxu0 %v3755
      %v4244 = vpop.f32.mrf.mxu0
      %v4245 = vadd.f32 %v4180, %v4244
      %4246 = vdwg.mxu0
      %s4247 = scalar_lea.vmem %s5, 768
      %v4248 = vld [vmem:[%s4247] sm:$0xff]
      %v4249 = vld [vmem:[%s4247 + $0x8] sm:$0xff]
      %v4250 = vld [vmem:[%s4247 + $0x10] sm:$0xff]
      %v4251 = vld [vmem:[%s4247 + $0x18] sm:$0xff]
      %v4252 = vld [vmem:[%s4247 + $0x20] sm:$0xff]
      %v4253 = vld [vmem:[%s4247 + $0x28] sm:$0xff]
      %v4254 = vld [vmem:[%s4247 + $0x30] sm:$0xff]
      %v4255 = vld [vmem:[%s4247 + $0x38] sm:$0xff]
      %v4256 = vld [vmem:[%s4247 + $0x40] sm:$0xff]
      %v4257 = vld [vmem:[%s4247 + $0x48] sm:$0xff]
      %v4258 = vld [vmem:[%s4247 + $0x50] sm:$0xff]
      %v4259 = vld [vmem:[%s4247 + $0x58] sm:$0xff]
      %v4260 = vld [vmem:[%s4247 + $0x60] sm:$0xff]
      %v4261 = vld [vmem:[%s4247 + $0x68] sm:$0xff]
      %v4262 = vld [vmem:[%s4247 + $0x70] sm:$0xff]
      %v4263 = vld [vmem:[%s4247 + $0x78] sm:$0xff]
      %v4264 = vld [vmem:[%s4247 + $0x80] sm:$0xff]
      %v4265 = vld [vmem:[%s4247 + $0x88] sm:$0xff]
      %v4266 = vld [vmem:[%s4247 + $0x90] sm:$0xff]
      %v4267 = vld [vmem:[%s4247 + $0x98] sm:$0xff]
      %v4268 = vld [vmem:[%s4247 + $0xa0] sm:$0xff]
      %v4269 = vld [vmem:[%s4247 + $0xa8] sm:$0xff]
      %v4270 = vld [vmem:[%s4247 + $0xb0] sm:$0xff]
      %v4271 = vld [vmem:[%s4247 + $0xb8] sm:$0xff]
      %v4272 = vld [vmem:[%s4247 + $0xc0] sm:$0xff]
      %v4273 = vld [vmem:[%s4247 + $0xc8] sm:$0xff]
      %v4274 = vld [vmem:[%s4247 + $0xd0] sm:$0xff]
      %v4275 = vld [vmem:[%s4247 + $0xd8] sm:$0xff]
      %v4276 = vld [vmem:[%s4247 + $0xe0] sm:$0xff]
      %v4277 = vld [vmem:[%s4247 + $0xe8] sm:$0xff]
      %v4278 = vld [vmem:[%s4247 + $0xf0] sm:$0xff]
      %v4279 = vld [vmem:[%s4247 + $0xf8] sm:$0xff]
      %v4280 = vld [vmem:[%s4247 + $0x100] sm:$0xff]
      %v4281 = vld [vmem:[%s4247 + $0x108] sm:$0xff]
      %v4282 = vld [vmem:[%s4247 + $0x110] sm:$0xff]
      %v4283 = vld [vmem:[%s4247 + $0x118] sm:$0xff]
      %v4284 = vld [vmem:[%s4247 + $0x120] sm:$0xff]
      %v4285 = vld [vmem:[%s4247 + $0x128] sm:$0xff]
      %v4286 = vld [vmem:[%s4247 + $0x130] sm:$0xff]
      %v4287 = vld [vmem:[%s4247 + $0x138] sm:$0xff]
      %v4288 = vld [vmem:[%s4247 + $0x140] sm:$0xff]
      %v4289 = vld [vmem:[%s4247 + $0x148] sm:$0xff]
      %v4290 = vld [vmem:[%s4247 + $0x150] sm:$0xff]
      %v4291 = vld [vmem:[%s4247 + $0x158] sm:$0xff]
      %v4292 = vld [vmem:[%s4247 + $0x160] sm:$0xff]
      %v4293 = vld [vmem:[%s4247 + $0x168] sm:$0xff]
      %v4294 = vld [vmem:[%s4247 + $0x170] sm:$0xff]
      %v4295 = vld [vmem:[%s4247 + $0x178] sm:$0xff]
      %4296 = vmatpush.msra.mxu0 %v4263
      %4297 = vmatpush.msra.mxu0 %v4262
      %4298 = vmatpush.msra.mxu0 %v4261
      %4299 = vmatpush.msra.mxu0 %v4260
      %4300 = vmatpush.msra.mxu0 %v4259
      %4301 = vmatpush.msra.mxu0 %v4258
      %4302 = vmatpush.msra.mxu0 %v4257
      %4303 = vmatpush.msra.mxu0 %v4256
      %4304 = vmatpush.msra.mxu0 %v4255
      %4305 = vmatpush.msra.mxu0 %v4254
      %4306 = vmatpush.msra.mxu0 %v4253
      %4307 = vmatpush.msra.mxu0 %v4252
      %4308 = vmatpush.msra.mxu0 %v4251
      %4309 = vmatpush.msra.mxu0 %v4250
      %4310 = vmatpush.msra.mxu0 %v4249
      %4311 = vmatpush.msra.mxu0 %v4248
      %4312 = vmatmul.f32.gmra.mxu0 %v3704
      %v4313 = vpop.f32.mrf.mxu0
      %v4314 = vadd.f32 0.0, %v4313
      %4315 = vmatmul.f32.gmra.mxu0 %v3705
      %v4316 = vpop.f32.mrf.mxu0
      %v4317 = vadd.f32 0.0, %v4316
      %4318 = vmatmul.f32.gmra.mxu0 %v3706
      %v4319 = vpop.f32.mrf.mxu0
      %v4320 = vadd.f32 0.0, %v4319
      %4321 = vmatmul.f32.gmra.mxu0 %v3707
      %v4322 = vpop.f32.mrf.mxu0
      %v4323 = vadd.f32 0.0, %v4322
      %4324 = vmatmul.f32.gmra.mxu0 %v3708
      %v4325 = vpop.f32.mrf.mxu0
      %v4326 = vadd.f32 0.0, %v4325
      %4327 = vmatmul.f32.gmra.mxu0 %v3709
      %v4328 = vpop.f32.mrf.mxu0
      %v4329 = vadd.f32 0.0, %v4328
      %4330 = vmatmul.f32.gmra.mxu0 %v3710
      %v4331 = vpop.f32.mrf.mxu0
      %v4332 = vadd.f32 0.0, %v4331
      %4333 = vmatmul.f32.gmra.mxu0 %v3711
      %v4334 = vpop.f32.mrf.mxu0
      %v4335 = vadd.f32 0.0, %v4334
      %4336 = vmatmul.f32.gmra.mxu0 %v3712
      %v4337 = vpop.f32.mrf.mxu0
      %v4338 = vadd.f32 0.0, %v4337
      %4339 = vmatmul.f32.gmra.mxu0 %v3713
      %v4340 = vpop.f32.mrf.mxu0
      %v4341 = vadd.f32 0.0, %v4340
      %4342 = vmatmul.f32.gmra.mxu0 %v3714
      %v4343 = vpop.f32.mrf.mxu0
      %v4344 = vadd.f32 0.0, %v4343
      %4345 = vmatmul.f32.gmra.mxu0 %v3715
      %v4346 = vpop.f32.mrf.mxu0
      %v4347 = vadd.f32 0.0, %v4346
      %4348 = vmatmul.f32.gmra.mxu0 %v3716
      %v4349 = vpop.f32.mrf.mxu0
      %v4350 = vadd.f32 0.0, %v4349
      %4351 = vmatmul.f32.gmra.mxu0 %v3717
      %v4352 = vpop.f32.mrf.mxu0
      %v4353 = vadd.f32 0.0, %v4352
      %4354 = vmatmul.f32.gmra.mxu0 %v3718
      %v4355 = vpop.f32.mrf.mxu0
      %v4356 = vadd.f32 0.0, %v4355
      %4357 = vmatmul.f32.gmra.mxu0 %v3719
      %v4358 = vpop.f32.mrf.mxu0
      %v4359 = vadd.f32 0.0, %v4358
      %4360 = vdwg.mxu0
      %4361 = vmatpush.msra.mxu0 %v4279
      %4362 = vmatpush.msra.mxu0 %v4278
      %4363 = vmatpush.msra.mxu0 %v4277
      %4364 = vmatpush.msra.mxu0 %v4276
      %4365 = vmatpush.msra.mxu0 %v4275
      %4366 = vmatpush.msra.mxu0 %v4274
      %4367 = vmatpush.msra.mxu0 %v4273
      %4368 = vmatpush.msra.mxu0 %v4272
      %4369 = vmatpush.msra.mxu0 %v4271
      %4370 = vmatpush.msra.mxu0 %v4270
      %4371 = vmatpush.msra.mxu0 %v4269
      %4372 = vmatpush.msra.mxu0 %v4268
      %4373 = vmatpush.msra.mxu0 %v4267
      %4374 = vmatpush.msra.mxu0 %v4266
      %4375 = vmatpush.msra.mxu0 %v4265
      %4376 = vmatpush.msra.mxu0 %v4264
      %4377 = vmatmul.f32.gmra.mxu0 %v3724
      %v4378 = vpop.f32.mrf.mxu0
      %v4379 = vadd.f32 %v4314, %v4378
      %4380 = vmatmul.f32.gmra.mxu0 %v3725
      %v4381 = vpop.f32.mrf.mxu0
      %v4382 = vadd.f32 %v4317, %v4381
      %4383 = vmatmul.f32.gmra.mxu0 %v3726
      %v4384 = vpop.f32.mrf.mxu0
      %v4385 = vadd.f32 %v4320, %v4384
      %4386 = vmatmul.f32.gmra.mxu0 %v3727
      %v4387 = vpop.f32.mrf.mxu0
      %v4388 = vadd.f32 %v4323, %v4387
      %4389 = vmatmul.f32.gmra.mxu0 %v3728
      %v4390 = vpop.f32.mrf.mxu0
      %v4391 = vadd.f32 %v4326, %v4390
      %4392 = vmatmul.f32.gmra.mxu0 %v3729
      %v4393 = vpop.f32.mrf.mxu0
      %v4394 = vadd.f32 %v4329, %v4393
      %4395 = vmatmul.f32.gmra.mxu0 %v3730
      %v4396 = vpop.f32.mrf.mxu0
      %v4397 = vadd.f32 %v4332, %v4396
      %4398 = vmatmul.f32.gmra.mxu0 %v3731
      %v4399 = vpop.f32.mrf.mxu0
      %v4400 = vadd.f32 %v4335, %v4399
      %4401 = vmatmul.f32.gmra.mxu0 %v3732
      %v4402 = vpop.f32.mrf.mxu0
      %v4403 = vadd.f32 %v4338, %v4402
      %4404 = vmatmul.f32.gmra.mxu0 %v3733
      %v4405 = vpop.f32.mrf.mxu0
      %v4406 = vadd.f32 %v4341, %v4405
      %4407 = vmatmul.f32.gmra.mxu0 %v3734
      %v4408 = vpop.f32.mrf.mxu0
      %v4409 = vadd.f32 %v4344, %v4408
      %4410 = vmatmul.f32.gmra.mxu0 %v3735
      %v4411 = vpop.f32.mrf.mxu0
      %v4412 = vadd.f32 %v4347, %v4411
      %4413 = vmatmul.f32.gmra.mxu0 %v3736
      %v4414 = vpop.f32.mrf.mxu0
      %v4415 = vadd.f32 %v4350, %v4414
      %4416 = vmatmul.f32.gmra.mxu0 %v3737
      %v4417 = vpop.f32.mrf.mxu0
      %v4418 = vadd.f32 %v4353, %v4417
      %4419 = vmatmul.f32.gmra.mxu0 %v3738
      %v4420 = vpop.f32.mrf.mxu0
      %v4421 = vadd.f32 %v4356, %v4420
      %4422 = vmatmul.f32.gmra.mxu0 %v3739
      %v4423 = vpop.f32.mrf.mxu0
      %v4424 = vadd.f32 %v4359, %v4423
      %4425 = vdwg.mxu0
      %4426 = vmatpush.msra.mxu0 %v4295
      %4427 = vmatpush.msra.mxu0 %v4294
      %4428 = vmatpush.msra.mxu0 %v4293
      %4429 = vmatpush.msra.mxu0 %v4292
      %4430 = vmatpush.msra.mxu0 %v4291
      %4431 = vmatpush.msra.mxu0 %v4290
      %4432 = vmatpush.msra.mxu0 %v4289
      %4433 = vmatpush.msra.mxu0 %v4288
      %4434 = vmatpush.msra.mxu0 %v4287
      %4435 = vmatpush.msra.mxu0 %v4286
      %4436 = vmatpush.msra.mxu0 %v4285
      %4437 = vmatpush.msra.mxu0 %v4284
      %4438 = vmatpush.msra.mxu0 %v4283
      %4439 = vmatpush.msra.mxu0 %v4282
      %4440 = vmatpush.msra.mxu0 %v4281
      %4441 = vmatpush.msra.mxu0 %v4280
      %4442 = vmatmul.f32.gmra.mxu0 %v3744
      %v4443 = vpop.f32.mrf.mxu0
      %v4444 = vadd.f32 %v4379, %v4443
      %4445 = vmatmul.f32.gmra.mxu0 %v3745
      %v4446 = vpop.f32.mrf.mxu0
      %v4447 = vadd.f32 %v4382, %v4446
      %4448 = vmatmul.f32.gmra.mxu0 %v3746
      %v4449 = vpop.f32.mrf.mxu0
      %v4450 = vadd.f32 %v4385, %v4449
      %4451 = vmatmul.f32.gmra.mxu0 %v3747
      %v4452 = vpop.f32.mrf.mxu0
      %v4453 = vadd.f32 %v4388, %v4452
      %4454 = vmatmul.f32.gmra.mxu0 %v3748
      %v4455 = vpop.f32.mrf.mxu0
      %v4456 = vadd.f32 %v4391, %v4455
      %4457 = vmatmul.f32.gmra.mxu0 %v3749
      %v4458 = vpop.f32.mrf.mxu0
      %v4459 = vadd.f32 %v4394, %v4458
      %4460 = vmatmul.f32.gmra.mxu0 %v3750
      %v4461 = vpop.f32.mrf.mxu0
      %v4462 = vadd.f32 %v4397, %v4461
      %4463 = vmatmul.f32.gmra.mxu0 %v3751
      %v4464 = vpop.f32.mrf.mxu0
      %v4465 = vadd.f32 %v4400, %v4464
      %4466 = vmatmul.f32.gmra.mxu0 %v3752
      %v4467 = vpop.f32.mrf.mxu0
      %v4468 = vadd.f32 %v4403, %v4467
      %4469 = vmatmul.f32.gmra.mxu0 %v3753
      %v4470 = vpop.f32.mrf.mxu0
      %v4471 = vadd.f32 %v4406, %v4470
      %4472 = vmatmul.f32.gmra.mxu0 %v3754
      %v4473 = vpop.f32.mrf.mxu0
      %v4474 = vadd.f32 %v4409, %v4473
      %4475 = vmatmul.f32.gmra.mxu0 %v3755
      %v4476 = vpop.f32.mrf.mxu0
      %v4477 = vadd.f32 %v4412, %v4476
      %4478 = vmatmul.f32.gmra.mxu0 %v3756
      %v4479 = vpop.f32.mrf.mxu0
      %v4480 = vadd.f32 %v4415, %v4479
      %4481 = vmatmul.f32.gmra.mxu0 %v3757
      %v4482 = vpop.f32.mrf.mxu0
      %v4483 = vadd.f32 %v4418, %v4482
      %4484 = vmatmul.f32.gmra.mxu0 %v3758
      %v4485 = vpop.f32.mrf.mxu0
      %v4486 = vadd.f32 %v4421, %v4485
      %4487 = vmatmul.f32.gmra.mxu0 %v3759
      %v4488 = vpop.f32.mrf.mxu0
      %v4489 = vadd.f32 %v4424, %v4488
      %4490 = vdwg.mxu0
      %v4491 = vadd.f32 %v4200, %v4444
      %v4492 = vadd.f32 %v4203, %v4447
      %v4493 = vadd.f32 %v4206, %v4450
      %v4494 = vadd.f32 %v4209, %v4453
      %v4495 = vadd.f32 %v4212, %v4456
      %v4496 = vadd.f32 %v4215, %v4459
      %v4497 = vadd.f32 %v4218, %v4462
      %v4498 = vadd.f32 %v4221, %v4465
      %v4499 = vadd.f32 %v4224, %v4468
      %v4500 = vadd.f32 %v4227, %v4471
      %v4501 = vadd.f32 %v4230, %v4474
      %v4502 = vadd.f32 %v4233, %v4477
      %v4503 = vadd.f32 %v4236, %v4480
      %v4504 = vadd.f32 %v4239, %v4483
      %v4505 = vadd.f32 %v4242, %v4486
      %v4506 = vadd.f32 %v4245, %v4489
      %v4507 = vld [vmem:[%s6] sm:$0x1]
      %v4509 = vperm.slane %v4507, 0
      %v4511 = vmul.f32 %v4491, %v4509
      %v4512 = vmul.f32 %v4492, %v4509
      %v4513 = vmul.f32 %v4493, %v4509
      %v4514 = vmul.f32 %v4494, %v4509
      %v4515 = vmul.f32 %v4495, %v4509
      %v4516 = vmul.f32 %v4496, %v4509
      %v4517 = vmul.f32 %v4497, %v4509
      %v4518 = vmul.f32 %v4498, %v4509
      %v4519 = vmul.f32 %v4499, %v4509
      %v4520 = vmul.f32 %v4500, %v4509
      %v4521 = vmul.f32 %v4501, %v4509
      %v4522 = vmul.f32 %v4502, %v4509
      %v4523 = vmul.f32 %v4503, %v4509
      %v4524 = vmul.f32 %v4504, %v4509
      %v4525 = vmul.f32 %v4505, %v4509
      %v4526 = vmul.f32 %v4506, %v4509
      %v4527 = vld [vmem:[%s7] sm:$0x1]
      %v4529 = vperm.slane %v4527, 0
      %v4531 = vadd.f32 %v4511, %v4529
      %v4532 = vadd.f32 %v4512, %v4529
      %v4533 = vadd.f32 %v4513, %v4529
      %v4534 = vadd.f32 %v4514, %v4529
      %v4535 = vadd.f32 %v4515, %v4529
      %v4536 = vadd.f32 %v4516, %v4529
      %v4537 = vadd.f32 %v4517, %v4529
      %v4538 = vadd.f32 %v4518, %v4529
      %v4539 = vadd.f32 %v4519, %v4529
      %v4540 = vadd.f32 %v4520, %v4529
      %v4541 = vadd.f32 %v4521, %v4529
      %v4542 = vadd.f32 %v4522, %v4529
      %v4543 = vadd.f32 %v4523, %v4529
      %v4544 = vadd.f32 %v4524, %v4529
      %v4545 = vadd.f32 %v4525, %v4529
      %v4546 = vadd.f32 %v4526, %v4529
      %v4547 = vmax.f32 %v4531, 0.0
      %v4548 = vmax.f32 %v4532, 0.0
      %v4549 = vmax.f32 %v4533, 0.0
      %v4550 = vmax.f32 %v4534, 0.0
      %v4551 = vmax.f32 %v4535, 0.0
      %v4552 = vmax.f32 %v4536, 0.0
      %v4553 = vmax.f32 %v4537, 0.0
      %v4554 = vmax.f32 %v4538, 0.0
      %v4555 = vmax.f32 %v4539, 0.0
      %v4556 = vmax.f32 %v4540, 0.0
      %v4557 = vmax.f32 %v4541, 0.0
      %v4558 = vmax.f32 %v4542, 0.0
      %v4559 = vmax.f32 %v4543, 0.0
      %v4560 = vmax.f32 %v4544, 0.0
      %v4561 = vmax.f32 %v4545, 0.0
      %v4562 = vmax.f32 %v4546, 0.0
      %4563 = vst [vmem:[%s394] sm:$0xff] %v4547
      %4564 = vst [vmem:[%s394 + $0x8] sm:$0xff] %v4548
      %4565 = vst [vmem:[%s394 + $0x10] sm:$0xff] %v4549
      %4566 = vst [vmem:[%s394 + $0x18] sm:$0xff] %v4550
      %4567 = vst [vmem:[%s394 + $0x20] sm:$0xff] %v4551
      %4568 = vst [vmem:[%s394 + $0x28] sm:$0xff] %v4552
      %4569 = vst [vmem:[%s394 + $0x30] sm:$0xff] %v4553
      %4570 = vst [vmem:[%s394 + $0x38] sm:$0xff] %v4554
      %4571 = vst [vmem:[%s394 + $0x40] sm:$0xff] %v4555
      %4572 = vst [vmem:[%s394 + $0x48] sm:$0xff] %v4556
      %4573 = vst [vmem:[%s394 + $0x50] sm:$0xff] %v4557
      %4574 = vst [vmem:[%s394 + $0x58] sm:$0xff] %v4558
      %4575 = vst [vmem:[%s394 + $0x60] sm:$0xff] %v4559
      %4576 = vst [vmem:[%s394 + $0x68] sm:$0xff] %v4560
      %4577 = vst [vmem:[%s394 + $0x70] sm:$0xff] %v4561
      %4578 = vst [vmem:[%s394 + $0x78] sm:$0xff] %v4562
      %s4579 = smul.u32 8, %s24
      %p4580 = scmp.lt.s32.totalorder %s23, 1
      %s4581 = scalar_select %p4580, %s23, 1
      %p4582 = scmp.lt.s32.totalorder %s4579, 15
      %s4583 = scalar_select %p4582, %s4579, 15
      %s4584 = smul.addr %s4583, 2
      %s4585 = smul.addr %s4581, 32
      %s4586 = sadd.s32 %s4584, %s4585
      %s4587 = smul.addr %s4586, 8
      %s4588 = scalar_lea.vmem %s8, %s4587
      // Predicated region
      $region53: #{double_conv.1} parent=51 // pred_check
        %p4589 = pneg %p235
      $region54: #{double_conv.1} parent=51 // pred_check_branch
        %4591 = sbr.rel (%p4589) target = $region56
      $region55: #{double_conv.1} parent=51 // pred_region
        %s4592 = smul.u32 8, %s24
      $region56: #{double_conv.1} parent=51 // pred_fallthru
        _
    $region52: #{double_conv.1} parent=5 // pred_fallthru
      _
    %p4593 = scmp.le.s32.totalorder 2, %s14
    // Predicated region
    $region57: #{double_conv.1} parent=5 // pred_check
      %p4594 = pneg %p4593
    $region58: #{double_conv.1} parent=5 // pred_check_branch
      %4596 = sbr.rel (%p4594) target = $region60
    $region59: #{double_conv.1} parent=5 // pred_region
      %s4597 = ssub.s32 %s14, 2
      // Predicated region
      $region61: #{double_conv.1} parent=59 // pred_check
        %p4598 = pneg %p241
      $region62: #{double_conv.1} parent=59 // pred_check_branch
        %4600 = sbr.rel (%p4598) target = $region64
      $region63: #{double_conv.1} parent=59 // pred_region
        %s4601 = smul.u32 8, %s26
        %p4602 = scmp.lt.s32.totalorder %s25, 1
        %s4603 = scalar_select %p4602, %s25, 1
        %p4604 = scmp.lt.s32.totalorder %s4601, 15
        %s4605 = scalar_select %p4604, %s4601, 15
        %s4606 = smul.addr %s4605, 2
        %s4607 = smul.addr %s4603, 32
        %s4608 = sadd.s32 %s4606, %s4607
        %s4609 = smul.addr %s4608, 8
        %s4610 = scalar_lea.vmem %s8, %s4609
      $region64: #{double_conv.1} parent=59 // pred_fallthru
        _
    $region60: #{double_conv.1} parent=5 // pred_fallthru
      _
  $region6: #{double_conv.1} parent=0 // loop_footer
    %s18 = sadd.s32 1, %s14
  $region7: #{double_conv.1} parent=0 // loop_footer_branch
    %13 = sbr.rel target = $region3
  $region8: #{double_conv.1} parent=0 // loop_exit
    _

</llo_original>
